<compile_context>
chip_gen: v5e
topology: v5e:2x2
jax: 0.10.0
libtpu: 0.0.40
codegen_flags: <defaults>
</compile_context>

<pallas_src>
import functools

import numpy as np
import jax
import jax.numpy as jnp
from jax.experimental import pallas as pl
from jax.experimental.pallas import tpu as pltpu


class Config:
    model_arch = "Unet"
    model_backbone = "tiny"
    in_channels = 4
    num_classes = 3


C1, C2 = 8, 16  # encoder channel widths


# --------------------------------------------------------------------------
# Fused forward-pass kernel: one grid step per batch group, no scratch.
# --------------------------------------------------------------------------

def _fused_unet_kernel(x_ref, w1_ref, b1_ref, w2_ref, b2_ref,
                       w3u_ref, w3s_ref, b3_ref, wh_ref, bh_ref,
                       mfull_ref, msp_ref, mpar_ref, o_ref,
                       *, s_full, s_sp, s_up, row_w):
    f32, bf16 = jnp.float32, jnp.bfloat16

    def shift(v, s):
        # out[:, m] = v[:, (m + s) % n]  (exact: static lane slices + concat)
        n = v.shape[-1]
        s = s % n
        if s == 0:
            return v
        return jnp.concatenate([v[:, s:], v[:, :s]], axis=-1)

    def conv3x3(v, w_ref, m_ref, shifts):
        # v: (Cin, n) f32; w_ref: (9, Cout, Cin) bf16; m_ref: (9, 1, n) masks.
        acc = None
        for t in range(9):
            vt = (shift(v, shifts[t]) * m_ref[t]).astype(bf16)
            part = jnp.dot(w_ref[t], vt, preferred_element_type=f32)  # MXU, N=n dense
            acc = part if acc is None else acc + part
        return acc

    x = x_ref[0]                                                       # (Cin_p, n)

    # encoder stage 1: 3x3 conv + ReLU
    enc1 = jnp.maximum(conv3x3(x, w1_ref, mfull_ref, s_full) + b1_ref[...], 0.0)

    # 2x2 maxpool kept at full lane resolution ("stride-2 sparse grid"):
    # pooled value of window (2r,2c) lands at lane 2r*W + 2c; other lanes are
    # don't-care and every later consumer masks them away.
    hmax = jnp.maximum(enc1, shift(enc1, 1))
    pool = jnp.maximum(hmax, shift(hmax, row_w))

    # encoder stage 2: 3x3 conv + ReLU on the sparse pooled grid
    enc2 = jnp.maximum(conv3x3(pool, w2_ref, msp_ref, s_sp) + b2_ref[...], 0.0)

    # nearest 2x upsample: each output lane selects its parent grid lane
    up = None
    for p in range(4):
        term = mpar_ref[p] * shift(enc2, s_up[p])
        up = term if up is None else up + term

    # decoder conv: skip-concat folded into two weight halves, one accumulator
    dec = (conv3x3(up, w3u_ref, mfull_ref, s_full)
           + conv3x3(enc1, w3s_ref, mfull_ref, s_full))
    dec = jnp.maximum(dec + b3_ref[...], 0.0)

    # 1x1 conv head (activation=None); (num_classes, n) store is lane-dense
    logits = jnp.dot(wh_ref[...], dec.astype(bf16),
                     preferred_element_type=f32) + bh_ref[...]
    o_ref[0] = logits.astype(o_ref.dtype)


# --------------------------------------------------------------------------
# Constant halo / parity masks (numpy -> baked as jit constants)
# --------------------------------------------------------------------------

def _conv_masks(H, W, scale, bb):
    r = np.arange(H * W) // W
    c = np.arange(H * W) % W
    rr, cc = r // scale, c // scale
    hs, ws = H // scale, W // scale
    m = np.zeros((9, 1, H * W), np.float32)
    t = 0
    for dy in range(3):
        for dx in range(3):
            ok = ((rr + dy - 1 >= 0) & (rr + dy - 1 < hs) &
                  (cc + dx - 1 >= 0) & (cc + dx - 1 < ws))
            m[t, 0] = ok
            t += 1
    return np.tile(m, (1, 1, bb))


def _parity_masks(H, W, bb):
    r = np.arange(H * W) // W
    c = np.arange(H * W) % W
    m = np.zeros((4, 1, H * W), np.float32)
    p = 0
    for a in range(2):
        for b in range(2):
            m[p, 0] = (r % 2 == a) & (c % 2 == b)
            p += 1
    return np.tile(m, (1, 1, bb))


def _tap_weights(w_hwio, cin_pad=None):
    # (3, 3, Ci, Co) -> (9, Co, Ci[_pad]) bf16, tap-major (dy, dx)
    kh, kw, ci, co = w_hwio.shape
    wt = jnp.transpose(w_hwio, (0, 1, 3, 2)).reshape(kh * kw, co, ci)
    if cin_pad is not None and cin_pad > ci:
        wt = jnp.pad(wt, ((0, 0), (0, 0), (0, cin_pad - ci)))
    return wt.astype(jnp.bfloat16)


def _bcast_spec(shape):
    zeros = (0,) * len(shape)
    return pl.BlockSpec(tuple(shape), lambda g: zeros)


# --------------------------------------------------------------------------
# Parameters + forward
# --------------------------------------------------------------------------

def init_params(key):
    c_in, nc = Config.in_channels, Config.num_classes
    keys = jax.random.split(key, 8)

    def conv_w(k, kh, kw, ci, co):
        scale = 1.0 / jnp.sqrt(float(kh * kw * ci))
        return jax.random.normal(k, (kh, kw, ci, co), jnp.float32) * scale

    return {
        "enc1_w": conv_w(keys[0], 3, 3, c_in, C1),
        "enc1_b": jax.random.normal(keys[1], (C1,), jnp.float32) * 0.01,
        "enc2_w": conv_w(keys[2], 3, 3, C1, C2),
        "enc2_b": jax.random.normal(keys[3], (C2,), jnp.float32) * 0.01,
        "dec_w": conv_w(keys[4], 3, 3, C2 + C1, C1),
        "dec_b": jax.random.normal(keys[5], (C1,), jnp.float32) * 0.01,
        "head_w": jax.random.normal(keys[6], (C1, nc), jnp.float32)
                  * (1.0 / jnp.sqrt(float(C1))),
        "head_b": jax.random.normal(keys[7], (nc,), jnp.float32) * 0.01,
    }


def model_forward(params, x_nchw):
    """Matches ModelWrapper.forward: NCHW in -> NCHW logits out (no activation)."""
    B, Cin, H, W = x_nchw.shape
    HW = H * W
    NC = params["head_w"].shape[-1]
    Cin_p = ((Cin + 7) // 8) * 8

    # Images per grid step: fold the batch onto the lane axis (amortises the
    # ~0.35us/step overhead on single-core v5e/v6e) while keeping >= 2 grid
    # steps so the "parallel" batch axis can split across v7x's 2 TensorCores.
    bb = max(1, B // 2)
    while B % bb:
        bb -= 1
    G = B // bb
    n = bb * HW

    # ---- boundary glue: NCHW -> (G, Cin_p, n), channels on sublanes ---------
    xf = x_nchw.reshape(B, Cin, HW).astype(jnp.float32)
    if Cin_p > Cin:
        xf = jnp.pad(xf, ((0, 0), (0, Cin_p - Cin), (0, 0)))
    x_in = xf.reshape(G, bb, Cin_p, HW).transpose(0, 2, 1, 3).reshape(G, Cin_p, n)

    # ---- parameters, tap-major bf16 for the MXU -----------------------------
    c1 = params["enc1_w"].shape[-1]
    c2 = params["enc2_w"].shape[-1]
    w1 = _tap_weights(params["enc1_w"], cin_pad=Cin_p)          # (9, C1, Cin_p)
    w2 = _tap_weights(params["enc2_w"])                         # (9, C2, C1)
    w3u = _tap_weights(params["dec_w"][:, :, :c2, :])           # (9, C1, C2)
    w3s = _tap_weights(params["dec_w"][:, :, c2:, :])           # (9, C1, C1)
    wh = params["head_w"].T.astype(jnp.bfloat16)                # (NC, C1)
    b1 = params["enc1_b"].reshape(c1, 1)
    b2 = params["enc2_b"].reshape(c2, 1)
    b3 = params["dec_b"].reshape(c1, 1)
    bh = params["head_b"].reshape(NC, 1)

    # ---- constant halo / parity masks ---------------------------------------
    mfull = jnp.asarray(_conv_masks(H, W, 1, bb))               # (9, 1, n)
    msp = jnp.asarray(_conv_masks(H, W, 2, bb))                 # (9, 1, n)
    mpar = jnp.asarray(_parity_masks(H, W, bb))                 # (4, 1, n)

    # ---- static lane shifts --------------------------------------------------
    s_full = [(dy - 1) * W + (dx - 1) for dy in range(3) for dx in range(3)]
    s_sp = [2 * W * (dy - 1) + 2 * (dx - 1) for dy in range(3) for dx in range(3)]
    s_up = [-(a * W + b) for a in range(2) for b in range(2)]

    kernel = functools.partial(_fused_unet_kernel, s_full=s_full, s_sp=s_sp,
                               s_up=s_up, row_w=W)

    consts = [w1, b1, w2, b2, w3u, w3s, b3, wh, bh, mfull, msp, mpar]

    out = pl.pallas_call(
        kernel,
        out_shape=jax.ShapeDtypeStruct((G, NC, n), jnp.float32),
        grid=(G,),
        in_specs=[pl.BlockSpec((1, Cin_p, n), lambda g: (g, 0, 0))]
                 + [_bcast_spec(a.shape) for a in consts],
        out_specs=pl.BlockSpec((1, NC, n), lambda g: (g, 0, 0)),
        compiler_params=pltpu.CompilerParams(
            # TODO(synk): pltpu.CORE_PARALLEL on v7x; plain "parallel" kept for
            # portability across v5e/v6e/v7x.
            dimension_semantics=("parallel",)),
    )(x_in, *consts)

    # ---- boundary glue: (G, NC, n) is already channel-major -> NCHW ---------
    return out.reshape(G, NC, bb, HW).transpose(0, 2, 1, 3).reshape(B, NC, H, W)


# --------------------------------------------------------------------------
# Pure-JAX reference (same bf16 cast points) for a self-contained check
# --------------------------------------------------------------------------

def reference_forward(params, x_nchw):
    bf16, f32 = jnp.bfloat16, jnp.float32
    x = jnp.transpose(x_nchw, (0, 2, 3, 1))  # NHWC

    def conv3x3(img, w, b):
        Bn, Hh, Ww, Ci = img.shape
        Co = w.shape[-1]
        p = jnp.pad(img, ((0, 0), (1, 1), (1, 1), (0, 0)))
        cols = jnp.concatenate(
            [p[:, dy:dy + Hh, dx:dx + Ww, :] for dy in range(3) for dx in range(3)],
            axis=-1)
        out = jnp.dot(cols.reshape(-1, 9 * Ci).astype(bf16),
                      w.reshape(9 * Ci, Co).astype(bf16),
                      preferred_element_type=f32).reshape(Bn, Hh, Ww, Co)
        return jnp.maximum(out + b, 0.0)

    enc1 = conv3x3(x, params["enc1_w"], params["enc1_b"])
    Bn, Hh, Ww, _ = enc1.shape
    p1 = jnp.max(enc1.reshape(Bn, Hh // 2, 2, Ww // 2, 2, -1), axis=(2, 4))
    enc2 = conv3x3(p1, params["enc2_w"], params["enc2_b"])
    up = jnp.repeat(jnp.repeat(enc2, 2, axis=1), 2, axis=2)
    cat = jnp.concatenate([up, enc1], axis=-1)
    dec = conv3x3(cat, params["dec_w"], params["dec_b"])
    logits = jnp.dot(dec.reshape(-1, dec.shape[-1]).astype(bf16),
                     params["head_w"].astype(bf16),
                     preferred_element_type=f32) + params["head_b"]
    logits = logits.reshape(Bn, Hh, Ww, -1)
    return jnp.transpose(logits, (0, 3, 1, 2))


if __name__ == "__main__":
    key = jax.random.PRNGKey(0)
    pkey, xkey = jax.random.split(key)
    params = init_params(pkey)
    x = jax.random.normal(xkey, (2, Config.in_channels, 16, 16), jnp.float32)

    fwd = jax.jit(model_forward)
    y = jax.block_until_ready(fwd(params, x))

    assert y.shape == (2, Config.num_classes, 16, 16)
    assert bool(jnp.all(jnp.isfinite(y)))

    y_ref = jax.block_until_ready(jax.jit(reference_forward)(params, x))
    err = float(jnp.max(jnp.abs(y - y_ref)))
    assert err < 2e-2, f"kernel/reference mismatch: max|diff|={err:.3e}"
    print("KERNEL_OK")
</pallas_src>

<mosaic_0001>
module attributes {stable_mosaic.version = 11 : i64} {
  func.func @_fused_unet_kernel(%arg0: i32, %arg1: memref<1x8x256xf32, #tpu.memory_space<vmem>>, %arg2: memref<9x8x8xbf16, #tpu.memory_space<vmem>>, %arg3: memref<8x1xf32, #tpu.memory_space<vmem>>, %arg4: memref<9x16x8xbf16, #tpu.memory_space<vmem>>, %arg5: memref<16x1xf32, #tpu.memory_space<vmem>>, %arg6: memref<9x8x16xbf16, #tpu.memory_space<vmem>>, %arg7: memref<9x8x8xbf16, #tpu.memory_space<vmem>>, %arg8: memref<8x1xf32, #tpu.memory_space<vmem>>, %arg9: memref<3x8xbf16, #tpu.memory_space<vmem>>, %arg10: memref<3x1xf32, #tpu.memory_space<vmem>>, %arg11: memref<9x1x256xf32, #tpu.memory_space<vmem>>, %arg12: memref<9x1x256xf32, #tpu.memory_space<vmem>>, %arg13: memref<4x1x256xf32, #tpu.memory_space<vmem>>, %arg14: memref<1x3x256xf32, #tpu.memory_space<vmem>>) attributes {dimension_semantics = [#tpu.dimension_semantics<parallel>], iteration_bounds = array<i64: 2>, scalar_prefetch = 0 : i64, scratch_operands = 0 : i64, tpu.core_type = #tpu.core_type<tc>, window_params = [{transform_indices = @transform_0, window_bounds = array<i64: 1, 8, 256>}, {pipeline_mode = #tpu.pipeline_mode<synchronous>, transform_indices = @transform_1, window_bounds = array<i64: 9, 8, 8>}, {pipeline_mode = #tpu.pipeline_mode<synchronous>, transform_indices = @transform_2, window_bounds = array<i64: 8, 1>}, {pipeline_mode = #tpu.pipeline_mode<synchronous>, transform_indices = @transform_3, window_bounds = array<i64: 9, 16, 8>}, {pipeline_mode = #tpu.pipeline_mode<synchronous>, transform_indices = @transform_4, window_bounds = array<i64: 16, 1>}, {pipeline_mode = #tpu.pipeline_mode<synchronous>, transform_indices = @transform_5, window_bounds = array<i64: 9, 8, 16>}, {pipeline_mode = #tpu.pipeline_mode<synchronous>, transform_indices = @transform_6, window_bounds = array<i64: 9, 8, 8>}, {pipeline_mode = #tpu.pipeline_mode<synchronous>, transform_indices = @transform_7, window_bounds = array<i64: 8, 1>}, {pipeline_mode = #tpu.pipeline_mode<synchronous>, transform_indices = @transform_8, window_bounds = array<i64: 3, 8>}, {pipeline_mode = #tpu.pipeline_mode<synchronous>, transform_indices = @transform_9, window_bounds = array<i64: 3, 1>}, {pipeline_mode = #tpu.pipeline_mode<synchronous>, transform_indices = @transform_10, window_bounds = array<i64: 9, 1, 256>}, {pipeline_mode = #tpu.pipeline_mode<synchronous>, transform_indices = @transform_11, window_bounds = array<i64: 9, 1, 256>}, {pipeline_mode = #tpu.pipeline_mode<synchronous>, transform_indices = @transform_12, window_bounds = array<i64: 4, 1, 256>}, {transform_indices = @transform_13, window_bounds = array<i64: 1, 3, 256>}]} {
    %c0 = arith.constant 0 : index
    %c0_0 = arith.constant 0 : index
    %c0_1 = arith.constant 0 : index
    %0 = vector.load %arg1[%c0, %c0_0, %c0_1] : memref<1x8x256xf32, #tpu.memory_space<vmem>>, vector<1x8x256xf32>
    %1 = vector.shape_cast %0 : vector<1x8x256xf32> to vector<8x256xf32>
    %2 = vector.extract_strided_slice %1 {offsets = [0, 239], sizes = [8, 17], strides = [1, 1]} : vector<8x256xf32> to vector<8x17xf32>
    %3 = vector.extract_strided_slice %1 {offsets = [0, 0], sizes = [8, 239], strides = [1, 1]} : vector<8x256xf32> to vector<8x239xf32>
    %4 = tpu.concatenate %2, %3 in 1 : vector<8x17xf32>, vector<8x239xf32> -> vector<8x256xf32>
    %c0_2 = arith.constant 0 : index
    %c0_3 = arith.constant 0 : index
    %c0_4 = arith.constant 0 : index
    %5 = vector.load %arg11[%c0_2, %c0_3, %c0_4] : memref<9x1x256xf32, #tpu.memory_space<vmem>>, vector<1x1x256xf32>
    %6 = vector.shape_cast %5 : vector<1x1x256xf32> to vector<1x256xf32>
    %7 = vector.broadcast %6 : vector<1x256xf32> to vector<8x256xf32>
    %8 = arith.mulf %4, %7 : vector<8x256xf32>
    %9 = arith.truncf %8 : vector<8x256xf32> to vector<8x256xbf16>
    %c0_5 = arith.constant 0 : index
    %c0_6 = arith.constant 0 : index
    %c0_7 = arith.constant 0 : index
    %10 = vector.load %arg2[%c0_5, %c0_6, %c0_7] : memref<9x8x8xbf16, #tpu.memory_space<vmem>>, vector<1x8x8xbf16>
    %11 = vector.shape_cast %10 : vector<1x8x8xbf16> to vector<8x8xbf16>
    %cst = arith.constant dense<0.000000e+00> : vector<8x256xf32>
    %12 = tpu.matmul %11, %9, %cst {dimension_numbers = #tpu.dot_dimension_numbers<[1], [0], [0], [1], [0, 0, 1, 1], [], []>} : vector<8x8xbf16>, vector<8x256xbf16>, vector<8x256xf32> -> vector<8x256xf32>
    %13 = vector.extract_strided_slice %1 {offsets = [0, 240], sizes = [8, 16], strides = [1, 1]} : vector<8x256xf32> to vector<8x16xf32>
    %14 = vector.extract_strided_slice %1 {offsets = [0, 0], sizes = [8, 240], strides = [1, 1]} : vector<8x256xf32> to vector<8x240xf32>
    %15 = tpu.concatenate %13, %14 in 1 : vector<8x16xf32>, vector<8x240xf32> -> vector<8x256xf32>
    %c1 = arith.constant 1 : index
    %c0_8 = arith.constant 0 : index
    %c0_9 = arith.constant 0 : index
    %16 = vector.load %arg11[%c1, %c0_8, %c0_9] : memref<9x1x256xf32, #tpu.memory_space<vmem>>, vector<1x1x256xf32>
    %17 = vector.shape_cast %16 : vector<1x1x256xf32> to vector<1x256xf32>
    %18 = vector.broadcast %17 : vector<1x256xf32> to vector<8x256xf32>
    %19 = arith.mulf %15, %18 : vector<8x256xf32>
    %20 = arith.truncf %19 : vector<8x256xf32> to vector<8x256xbf16>
    %c1_10 = arith.constant 1 : index
    %c0_11 = arith.constant 0 : index
    %c0_12 = arith.constant 0 : index
    %21 = vector.load %arg2[%c1_10, %c0_11, %c0_12] : memref<9x8x8xbf16, #tpu.memory_space<vmem>>, vector<1x8x8xbf16>
    %22 = vector.shape_cast %21 : vector<1x8x8xbf16> to vector<8x8xbf16>
    %cst_13 = arith.constant dense<0.000000e+00> : vector<8x256xf32>
    %23 = tpu.matmul %22, %20, %cst_13 {dimension_numbers = #tpu.dot_dimension_numbers<[1], [0], [0], [1], [0, 0, 1, 1], [], []>} : vector<8x8xbf16>, vector<8x256xbf16>, vector<8x256xf32> -> vector<8x256xf32>
    %24 = arith.addf %12, %23 : vector<8x256xf32>
    %25 = vector.extract_strided_slice %1 {offsets = [0, 241], sizes = [8, 15], strides = [1, 1]} : vector<8x256xf32> to vector<8x15xf32>
    %26 = vector.extract_strided_slice %1 {offsets = [0, 0], sizes = [8, 241], strides = [1, 1]} : vector<8x256xf32> to vector<8x241xf32>
    %27 = tpu.concatenate %25, %26 in 1 : vector<8x15xf32>, vector<8x241xf32> -> vector<8x256xf32>
    %c2 = arith.constant 2 : index
    %c0_14 = arith.constant 0 : index
    %c0_15 = arith.constant 0 : index
    %28 = vector.load %arg11[%c2, %c0_14, %c0_15] : memref<9x1x256xf32, #tpu.memory_space<vmem>>, vector<1x1x256xf32>
    %29 = vector.shape_cast %28 : vector<1x1x256xf32> to vector<1x256xf32>
    %30 = vector.broadcast %29 : vector<1x256xf32> to vector<8x256xf32>
    %31 = arith.mulf %27, %30 : vector<8x256xf32>
    %32 = arith.truncf %31 : vector<8x256xf32> to vector<8x256xbf16>
    %c2_16 = arith.constant 2 : index
    %c0_17 = arith.constant 0 : index
    %c0_18 = arith.constant 0 : index
    %33 = vector.load %arg2[%c2_16, %c0_17, %c0_18] : memref<9x8x8xbf16, #tpu.memory_space<vmem>>, vector<1x8x8xbf16>
    %34 = vector.shape_cast %33 : vector<1x8x8xbf16> to vector<8x8xbf16>
    %cst_19 = arith.constant dense<0.000000e+00> : vector<8x256xf32>
    %35 = tpu.matmul %34, %32, %cst_19 {dimension_numbers = #tpu.dot_dimension_numbers<[1], [0], [0], [1], [0, 0, 1, 1], [], []>} : vector<8x8xbf16>, vector<8x256xbf16>, vector<8x256xf32> -> vector<8x256xf32>
    %36 = arith.addf %24, %35 : vector<8x256xf32>
    %37 = vector.extract_strided_slice %1 {offsets = [0, 255], sizes = [8, 1], strides = [1, 1]} : vector<8x256xf32> to vector<8x1xf32>
    %38 = vector.extract_strided_slice %1 {offsets = [0, 0], sizes = [8, 255], strides = [1, 1]} : vector<8x256xf32> to vector<8x255xf32>
    %39 = tpu.concatenate %37, %38 in 1 : vector<8x1xf32>, vector<8x255xf32> -> vector<8x256xf32>
    %c3 = arith.constant 3 : index
    %c0_20 = arith.constant 0 : index
    %c0_21 = arith.constant 0 : index
    %40 = vector.load %arg11[%c3, %c0_20, %c0_21] : memref<9x1x256xf32, #tpu.memory_space<vmem>>, vector<1x1x256xf32>
    %41 = vector.shape_cast %40 : vector<1x1x256xf32> to vector<1x256xf32>
    %42 = vector.broadcast %41 : vector<1x256xf32> to vector<8x256xf32>
    %43 = arith.mulf %39, %42 : vector<8x256xf32>
    %44 = arith.truncf %43 : vector<8x256xf32> to vector<8x256xbf16>
    %c3_22 = arith.constant 3 : index
    %c0_23 = arith.constant 0 : index
    %c0_24 = arith.constant 0 : index
    %45 = vector.load %arg2[%c3_22, %c0_23, %c0_24] : memref<9x8x8xbf16, #tpu.memory_space<vmem>>, vector<1x8x8xbf16>
    %46 = vector.shape_cast %45 : vector<1x8x8xbf16> to vector<8x8xbf16>
    %cst_25 = arith.constant dense<0.000000e+00> : vector<8x256xf32>
    %47 = tpu.matmul %46, %44, %cst_25 {dimension_numbers = #tpu.dot_dimension_numbers<[1], [0], [0], [1], [0, 0, 1, 1], [], []>} : vector<8x8xbf16>, vector<8x256xbf16>, vector<8x256xf32> -> vector<8x256xf32>
    %48 = arith.addf %36, %47 : vector<8x256xf32>
    %c4 = arith.constant 4 : index
    %c0_26 = arith.constant 0 : index
    %c0_27 = arith.constant 0 : index
    %49 = vector.load %arg11[%c4, %c0_26, %c0_27] : memref<9x1x256xf32, #tpu.memory_space<vmem>>, vector<1x1x256xf32>
    %50 = vector.shape_cast %49 : vector<1x1x256xf32> to vector<1x256xf32>
    %51 = vector.broadcast %50 : vector<1x256xf32> to vector<8x256xf32>
    %52 = arith.mulf %1, %51 : vector<8x256xf32>
    %53 = arith.truncf %52 : vector<8x256xf32> to vector<8x256xbf16>
    %c4_28 = arith.constant 4 : index
    %c0_29 = arith.constant 0 : index
    %c0_30 = arith.constant 0 : index
    %54 = vector.load %arg2[%c4_28, %c0_29, %c0_30] : memref<9x8x8xbf16, #tpu.memory_space<vmem>>, vector<1x8x8xbf16>
    %55 = vector.shape_cast %54 : vector<1x8x8xbf16> to vector<8x8xbf16>
    %cst_31 = arith.constant dense<0.000000e+00> : vector<8x256xf32>
    %56 = tpu.matmul %55, %53, %cst_31 {dimension_numbers = #tpu.dot_dimension_numbers<[1], [0], [0], [1], [0, 0, 1, 1], [], []>} : vector<8x8xbf16>, vector<8x256xbf16>, vector<8x256xf32> -> vector<8x256xf32>
    %57 = arith.addf %48, %56 : vector<8x256xf32>
    %58 = vector.extract_strided_slice %1 {offsets = [0, 1], sizes = [8, 255], strides = [1, 1]} : vector<8x256xf32> to vector<8x255xf32>
    %59 = vector.extract_strided_slice %1 {offsets = [0, 0], sizes = [8, 1], strides = [1, 1]} : vector<8x256xf32> to vector<8x1xf32>
    %60 = tpu.concatenate %58, %59 in 1 : vector<8x255xf32>, vector<8x1xf32> -> vector<8x256xf32>
    %c5 = arith.constant 5 : index
    %c0_32 = arith.constant 0 : index
    %c0_33 = arith.constant 0 : index
    %61 = vector.load %arg11[%c5, %c0_32, %c0_33] : memref<9x1x256xf32, #tpu.memory_space<vmem>>, vector<1x1x256xf32>
    %62 = vector.shape_cast %61 : vector<1x1x256xf32> to vector<1x256xf32>
    %63 = vector.broadcast %62 : vector<1x256xf32> to vector<8x256xf32>
    %64 = arith.mulf %60, %63 : vector<8x256xf32>
    %65 = arith.truncf %64 : vector<8x256xf32> to vector<8x256xbf16>
    %c5_34 = arith.constant 5 : index
    %c0_35 = arith.constant 0 : index
    %c0_36 = arith.constant 0 : index
    %66 = vector.load %arg2[%c5_34, %c0_35, %c0_36] : memref<9x8x8xbf16, #tpu.memory_space<vmem>>, vector<1x8x8xbf16>
    %67 = vector.shape_cast %66 : vector<1x8x8xbf16> to vector<8x8xbf16>
    %cst_37 = arith.constant dense<0.000000e+00> : vector<8x256xf32>
    %68 = tpu.matmul %67, %65, %cst_37 {dimension_numbers = #tpu.dot_dimension_numbers<[1], [0], [0], [1], [0, 0, 1, 1], [], []>} : vector<8x8xbf16>, vector<8x256xbf16>, vector<8x256xf32> -> vector<8x256xf32>
    %69 = arith.addf %57, %68 : vector<8x256xf32>
    %70 = vector.extract_strided_slice %1 {offsets = [0, 15], sizes = [8, 241], strides = [1, 1]} : vector<8x256xf32> to vector<8x241xf32>
    %71 = vector.extract_strided_slice %1 {offsets = [0, 0], sizes = [8, 15], strides = [1, 1]} : vector<8x256xf32> to vector<8x15xf32>
    %72 = tpu.concatenate %70, %71 in 1 : vector<8x241xf32>, vector<8x15xf32> -> vector<8x256xf32>
    %c6 = arith.constant 6 : index
    %c0_38 = arith.constant 0 : index
    %c0_39 = arith.constant 0 : index
    %73 = vector.load %arg11[%c6, %c0_38, %c0_39] : memref<9x1x256xf32, #tpu.memory_space<vmem>>, vector<1x1x256xf32>
    %74 = vector.shape_cast %73 : vector<1x1x256xf32> to vector<1x256xf32>
    %75 = vector.broadcast %74 : vector<1x256xf32> to vector<8x256xf32>
    %76 = arith.mulf %72, %75 : vector<8x256xf32>
    %77 = arith.truncf %76 : vector<8x256xf32> to vector<8x256xbf16>
    %c6_40 = arith.constant 6 : index
    %c0_41 = arith.constant 0 : index
    %c0_42 = arith.constant 0 : index
    %78 = vector.load %arg2[%c6_40, %c0_41, %c0_42] : memref<9x8x8xbf16, #tpu.memory_space<vmem>>, vector<1x8x8xbf16>
    %79 = vector.shape_cast %78 : vector<1x8x8xbf16> to vector<8x8xbf16>
    %cst_43 = arith.constant dense<0.000000e+00> : vector<8x256xf32>
    %80 = tpu.matmul %79, %77, %cst_43 {dimension_numbers = #tpu.dot_dimension_numbers<[1], [0], [0], [1], [0, 0, 1, 1], [], []>} : vector<8x8xbf16>, vector<8x256xbf16>, vector<8x256xf32> -> vector<8x256xf32>
    %81 = arith.addf %69, %80 : vector<8x256xf32>
    %82 = vector.extract_strided_slice %1 {offsets = [0, 16], sizes = [8, 240], strides = [1, 1]} : vector<8x256xf32> to vector<8x240xf32>
    %83 = vector.extract_strided_slice %1 {offsets = [0, 0], sizes = [8, 16], strides = [1, 1]} : vector<8x256xf32> to vector<8x16xf32>
    %84 = tpu.concatenate %82, %83 in 1 : vector<8x240xf32>, vector<8x16xf32> -> vector<8x256xf32>
    %c7 = arith.constant 7 : index
    %c0_44 = arith.constant 0 : index
    %c0_45 = arith.constant 0 : index
    %85 = vector.load %arg11[%c7, %c0_44, %c0_45] : memref<9x1x256xf32, #tpu.memory_space<vmem>>, vector<1x1x256xf32>
    %86 = vector.shape_cast %85 : vector<1x1x256xf32> to vector<1x256xf32>
    %87 = vector.broadcast %86 : vector<1x256xf32> to vector<8x256xf32>
    %88 = arith.mulf %84, %87 : vector<8x256xf32>
    %89 = arith.truncf %88 : vector<8x256xf32> to vector<8x256xbf16>
    %c7_46 = arith.constant 7 : index
    %c0_47 = arith.constant 0 : index
    %c0_48 = arith.constant 0 : index
    %90 = vector.load %arg2[%c7_46, %c0_47, %c0_48] : memref<9x8x8xbf16, #tpu.memory_space<vmem>>, vector<1x8x8xbf16>
    %91 = vector.shape_cast %90 : vector<1x8x8xbf16> to vector<8x8xbf16>
    %cst_49 = arith.constant dense<0.000000e+00> : vector<8x256xf32>
    %92 = tpu.matmul %91, %89, %cst_49 {dimension_numbers = #tpu.dot_dimension_numbers<[1], [0], [0], [1], [0, 0, 1, 1], [], []>} : vector<8x8xbf16>, vector<8x256xbf16>, vector<8x256xf32> -> vector<8x256xf32>
    %93 = arith.addf %81, %92 : vector<8x256xf32>
    %94 = vector.extract_strided_slice %1 {offsets = [0, 17], sizes = [8, 239], strides = [1, 1]} : vector<8x256xf32> to vector<8x239xf32>
    %95 = vector.extract_strided_slice %1 {offsets = [0, 0], sizes = [8, 17], strides = [1, 1]} : vector<8x256xf32> to vector<8x17xf32>
    %96 = tpu.concatenate %94, %95 in 1 : vector<8x239xf32>, vector<8x17xf32> -> vector<8x256xf32>
    %c8 = arith.constant 8 : index
    %c0_50 = arith.constant 0 : index
    %c0_51 = arith.constant 0 : index
    %97 = vector.load %arg11[%c8, %c0_50, %c0_51] : memref<9x1x256xf32, #tpu.memory_space<vmem>>, vector<1x1x256xf32>
    %98 = vector.shape_cast %97 : vector<1x1x256xf32> to vector<1x256xf32>
    %99 = vector.broadcast %98 : vector<1x256xf32> to vector<8x256xf32>
    %100 = arith.mulf %96, %99 : vector<8x256xf32>
    %101 = arith.truncf %100 : vector<8x256xf32> to vector<8x256xbf16>
    %c8_52 = arith.constant 8 : index
    %c0_53 = arith.constant 0 : index
    %c0_54 = arith.constant 0 : index
    %102 = vector.load %arg2[%c8_52, %c0_53, %c0_54] : memref<9x8x8xbf16, #tpu.memory_space<vmem>>, vector<1x8x8xbf16>
    %103 = vector.shape_cast %102 : vector<1x8x8xbf16> to vector<8x8xbf16>
    %cst_55 = arith.constant dense<0.000000e+00> : vector<8x256xf32>
    %104 = tpu.matmul %103, %101, %cst_55 {dimension_numbers = #tpu.dot_dimension_numbers<[1], [0], [0], [1], [0, 0, 1, 1], [], []>} : vector<8x8xbf16>, vector<8x256xbf16>, vector<8x256xf32> -> vector<8x256xf32>
    %105 = arith.addf %93, %104 : vector<8x256xf32>
    %c0_56 = arith.constant 0 : index
    %c0_57 = arith.constant 0 : index
    %106 = vector.load %arg3[%c0_56, %c0_57] : memref<8x1xf32, #tpu.memory_space<vmem>>, vector<8x1xf32>
    %107 = vector.broadcast %106 : vector<8x1xf32> to vector<8x256xf32>
    %108 = arith.addf %105, %107 : vector<8x256xf32>
    %cst_58 = arith.constant 0.000000e+00 : f32
    %109 = vector.broadcast %cst_58 : f32 to vector<8x256xf32>
    %110 = arith.maximumf %108, %109 : vector<8x256xf32>
    %111 = vector.extract_strided_slice %110 {offsets = [0, 1], sizes = [8, 255], strides = [1, 1]} : vector<8x256xf32> to vector<8x255xf32>
    %112 = vector.extract_strided_slice %110 {offsets = [0, 0], sizes = [8, 1], strides = [1, 1]} : vector<8x256xf32> to vector<8x1xf32>
    %113 = tpu.concatenate %111, %112 in 1 : vector<8x255xf32>, vector<8x1xf32> -> vector<8x256xf32>
    %114 = arith.maximumf %110, %113 : vector<8x256xf32>
    %115 = vector.extract_strided_slice %114 {offsets = [0, 16], sizes = [8, 240], strides = [1, 1]} : vector<8x256xf32> to vector<8x240xf32>
    %116 = vector.extract_strided_slice %114 {offsets = [0, 0], sizes = [8, 16], strides = [1, 1]} : vector<8x256xf32> to vector<8x16xf32>
    %117 = tpu.concatenate %115, %116 in 1 : vector<8x240xf32>, vector<8x16xf32> -> vector<8x256xf32>
    %118 = arith.maximumf %114, %117 : vector<8x256xf32>
    %119 = vector.extract_strided_slice %118 {offsets = [0, 222], sizes = [8, 34], strides = [1, 1]} : vector<8x256xf32> to vector<8x34xf32>
    %120 = vector.extract_strided_slice %118 {offsets = [0, 0], sizes = [8, 222], strides = [1, 1]} : vector<8x256xf32> to vector<8x222xf32>
    %121 = tpu.concatenate %119, %120 in 1 : vector<8x34xf32>, vector<8x222xf32> -> vector<8x256xf32>
    %c0_59 = arith.constant 0 : index
    %c0_60 = arith.constant 0 : index
    %c0_61 = arith.constant 0 : index
    %122 = vector.load %arg12[%c0_59, %c0_60, %c0_61] : memref<9x1x256xf32, #tpu.memory_space<vmem>>, vector<1x1x256xf32>
    %123 = vector.shape_cast %122 : vector<1x1x256xf32> to vector<1x256xf32>
    %124 = vector.broadcast %123 : vector<1x256xf32> to vector<8x256xf32>
    %125 = arith.mulf %121, %124 : vector<8x256xf32>
    %126 = arith.truncf %125 : vector<8x256xf32> to vector<8x256xbf16>
    %c0_62 = arith.constant 0 : index
    %c0_63 = arith.constant 0 : index
    %c0_64 = arith.constant 0 : index
    %127 = vector.load %arg4[%c0_62, %c0_63, %c0_64] : memref<9x16x8xbf16, #tpu.memory_space<vmem>>, vector<1x16x8xbf16>
    %128 = vector.shape_cast %127 : vector<1x16x8xbf16> to vector<16x8xbf16>
    %cst_65 = arith.constant dense<0.000000e+00> : vector<16x256xf32>
    %129 = tpu.matmul %128, %126, %cst_65 {dimension_numbers = #tpu.dot_dimension_numbers<[1], [0], [0], [1], [0, 0, 1, 1], [], []>} : vector<16x8xbf16>, vector<8x256xbf16>, vector<16x256xf32> -> vector<16x256xf32>
    %130 = vector.extract_strided_slice %118 {offsets = [0, 224], sizes = [8, 32], strides = [1, 1]} : vector<8x256xf32> to vector<8x32xf32>
    %131 = vector.extract_strided_slice %118 {offsets = [0, 0], sizes = [8, 224], strides = [1, 1]} : vector<8x256xf32> to vector<8x224xf32>
    %132 = tpu.concatenate %130, %131 in 1 : vector<8x32xf32>, vector<8x224xf32> -> vector<8x256xf32>
    %c1_66 = arith.constant 1 : index
    %c0_67 = arith.constant 0 : index
    %c0_68 = arith.constant 0 : index
    %133 = vector.load %arg12[%c1_66, %c0_67, %c0_68] : memref<9x1x256xf32, #tpu.memory_space<vmem>>, vector<1x1x256xf32>
    %134 = vector.shape_cast %133 : vector<1x1x256xf32> to vector<1x256xf32>
    %135 = vector.broadcast %134 : vector<1x256xf32> to vector<8x256xf32>
    %136 = arith.mulf %132, %135 : vector<8x256xf32>
    %137 = arith.truncf %136 : vector<8x256xf32> to vector<8x256xbf16>
    %c1_69 = arith.constant 1 : index
    %c0_70 = arith.constant 0 : index
    %c0_71 = arith.constant 0 : index
    %138 = vector.load %arg4[%c1_69, %c0_70, %c0_71] : memref<9x16x8xbf16, #tpu.memory_space<vmem>>, vector<1x16x8xbf16>
    %139 = vector.shape_cast %138 : vector<1x16x8xbf16> to vector<16x8xbf16>
    %cst_72 = arith.constant dense<0.000000e+00> : vector<16x256xf32>
    %140 = tpu.matmul %139, %137, %cst_72 {dimension_numbers = #tpu.dot_dimension_numbers<[1], [0], [0], [1], [0, 0, 1, 1], [], []>} : vector<16x8xbf16>, vector<8x256xbf16>, vector<16x256xf32> -> vector<16x256xf32>
    %141 = arith.addf %129, %140 : vector<16x256xf32>
    %142 = vector.extract_strided_slice %118 {offsets = [0, 226], sizes = [8, 30], strides = [1, 1]} : vector<8x256xf32> to vector<8x30xf32>
    %143 = vector.extract_strided_slice %118 {offsets = [0, 0], sizes = [8, 226], strides = [1, 1]} : vector<8x256xf32> to vector<8x226xf32>
    %144 = tpu.concatenate %142, %143 in 1 : vector<8x30xf32>, vector<8x226xf32> -> vector<8x256xf32>
    %c2_73 = arith.constant 2 : index
    %c0_74 = arith.constant 0 : index
    %c0_75 = arith.constant 0 : index
    %145 = vector.load %arg12[%c2_73, %c0_74, %c0_75] : memref<9x1x256xf32, #tpu.memory_space<vmem>>, vector<1x1x256xf32>
    %146 = vector.shape_cast %145 : vector<1x1x256xf32> to vector<1x256xf32>
    %147 = vector.broadcast %146 : vector<1x256xf32> to vector<8x256xf32>
    %148 = arith.mulf %144, %147 : vector<8x256xf32>
    %149 = arith.truncf %148 : vector<8x256xf32> to vector<8x256xbf16>
    %c2_76 = arith.constant 2 : index
    %c0_77 = arith.constant 0 : index
    %c0_78 = arith.constant 0 : index
    %150 = vector.load %arg4[%c2_76, %c0_77, %c0_78] : memref<9x16x8xbf16, #tpu.memory_space<vmem>>, vector<1x16x8xbf16>
    %151 = vector.shape_cast %150 : vector<1x16x8xbf16> to vector<16x8xbf16>
    %cst_79 = arith.constant dense<0.000000e+00> : vector<16x256xf32>
    %152 = tpu.matmul %151, %149, %cst_79 {dimension_numbers = #tpu.dot_dimension_numbers<[1], [0], [0], [1], [0, 0, 1, 1], [], []>} : vector<16x8xbf16>, vector<8x256xbf16>, vector<16x256xf32> -> vector<16x256xf32>
    %153 = arith.addf %141, %152 : vector<16x256xf32>
    %154 = vector.extract_strided_slice %118 {offsets = [0, 254], sizes = [8, 2], strides = [1, 1]} : vector<8x256xf32> to vector<8x2xf32>
    %155 = vector.extract_strided_slice %118 {offsets = [0, 0], sizes = [8, 254], strides = [1, 1]} : vector<8x256xf32> to vector<8x254xf32>
    %156 = tpu.concatenate %154, %155 in 1 : vector<8x2xf32>, vector<8x254xf32> -> vector<8x256xf32>
    %c3_80 = arith.constant 3 : index
    %c0_81 = arith.constant 0 : index
    %c0_82 = arith.constant 0 : index
    %157 = vector.load %arg12[%c3_80, %c0_81, %c0_82] : memref<9x1x256xf32, #tpu.memory_space<vmem>>, vector<1x1x256xf32>
    %158 = vector.shape_cast %157 : vector<1x1x256xf32> to vector<1x256xf32>
    %159 = vector.broadcast %158 : vector<1x256xf32> to vector<8x256xf32>
    %160 = arith.mulf %156, %159 : vector<8x256xf32>
    %161 = arith.truncf %160 : vector<8x256xf32> to vector<8x256xbf16>
    %c3_83 = arith.constant 3 : index
    %c0_84 = arith.constant 0 : index
    %c0_85 = arith.constant 0 : index
    %162 = vector.load %arg4[%c3_83, %c0_84, %c0_85] : memref<9x16x8xbf16, #tpu.memory_space<vmem>>, vector<1x16x8xbf16>
    %163 = vector.shape_cast %162 : vector<1x16x8xbf16> to vector<16x8xbf16>
    %cst_86 = arith.constant dense<0.000000e+00> : vector<16x256xf32>
    %164 = tpu.matmul %163, %161, %cst_86 {dimension_numbers = #tpu.dot_dimension_numbers<[1], [0], [0], [1], [0, 0, 1, 1], [], []>} : vector<16x8xbf16>, vector<8x256xbf16>, vector<16x256xf32> -> vector<16x256xf32>
    %165 = arith.addf %153, %164 : vector<16x256xf32>
    %c4_87 = arith.constant 4 : index
    %c0_88 = arith.constant 0 : index
    %c0_89 = arith.constant 0 : index
    %166 = vector.load %arg12[%c4_87, %c0_88, %c0_89] : memref<9x1x256xf32, #tpu.memory_space<vmem>>, vector<1x1x256xf32>
    %167 = vector.shape_cast %166 : vector<1x1x256xf32> to vector<1x256xf32>
    %168 = vector.broadcast %167 : vector<1x256xf32> to vector<8x256xf32>
    %169 = arith.mulf %118, %168 : vector<8x256xf32>
    %170 = arith.truncf %169 : vector<8x256xf32> to vector<8x256xbf16>
    %c4_90 = arith.constant 4 : index
    %c0_91 = arith.constant 0 : index
    %c0_92 = arith.constant 0 : index
    %171 = vector.load %arg4[%c4_90, %c0_91, %c0_92] : memref<9x16x8xbf16, #tpu.memory_space<vmem>>, vector<1x16x8xbf16>
    %172 = vector.shape_cast %171 : vector<1x16x8xbf16> to vector<16x8xbf16>
    %cst_93 = arith.constant dense<0.000000e+00> : vector<16x256xf32>
    %173 = tpu.matmul %172, %170, %cst_93 {dimension_numbers = #tpu.dot_dimension_numbers<[1], [0], [0], [1], [0, 0, 1, 1], [], []>} : vector<16x8xbf16>, vector<8x256xbf16>, vector<16x256xf32> -> vector<16x256xf32>
    %174 = arith.addf %165, %173 : vector<16x256xf32>
    %175 = vector.extract_strided_slice %118 {offsets = [0, 2], sizes = [8, 254], strides = [1, 1]} : vector<8x256xf32> to vector<8x254xf32>
    %176 = vector.extract_strided_slice %118 {offsets = [0, 0], sizes = [8, 2], strides = [1, 1]} : vector<8x256xf32> to vector<8x2xf32>
    %177 = tpu.concatenate %175, %176 in 1 : vector<8x254xf32>, vector<8x2xf32> -> vector<8x256xf32>
    %c5_94 = arith.constant 5 : index
    %c0_95 = arith.constant 0 : index
    %c0_96 = arith.constant 0 : index
    %178 = vector.load %arg12[%c5_94, %c0_95, %c0_96] : memref<9x1x256xf32, #tpu.memory_space<vmem>>, vector<1x1x256xf32>
    %179 = vector.shape_cast %178 : vector<1x1x256xf32> to vector<1x256xf32>
    %180 = vector.broadcast %179 : vector<1x256xf32> to vector<8x256xf32>
    %181 = arith.mulf %177, %180 : vector<8x256xf32>
    %182 = arith.truncf %181 : vector<8x256xf32> to vector<8x256xbf16>
    %c5_97 = arith.constant 5 : index
    %c0_98 = arith.constant 0 : index
    %c0_99 = arith.constant 0 : index
    %183 = vector.load %arg4[%c5_97, %c0_98, %c0_99] : memref<9x16x8xbf16, #tpu.memory_space<vmem>>, vector<1x16x8xbf16>
    %184 = vector.shape_cast %183 : vector<1x16x8xbf16> to vector<16x8xbf16>
    %cst_100 = arith.constant dense<0.000000e+00> : vector<16x256xf32>
    %185 = tpu.matmul %184, %182, %cst_100 {dimension_numbers = #tpu.dot_dimension_numbers<[1], [0], [0], [1], [0, 0, 1, 1], [], []>} : vector<16x8xbf16>, vector<8x256xbf16>, vector<16x256xf32> -> vector<16x256xf32>
    %186 = arith.addf %174, %185 : vector<16x256xf32>
    %187 = vector.extract_strided_slice %118 {offsets = [0, 30], sizes = [8, 226], strides = [1, 1]} : vector<8x256xf32> to vector<8x226xf32>
    %188 = vector.extract_strided_slice %118 {offsets = [0, 0], sizes = [8, 30], strides = [1, 1]} : vector<8x256xf32> to vector<8x30xf32>
    %189 = tpu.concatenate %187, %188 in 1 : vector<8x226xf32>, vector<8x30xf32> -> vector<8x256xf32>
    %c6_101 = arith.constant 6 : index
    %c0_102 = arith.constant 0 : index
    %c0_103 = arith.constant 0 : index
    %190 = vector.load %arg12[%c6_101, %c0_102, %c0_103] : memref<9x1x256xf32, #tpu.memory_space<vmem>>, vector<1x1x256xf32>
    %191 = vector.shape_cast %190 : vector<1x1x256xf32> to vector<1x256xf32>
    %192 = vector.broadcast %191 : vector<1x256xf32> to vector<8x256xf32>
    %193 = arith.mulf %189, %192 : vector<8x256xf32>
    %194 = arith.truncf %193 : vector<8x256xf32> to vector<8x256xbf16>
    %c6_104 = arith.constant 6 : index
    %c0_105 = arith.constant 0 : index
    %c0_106 = arith.constant 0 : index
    %195 = vector.load %arg4[%c6_104, %c0_105, %c0_106] : memref<9x16x8xbf16, #tpu.memory_space<vmem>>, vector<1x16x8xbf16>
    %196 = vector.shape_cast %195 : vector<1x16x8xbf16> to vector<16x8xbf16>
    %cst_107 = arith.constant dense<0.000000e+00> : vector<16x256xf32>
    %197 = tpu.matmul %196, %194, %cst_107 {dimension_numbers = #tpu.dot_dimension_numbers<[1], [0], [0], [1], [0, 0, 1, 1], [], []>} : vector<16x8xbf16>, vector<8x256xbf16>, vector<16x256xf32> -> vector<16x256xf32>
    %198 = arith.addf %186, %197 : vector<16x256xf32>
    %199 = vector.extract_strided_slice %118 {offsets = [0, 32], sizes = [8, 224], strides = [1, 1]} : vector<8x256xf32> to vector<8x224xf32>
    %200 = vector.extract_strided_slice %118 {offsets = [0, 0], sizes = [8, 32], strides = [1, 1]} : vector<8x256xf32> to vector<8x32xf32>
    %201 = tpu.concatenate %199, %200 in 1 : vector<8x224xf32>, vector<8x32xf32> -> vector<8x256xf32>
    %c7_108 = arith.constant 7 : index
    %c0_109 = arith.constant 0 : index
    %c0_110 = arith.constant 0 : index
    %202 = vector.load %arg12[%c7_108, %c0_109, %c0_110] : memref<9x1x256xf32, #tpu.memory_space<vmem>>, vector<1x1x256xf32>
    %203 = vector.shape_cast %202 : vector<1x1x256xf32> to vector<1x256xf32>
    %204 = vector.broadcast %203 : vector<1x256xf32> to vector<8x256xf32>
    %205 = arith.mulf %201, %204 : vector<8x256xf32>
    %206 = arith.truncf %205 : vector<8x256xf32> to vector<8x256xbf16>
    %c7_111 = arith.constant 7 : index
    %c0_112 = arith.constant 0 : index
    %c0_113 = arith.constant 0 : index
    %207 = vector.load %arg4[%c7_111, %c0_112, %c0_113] : memref<9x16x8xbf16, #tpu.memory_space<vmem>>, vector<1x16x8xbf16>
    %208 = vector.shape_cast %207 : vector<1x16x8xbf16> to vector<16x8xbf16>
    %cst_114 = arith.constant dense<0.000000e+00> : vector<16x256xf32>
    %209 = tpu.matmul %208, %206, %cst_114 {dimension_numbers = #tpu.dot_dimension_numbers<[1], [0], [0], [1], [0, 0, 1, 1], [], []>} : vector<16x8xbf16>, vector<8x256xbf16>, vector<16x256xf32> -> vector<16x256xf32>
    %210 = arith.addf %198, %209 : vector<16x256xf32>
    %211 = vector.extract_strided_slice %118 {offsets = [0, 34], sizes = [8, 222], strides = [1, 1]} : vector<8x256xf32> to vector<8x222xf32>
    %212 = vector.extract_strided_slice %118 {offsets = [0, 0], sizes = [8, 34], strides = [1, 1]} : vector<8x256xf32> to vector<8x34xf32>
    %213 = tpu.concatenate %211, %212 in 1 : vector<8x222xf32>, vector<8x34xf32> -> vector<8x256xf32>
    %c8_115 = arith.constant 8 : index
    %c0_116 = arith.constant 0 : index
    %c0_117 = arith.constant 0 : index
    %214 = vector.load %arg12[%c8_115, %c0_116, %c0_117] : memref<9x1x256xf32, #tpu.memory_space<vmem>>, vector<1x1x256xf32>
    %215 = vector.shape_cast %214 : vector<1x1x256xf32> to vector<1x256xf32>
    %216 = vector.broadcast %215 : vector<1x256xf32> to vector<8x256xf32>
    %217 = arith.mulf %213, %216 : vector<8x256xf32>
    %218 = arith.truncf %217 : vector<8x256xf32> to vector<8x256xbf16>
    %c8_118 = arith.constant 8 : index
    %c0_119 = arith.constant 0 : index
    %c0_120 = arith.constant 0 : index
    %219 = vector.load %arg4[%c8_118, %c0_119, %c0_120] : memref<9x16x8xbf16, #tpu.memory_space<vmem>>, vector<1x16x8xbf16>
    %220 = vector.shape_cast %219 : vector<1x16x8xbf16> to vector<16x8xbf16>
    %cst_121 = arith.constant dense<0.000000e+00> : vector<16x256xf32>
    %221 = tpu.matmul %220, %218, %cst_121 {dimension_numbers = #tpu.dot_dimension_numbers<[1], [0], [0], [1], [0, 0, 1, 1], [], []>} : vector<16x8xbf16>, vector<8x256xbf16>, vector<16x256xf32> -> vector<16x256xf32>
    %222 = arith.addf %210, %221 : vector<16x256xf32>
    %c0_122 = arith.constant 0 : index
    %c0_123 = arith.constant 0 : index
    %223 = vector.load %arg5[%c0_122, %c0_123] : memref<16x1xf32, #tpu.memory_space<vmem>>, vector<16x1xf32>
    %224 = vector.broadcast %223 : vector<16x1xf32> to vector<16x256xf32>
    %225 = arith.addf %222, %224 : vector<16x256xf32>
    %cst_124 = arith.constant 0.000000e+00 : f32
    %226 = vector.broadcast %cst_124 : f32 to vector<16x256xf32>
    %227 = arith.maximumf %225, %226 : vector<16x256xf32>
    %c0_125 = arith.constant 0 : index
    %c0_126 = arith.constant 0 : index
    %c0_127 = arith.constant 0 : index
    %228 = vector.load %arg13[%c0_125, %c0_126, %c0_127] : memref<4x1x256xf32, #tpu.memory_space<vmem>>, vector<1x1x256xf32>
    %229 = vector.shape_cast %228 : vector<1x1x256xf32> to vector<1x256xf32>
    %230 = vector.broadcast %229 : vector<1x256xf32> to vector<16x256xf32>
    %231 = arith.mulf %230, %227 : vector<16x256xf32>
    %c1_128 = arith.constant 1 : index
    %c0_129 = arith.constant 0 : index
    %c0_130 = arith.constant 0 : index
    %232 = vector.load %arg13[%c1_128, %c0_129, %c0_130] : memref<4x1x256xf32, #tpu.memory_space<vmem>>, vector<1x1x256xf32>
    %233 = vector.shape_cast %232 : vector<1x1x256xf32> to vector<1x256xf32>
    %234 = vector.extract_strided_slice %227 {offsets = [0, 255], sizes = [16, 1], strides = [1, 1]} : vector<16x256xf32> to vector<16x1xf32>
    %235 = vector.extract_strided_slice %227 {offsets = [0, 0], sizes = [16, 255], strides = [1, 1]} : vector<16x256xf32> to vector<16x255xf32>
    %236 = tpu.concatenate %234, %235 in 1 : vector<16x1xf32>, vector<16x255xf32> -> vector<16x256xf32>
    %237 = vector.broadcast %233 : vector<1x256xf32> to vector<16x256xf32>
    %238 = arith.mulf %237, %236 : vector<16x256xf32>
    %239 = arith.addf %231, %238 : vector<16x256xf32>
    %c2_131 = arith.constant 2 : index
    %c0_132 = arith.constant 0 : index
    %c0_133 = arith.constant 0 : index
    %240 = vector.load %arg13[%c2_131, %c0_132, %c0_133] : memref<4x1x256xf32, #tpu.memory_space<vmem>>, vector<1x1x256xf32>
    %241 = vector.shape_cast %240 : vector<1x1x256xf32> to vector<1x256xf32>
    %242 = vector.extract_strided_slice %227 {offsets = [0, 240], sizes = [16, 16], strides = [1, 1]} : vector<16x256xf32> to vector<16x16xf32>
    %243 = vector.extract_strided_slice %227 {offsets = [0, 0], sizes = [16, 240], strides = [1, 1]} : vector<16x256xf32> to vector<16x240xf32>
    %244 = tpu.concatenate %242, %243 in 1 : vector<16x16xf32>, vector<16x240xf32> -> vector<16x256xf32>
    %245 = vector.broadcast %241 : vector<1x256xf32> to vector<16x256xf32>
    %246 = arith.mulf %245, %244 : vector<16x256xf32>
    %247 = arith.addf %239, %246 : vector<16x256xf32>
    %c3_134 = arith.constant 3 : index
    %c0_135 = arith.constant 0 : index
    %c0_136 = arith.constant 0 : index
    %248 = vector.load %arg13[%c3_134, %c0_135, %c0_136] : memref<4x1x256xf32, #tpu.memory_space<vmem>>, vector<1x1x256xf32>
    %249 = vector.shape_cast %248 : vector<1x1x256xf32> to vector<1x256xf32>
    %250 = vector.extract_strided_slice %227 {offsets = [0, 239], sizes = [16, 17], strides = [1, 1]} : vector<16x256xf32> to vector<16x17xf32>
    %251 = vector.extract_strided_slice %227 {offsets = [0, 0], sizes = [16, 239], strides = [1, 1]} : vector<16x256xf32> to vector<16x239xf32>
    %252 = tpu.concatenate %250, %251 in 1 : vector<16x17xf32>, vector<16x239xf32> -> vector<16x256xf32>
    %253 = vector.broadcast %249 : vector<1x256xf32> to vector<16x256xf32>
    %254 = arith.mulf %253, %252 : vector<16x256xf32>
    %255 = arith.addf %247, %254 : vector<16x256xf32>
    %256 = vector.extract_strided_slice %255 {offsets = [0, 239], sizes = [16, 17], strides = [1, 1]} : vector<16x256xf32> to vector<16x17xf32>
    %257 = vector.extract_strided_slice %255 {offsets = [0, 0], sizes = [16, 239], strides = [1, 1]} : vector<16x256xf32> to vector<16x239xf32>
    %258 = tpu.concatenate %256, %257 in 1 : vector<16x17xf32>, vector<16x239xf32> -> vector<16x256xf32>
    %c0_137 = arith.constant 0 : index
    %c0_138 = arith.constant 0 : index
    %c0_139 = arith.constant 0 : index
    %259 = vector.load %arg11[%c0_137, %c0_138, %c0_139] : memref<9x1x256xf32, #tpu.memory_space<vmem>>, vector<1x1x256xf32>
    %260 = vector.shape_cast %259 : vector<1x1x256xf32> to vector<1x256xf32>
    %261 = vector.broadcast %260 : vector<1x256xf32> to vector<16x256xf32>
    %262 = arith.mulf %258, %261 : vector<16x256xf32>
    %263 = arith.truncf %262 : vector<16x256xf32> to vector<16x256xbf16>
    %c0_140 = arith.constant 0 : index
    %c0_141 = arith.constant 0 : index
    %c0_142 = arith.constant 0 : index
    %264 = vector.load %arg6[%c0_140, %c0_141, %c0_142] : memref<9x8x16xbf16, #tpu.memory_space<vmem>>, vector<1x8x16xbf16>
    %265 = vector.shape_cast %264 : vector<1x8x16xbf16> to vector<8x16xbf16>
    %cst_143 = arith.constant dense<0.000000e+00> : vector<8x256xf32>
    %266 = tpu.matmul %265, %263, %cst_143 {dimension_numbers = #tpu.dot_dimension_numbers<[1], [0], [0], [1], [0, 0, 1, 1], [], []>} : vector<8x16xbf16>, vector<16x256xbf16>, vector<8x256xf32> -> vector<8x256xf32>
    %267 = vector.extract_strided_slice %255 {offsets = [0, 240], sizes = [16, 16], strides = [1, 1]} : vector<16x256xf32> to vector<16x16xf32>
    %268 = vector.extract_strided_slice %255 {offsets = [0, 0], sizes = [16, 240], strides = [1, 1]} : vector<16x256xf32> to vector<16x240xf32>
    %269 = tpu.concatenate %267, %268 in 1 : vector<16x16xf32>, vector<16x240xf32> -> vector<16x256xf32>
    %c1_144 = arith.constant 1 : index
    %c0_145 = arith.constant 0 : index
    %c0_146 = arith.constant 0 : index
    %270 = vector.load %arg11[%c1_144, %c0_145, %c0_146] : memref<9x1x256xf32, #tpu.memory_space<vmem>>, vector<1x1x256xf32>
    %271 = vector.shape_cast %270 : vector<1x1x256xf32> to vector<1x256xf32>
    %272 = vector.broadcast %271 : vector<1x256xf32> to vector<16x256xf32>
    %273 = arith.mulf %269, %272 : vector<16x256xf32>
    %274 = arith.truncf %273 : vector<16x256xf32> to vector<16x256xbf16>
    %c1_147 = arith.constant 1 : index
    %c0_148 = arith.constant 0 : index
    %c0_149 = arith.constant 0 : index
    %275 = vector.load %arg6[%c1_147, %c0_148, %c0_149] : memref<9x8x16xbf16, #tpu.memory_space<vmem>>, vector<1x8x16xbf16>
    %276 = vector.shape_cast %275 : vector<1x8x16xbf16> to vector<8x16xbf16>
    %cst_150 = arith.constant dense<0.000000e+00> : vector<8x256xf32>
    %277 = tpu.matmul %276, %274, %cst_150 {dimension_numbers = #tpu.dot_dimension_numbers<[1], [0], [0], [1], [0, 0, 1, 1], [], []>} : vector<8x16xbf16>, vector<16x256xbf16>, vector<8x256xf32> -> vector<8x256xf32>
    %278 = arith.addf %266, %277 : vector<8x256xf32>
    %279 = vector.extract_strided_slice %255 {offsets = [0, 241], sizes = [16, 15], strides = [1, 1]} : vector<16x256xf32> to vector<16x15xf32>
    %280 = vector.extract_strided_slice %255 {offsets = [0, 0], sizes = [16, 241], strides = [1, 1]} : vector<16x256xf32> to vector<16x241xf32>
    %281 = tpu.concatenate %279, %280 in 1 : vector<16x15xf32>, vector<16x241xf32> -> vector<16x256xf32>
    %c2_151 = arith.constant 2 : index
    %c0_152 = arith.constant 0 : index
    %c0_153 = arith.constant 0 : index
    %282 = vector.load %arg11[%c2_151, %c0_152, %c0_153] : memref<9x1x256xf32, #tpu.memory_space<vmem>>, vector<1x1x256xf32>
    %283 = vector.shape_cast %282 : vector<1x1x256xf32> to vector<1x256xf32>
    %284 = vector.broadcast %283 : vector<1x256xf32> to vector<16x256xf32>
    %285 = arith.mulf %281, %284 : vector<16x256xf32>
    %286 = arith.truncf %285 : vector<16x256xf32> to vector<16x256xbf16>
    %c2_154 = arith.constant 2 : index
    %c0_155 = arith.constant 0 : index
    %c0_156 = arith.constant 0 : index
    %287 = vector.load %arg6[%c2_154, %c0_155, %c0_156] : memref<9x8x16xbf16, #tpu.memory_space<vmem>>, vector<1x8x16xbf16>
    %288 = vector.shape_cast %287 : vector<1x8x16xbf16> to vector<8x16xbf16>
    %cst_157 = arith.constant dense<0.000000e+00> : vector<8x256xf32>
    %289 = tpu.matmul %288, %286, %cst_157 {dimension_numbers = #tpu.dot_dimension_numbers<[1], [0], [0], [1], [0, 0, 1, 1], [], []>} : vector<8x16xbf16>, vector<16x256xbf16>, vector<8x256xf32> -> vector<8x256xf32>
    %290 = arith.addf %278, %289 : vector<8x256xf32>
    %291 = vector.extract_strided_slice %255 {offsets = [0, 255], sizes = [16, 1], strides = [1, 1]} : vector<16x256xf32> to vector<16x1xf32>
    %292 = vector.extract_strided_slice %255 {offsets = [0, 0], sizes = [16, 255], strides = [1, 1]} : vector<16x256xf32> to vector<16x255xf32>
    %293 = tpu.concatenate %291, %292 in 1 : vector<16x1xf32>, vector<16x255xf32> -> vector<16x256xf32>
    %c3_158 = arith.constant 3 : index
    %c0_159 = arith.constant 0 : index
    %c0_160 = arith.constant 0 : index
    %294 = vector.load %arg11[%c3_158, %c0_159, %c0_160] : memref<9x1x256xf32, #tpu.memory_space<vmem>>, vector<1x1x256xf32>
    %295 = vector.shape_cast %294 : vector<1x1x256xf32> to vector<1x256xf32>
    %296 = vector.broadcast %295 : vector<1x256xf32> to vector<16x256xf32>
    %297 = arith.mulf %293, %296 : vector<16x256xf32>
    %298 = arith.truncf %297 : vector<16x256xf32> to vector<16x256xbf16>
    %c3_161 = arith.constant 3 : index
    %c0_162 = arith.constant 0 : index
    %c0_163 = arith.constant 0 : index
    %299 = vector.load %arg6[%c3_161, %c0_162, %c0_163] : memref<9x8x16xbf16, #tpu.memory_space<vmem>>, vector<1x8x16xbf16>
    %300 = vector.shape_cast %299 : vector<1x8x16xbf16> to vector<8x16xbf16>
    %cst_164 = arith.constant dense<0.000000e+00> : vector<8x256xf32>
    %301 = tpu.matmul %300, %298, %cst_164 {dimension_numbers = #tpu.dot_dimension_numbers<[1], [0], [0], [1], [0, 0, 1, 1], [], []>} : vector<8x16xbf16>, vector<16x256xbf16>, vector<8x256xf32> -> vector<8x256xf32>
    %302 = arith.addf %290, %301 : vector<8x256xf32>
    %c4_165 = arith.constant 4 : index
    %c0_166 = arith.constant 0 : index
    %c0_167 = arith.constant 0 : index
    %303 = vector.load %arg11[%c4_165, %c0_166, %c0_167] : memref<9x1x256xf32, #tpu.memory_space<vmem>>, vector<1x1x256xf32>
    %304 = vector.shape_cast %303 : vector<1x1x256xf32> to vector<1x256xf32>
    %305 = vector.broadcast %304 : vector<1x256xf32> to vector<16x256xf32>
    %306 = arith.mulf %255, %305 : vector<16x256xf32>
    %307 = arith.truncf %306 : vector<16x256xf32> to vector<16x256xbf16>
    %c4_168 = arith.constant 4 : index
    %c0_169 = arith.constant 0 : index
    %c0_170 = arith.constant 0 : index
    %308 = vector.load %arg6[%c4_168, %c0_169, %c0_170] : memref<9x8x16xbf16, #tpu.memory_space<vmem>>, vector<1x8x16xbf16>
    %309 = vector.shape_cast %308 : vector<1x8x16xbf16> to vector<8x16xbf16>
    %cst_171 = arith.constant dense<0.000000e+00> : vector<8x256xf32>
    %310 = tpu.matmul %309, %307, %cst_171 {dimension_numbers = #tpu.dot_dimension_numbers<[1], [0], [0], [1], [0, 0, 1, 1], [], []>} : vector<8x16xbf16>, vector<16x256xbf16>, vector<8x256xf32> -> vector<8x256xf32>
    %311 = arith.addf %302, %310 : vector<8x256xf32>
    %312 = vector.extract_strided_slice %255 {offsets = [0, 1], sizes = [16, 255], strides = [1, 1]} : vector<16x256xf32> to vector<16x255xf32>
    %313 = vector.extract_strided_slice %255 {offsets = [0, 0], sizes = [16, 1], strides = [1, 1]} : vector<16x256xf32> to vector<16x1xf32>
    %314 = tpu.concatenate %312, %313 in 1 : vector<16x255xf32>, vector<16x1xf32> -> vector<16x256xf32>
    %c5_172 = arith.constant 5 : index
    %c0_173 = arith.constant 0 : index
    %c0_174 = arith.constant 0 : index
    %315 = vector.load %arg11[%c5_172, %c0_173, %c0_174] : memref<9x1x256xf32, #tpu.memory_space<vmem>>, vector<1x1x256xf32>
    %316 = vector.shape_cast %315 : vector<1x1x256xf32> to vector<1x256xf32>
    %317 = vector.broadcast %316 : vector<1x256xf32> to vector<16x256xf32>
    %318 = arith.mulf %314, %317 : vector<16x256xf32>
    %319 = arith.truncf %318 : vector<16x256xf32> to vector<16x256xbf16>
    %c5_175 = arith.constant 5 : index
    %c0_176 = arith.constant 0 : index
    %c0_177 = arith.constant 0 : index
    %320 = vector.load %arg6[%c5_175, %c0_176, %c0_177] : memref<9x8x16xbf16, #tpu.memory_space<vmem>>, vector<1x8x16xbf16>
    %321 = vector.shape_cast %320 : vector<1x8x16xbf16> to vector<8x16xbf16>
    %cst_178 = arith.constant dense<0.000000e+00> : vector<8x256xf32>
    %322 = tpu.matmul %321, %319, %cst_178 {dimension_numbers = #tpu.dot_dimension_numbers<[1], [0], [0], [1], [0, 0, 1, 1], [], []>} : vector<8x16xbf16>, vector<16x256xbf16>, vector<8x256xf32> -> vector<8x256xf32>
    %323 = arith.addf %311, %322 : vector<8x256xf32>
    %324 = vector.extract_strided_slice %255 {offsets = [0, 15], sizes = [16, 241], strides = [1, 1]} : vector<16x256xf32> to vector<16x241xf32>
    %325 = vector.extract_strided_slice %255 {offsets = [0, 0], sizes = [16, 15], strides = [1, 1]} : vector<16x256xf32> to vector<16x15xf32>
    %326 = tpu.concatenate %324, %325 in 1 : vector<16x241xf32>, vector<16x15xf32> -> vector<16x256xf32>
    %c6_179 = arith.constant 6 : index
    %c0_180 = arith.constant 0 : index
    %c0_181 = arith.constant 0 : index
    %327 = vector.load %arg11[%c6_179, %c0_180, %c0_181] : memref<9x1x256xf32, #tpu.memory_space<vmem>>, vector<1x1x256xf32>
    %328 = vector.shape_cast %327 : vector<1x1x256xf32> to vector<1x256xf32>
    %329 = vector.broadcast %328 : vector<1x256xf32> to vector<16x256xf32>
    %330 = arith.mulf %326, %329 : vector<16x256xf32>
    %331 = arith.truncf %330 : vector<16x256xf32> to vector<16x256xbf16>
    %c6_182 = arith.constant 6 : index
    %c0_183 = arith.constant 0 : index
    %c0_184 = arith.constant 0 : index
    %332 = vector.load %arg6[%c6_182, %c0_183, %c0_184] : memref<9x8x16xbf16, #tpu.memory_space<vmem>>, vector<1x8x16xbf16>
    %333 = vector.shape_cast %332 : vector<1x8x16xbf16> to vector<8x16xbf16>
    %cst_185 = arith.constant dense<0.000000e+00> : vector<8x256xf32>
    %334 = tpu.matmul %333, %331, %cst_185 {dimension_numbers = #tpu.dot_dimension_numbers<[1], [0], [0], [1], [0, 0, 1, 1], [], []>} : vector<8x16xbf16>, vector<16x256xbf16>, vector<8x256xf32> -> vector<8x256xf32>
    %335 = arith.addf %323, %334 : vector<8x256xf32>
    %336 = vector.extract_strided_slice %255 {offsets = [0, 16], sizes = [16, 240], strides = [1, 1]} : vector<16x256xf32> to vector<16x240xf32>
    %337 = vector.extract_strided_slice %255 {offsets = [0, 0], sizes = [16, 16], strides = [1, 1]} : vector<16x256xf32> to vector<16x16xf32>
    %338 = tpu.concatenate %336, %337 in 1 : vector<16x240xf32>, vector<16x16xf32> -> vector<16x256xf32>
    %c7_186 = arith.constant 7 : index
    %c0_187 = arith.constant 0 : index
    %c0_188 = arith.constant 0 : index
    %339 = vector.load %arg11[%c7_186, %c0_187, %c0_188] : memref<9x1x256xf32, #tpu.memory_space<vmem>>, vector<1x1x256xf32>
    %340 = vector.shape_cast %339 : vector<1x1x256xf32> to vector<1x256xf32>
    %341 = vector.broadcast %340 : vector<1x256xf32> to vector<16x256xf32>
    %342 = arith.mulf %338, %341 : vector<16x256xf32>
    %343 = arith.truncf %342 : vector<16x256xf32> to vector<16x256xbf16>
    %c7_189 = arith.constant 7 : index
    %c0_190 = arith.constant 0 : index
    %c0_191 = arith.constant 0 : index
    %344 = vector.load %arg6[%c7_189, %c0_190, %c0_191] : memref<9x8x16xbf16, #tpu.memory_space<vmem>>, vector<1x8x16xbf16>
    %345 = vector.shape_cast %344 : vector<1x8x16xbf16> to vector<8x16xbf16>
    %cst_192 = arith.constant dense<0.000000e+00> : vector<8x256xf32>
    %346 = tpu.matmul %345, %343, %cst_192 {dimension_numbers = #tpu.dot_dimension_numbers<[1], [0], [0], [1], [0, 0, 1, 1], [], []>} : vector<8x16xbf16>, vector<16x256xbf16>, vector<8x256xf32> -> vector<8x256xf32>
    %347 = arith.addf %335, %346 : vector<8x256xf32>
    %348 = vector.extract_strided_slice %255 {offsets = [0, 17], sizes = [16, 239], strides = [1, 1]} : vector<16x256xf32> to vector<16x239xf32>
    %349 = vector.extract_strided_slice %255 {offsets = [0, 0], sizes = [16, 17], strides = [1, 1]} : vector<16x256xf32> to vector<16x17xf32>
    %350 = tpu.concatenate %348, %349 in 1 : vector<16x239xf32>, vector<16x17xf32> -> vector<16x256xf32>
    %c8_193 = arith.constant 8 : index
    %c0_194 = arith.constant 0 : index
    %c0_195 = arith.constant 0 : index
    %351 = vector.load %arg11[%c8_193, %c0_194, %c0_195] : memref<9x1x256xf32, #tpu.memory_space<vmem>>, vector<1x1x256xf32>
    %352 = vector.shape_cast %351 : vector<1x1x256xf32> to vector<1x256xf32>
    %353 = vector.broadcast %352 : vector<1x256xf32> to vector<16x256xf32>
    %354 = arith.mulf %350, %353 : vector<16x256xf32>
    %355 = arith.truncf %354 : vector<16x256xf32> to vector<16x256xbf16>
    %c8_196 = arith.constant 8 : index
    %c0_197 = arith.constant 0 : index
    %c0_198 = arith.constant 0 : index
    %356 = vector.load %arg6[%c8_196, %c0_197, %c0_198] : memref<9x8x16xbf16, #tpu.memory_space<vmem>>, vector<1x8x16xbf16>
    %357 = vector.shape_cast %356 : vector<1x8x16xbf16> to vector<8x16xbf16>
    %cst_199 = arith.constant dense<0.000000e+00> : vector<8x256xf32>
    %358 = tpu.matmul %357, %355, %cst_199 {dimension_numbers = #tpu.dot_dimension_numbers<[1], [0], [0], [1], [0, 0, 1, 1], [], []>} : vector<8x16xbf16>, vector<16x256xbf16>, vector<8x256xf32> -> vector<8x256xf32>
    %359 = arith.addf %347, %358 : vector<8x256xf32>
    %360 = vector.extract_strided_slice %110 {offsets = [0, 239], sizes = [8, 17], strides = [1, 1]} : vector<8x256xf32> to vector<8x17xf32>
    %361 = vector.extract_strided_slice %110 {offsets = [0, 0], sizes = [8, 239], strides = [1, 1]} : vector<8x256xf32> to vector<8x239xf32>
    %362 = tpu.concatenate %360, %361 in 1 : vector<8x17xf32>, vector<8x239xf32> -> vector<8x256xf32>
    %c0_200 = arith.constant 0 : index
    %c0_201 = arith.constant 0 : index
    %c0_202 = arith.constant 0 : index
    %363 = vector.load %arg11[%c0_200, %c0_201, %c0_202] : memref<9x1x256xf32, #tpu.memory_space<vmem>>, vector<1x1x256xf32>
    %364 = vector.shape_cast %363 : vector<1x1x256xf32> to vector<1x256xf32>
    %365 = vector.broadcast %364 : vector<1x256xf32> to vector<8x256xf32>
    %366 = arith.mulf %362, %365 : vector<8x256xf32>
    %367 = arith.truncf %366 : vector<8x256xf32> to vector<8x256xbf16>
    %c0_203 = arith.constant 0 : index
    %c0_204 = arith.constant 0 : index
    %c0_205 = arith.constant 0 : index
    %368 = vector.load %arg7[%c0_203, %c0_204, %c0_205] : memref<9x8x8xbf16, #tpu.memory_space<vmem>>, vector<1x8x8xbf16>
    %369 = vector.shape_cast %368 : vector<1x8x8xbf16> to vector<8x8xbf16>
    %cst_206 = arith.constant dense<0.000000e+00> : vector<8x256xf32>
    %370 = tpu.matmul %369, %367, %cst_206 {dimension_numbers = #tpu.dot_dimension_numbers<[1], [0], [0], [1], [0, 0, 1, 1], [], []>} : vector<8x8xbf16>, vector<8x256xbf16>, vector<8x256xf32> -> vector<8x256xf32>
    %371 = vector.extract_strided_slice %110 {offsets = [0, 240], sizes = [8, 16], strides = [1, 1]} : vector<8x256xf32> to vector<8x16xf32>
    %372 = vector.extract_strided_slice %110 {offsets = [0, 0], sizes = [8, 240], strides = [1, 1]} : vector<8x256xf32> to vector<8x240xf32>
    %373 = tpu.concatenate %371, %372 in 1 : vector<8x16xf32>, vector<8x240xf32> -> vector<8x256xf32>
    %c1_207 = arith.constant 1 : index
    %c0_208 = arith.constant 0 : index
    %c0_209 = arith.constant 0 : index
    %374 = vector.load %arg11[%c1_207, %c0_208, %c0_209] : memref<9x1x256xf32, #tpu.memory_space<vmem>>, vector<1x1x256xf32>
    %375 = vector.shape_cast %374 : vector<1x1x256xf32> to vector<1x256xf32>
    %376 = vector.broadcast %375 : vector<1x256xf32> to vector<8x256xf32>
    %377 = arith.mulf %373, %376 : vector<8x256xf32>
    %378 = arith.truncf %377 : vector<8x256xf32> to vector<8x256xbf16>
    %c1_210 = arith.constant 1 : index
    %c0_211 = arith.constant 0 : index
    %c0_212 = arith.constant 0 : index
    %379 = vector.load %arg7[%c1_210, %c0_211, %c0_212] : memref<9x8x8xbf16, #tpu.memory_space<vmem>>, vector<1x8x8xbf16>
    %380 = vector.shape_cast %379 : vector<1x8x8xbf16> to vector<8x8xbf16>
    %cst_213 = arith.constant dense<0.000000e+00> : vector<8x256xf32>
    %381 = tpu.matmul %380, %378, %cst_213 {dimension_numbers = #tpu.dot_dimension_numbers<[1], [0], [0], [1], [0, 0, 1, 1], [], []>} : vector<8x8xbf16>, vector<8x256xbf16>, vector<8x256xf32> -> vector<8x256xf32>
    %382 = arith.addf %370, %381 : vector<8x256xf32>
    %383 = vector.extract_strided_slice %110 {offsets = [0, 241], sizes = [8, 15], strides = [1, 1]} : vector<8x256xf32> to vector<8x15xf32>
    %384 = vector.extract_strided_slice %110 {offsets = [0, 0], sizes = [8, 241], strides = [1, 1]} : vector<8x256xf32> to vector<8x241xf32>
    %385 = tpu.concatenate %383, %384 in 1 : vector<8x15xf32>, vector<8x241xf32> -> vector<8x256xf32>
    %c2_214 = arith.constant 2 : index
    %c0_215 = arith.constant 0 : index
    %c0_216 = arith.constant 0 : index
    %386 = vector.load %arg11[%c2_214, %c0_215, %c0_216] : memref<9x1x256xf32, #tpu.memory_space<vmem>>, vector<1x1x256xf32>
    %387 = vector.shape_cast %386 : vector<1x1x256xf32> to vector<1x256xf32>
    %388 = vector.broadcast %387 : vector<1x256xf32> to vector<8x256xf32>
    %389 = arith.mulf %385, %388 : vector<8x256xf32>
    %390 = arith.truncf %389 : vector<8x256xf32> to vector<8x256xbf16>
    %c2_217 = arith.constant 2 : index
    %c0_218 = arith.constant 0 : index
    %c0_219 = arith.constant 0 : index
    %391 = vector.load %arg7[%c2_217, %c0_218, %c0_219] : memref<9x8x8xbf16, #tpu.memory_space<vmem>>, vector<1x8x8xbf16>
    %392 = vector.shape_cast %391 : vector<1x8x8xbf16> to vector<8x8xbf16>
    %cst_220 = arith.constant dense<0.000000e+00> : vector<8x256xf32>
    %393 = tpu.matmul %392, %390, %cst_220 {dimension_numbers = #tpu.dot_dimension_numbers<[1], [0], [0], [1], [0, 0, 1, 1], [], []>} : vector<8x8xbf16>, vector<8x256xbf16>, vector<8x256xf32> -> vector<8x256xf32>
    %394 = arith.addf %382, %393 : vector<8x256xf32>
    %395 = vector.extract_strided_slice %110 {offsets = [0, 255], sizes = [8, 1], strides = [1, 1]} : vector<8x256xf32> to vector<8x1xf32>
    %396 = vector.extract_strided_slice %110 {offsets = [0, 0], sizes = [8, 255], strides = [1, 1]} : vector<8x256xf32> to vector<8x255xf32>
    %397 = tpu.concatenate %395, %396 in 1 : vector<8x1xf32>, vector<8x255xf32> -> vector<8x256xf32>
    %c3_221 = arith.constant 3 : index
    %c0_222 = arith.constant 0 : index
    %c0_223 = arith.constant 0 : index
    %398 = vector.load %arg11[%c3_221, %c0_222, %c0_223] : memref<9x1x256xf32, #tpu.memory_space<vmem>>, vector<1x1x256xf32>
    %399 = vector.shape_cast %398 : vector<1x1x256xf32> to vector<1x256xf32>
    %400 = vector.broadcast %399 : vector<1x256xf32> to vector<8x256xf32>
    %401 = arith.mulf %397, %400 : vector<8x256xf32>
    %402 = arith.truncf %401 : vector<8x256xf32> to vector<8x256xbf16>
    %c3_224 = arith.constant 3 : index
    %c0_225 = arith.constant 0 : index
    %c0_226 = arith.constant 0 : index
    %403 = vector.load %arg7[%c3_224, %c0_225, %c0_226] : memref<9x8x8xbf16, #tpu.memory_space<vmem>>, vector<1x8x8xbf16>
    %404 = vector.shape_cast %403 : vector<1x8x8xbf16> to vector<8x8xbf16>
    %cst_227 = arith.constant dense<0.000000e+00> : vector<8x256xf32>
    %405 = tpu.matmul %404, %402, %cst_227 {dimension_numbers = #tpu.dot_dimension_numbers<[1], [0], [0], [1], [0, 0, 1, 1], [], []>} : vector<8x8xbf16>, vector<8x256xbf16>, vector<8x256xf32> -> vector<8x256xf32>
    %406 = arith.addf %394, %405 : vector<8x256xf32>
    %c4_228 = arith.constant 4 : index
    %c0_229 = arith.constant 0 : index
    %c0_230 = arith.constant 0 : index
    %407 = vector.load %arg11[%c4_228, %c0_229, %c0_230] : memref<9x1x256xf32, #tpu.memory_space<vmem>>, vector<1x1x256xf32>
    %408 = vector.shape_cast %407 : vector<1x1x256xf32> to vector<1x256xf32>
    %409 = vector.broadcast %408 : vector<1x256xf32> to vector<8x256xf32>
    %410 = arith.mulf %110, %409 : vector<8x256xf32>
    %411 = arith.truncf %410 : vector<8x256xf32> to vector<8x256xbf16>
    %c4_231 = arith.constant 4 : index
    %c0_232 = arith.constant 0 : index
    %c0_233 = arith.constant 0 : index
    %412 = vector.load %arg7[%c4_231, %c0_232, %c0_233] : memref<9x8x8xbf16, #tpu.memory_space<vmem>>, vector<1x8x8xbf16>
    %413 = vector.shape_cast %412 : vector<1x8x8xbf16> to vector<8x8xbf16>
    %cst_234 = arith.constant dense<0.000000e+00> : vector<8x256xf32>
    %414 = tpu.matmul %413, %411, %cst_234 {dimension_numbers = #tpu.dot_dimension_numbers<[1], [0], [0], [1], [0, 0, 1, 1], [], []>} : vector<8x8xbf16>, vector<8x256xbf16>, vector<8x256xf32> -> vector<8x256xf32>
    %415 = arith.addf %406, %414 : vector<8x256xf32>
    %416 = vector.extract_strided_slice %110 {offsets = [0, 1], sizes = [8, 255], strides = [1, 1]} : vector<8x256xf32> to vector<8x255xf32>
    %417 = vector.extract_strided_slice %110 {offsets = [0, 0], sizes = [8, 1], strides = [1, 1]} : vector<8x256xf32> to vector<8x1xf32>
    %418 = tpu.concatenate %416, %417 in 1 : vector<8x255xf32>, vector<8x1xf32> -> vector<8x256xf32>
    %c5_235 = arith.constant 5 : index
    %c0_236 = arith.constant 0 : index
    %c0_237 = arith.constant 0 : index
    %419 = vector.load %arg11[%c5_235, %c0_236, %c0_237] : memref<9x1x256xf32, #tpu.memory_space<vmem>>, vector<1x1x256xf32>
    %420 = vector.shape_cast %419 : vector<1x1x256xf32> to vector<1x256xf32>
    %421 = vector.broadcast %420 : vector<1x256xf32> to vector<8x256xf32>
    %422 = arith.mulf %418, %421 : vector<8x256xf32>
    %423 = arith.truncf %422 : vector<8x256xf32> to vector<8x256xbf16>
    %c5_238 = arith.constant 5 : index
    %c0_239 = arith.constant 0 : index
    %c0_240 = arith.constant 0 : index
    %424 = vector.load %arg7[%c5_238, %c0_239, %c0_240] : memref<9x8x8xbf16, #tpu.memory_space<vmem>>, vector<1x8x8xbf16>
    %425 = vector.shape_cast %424 : vector<1x8x8xbf16> to vector<8x8xbf16>
    %cst_241 = arith.constant dense<0.000000e+00> : vector<8x256xf32>
    %426 = tpu.matmul %425, %423, %cst_241 {dimension_numbers = #tpu.dot_dimension_numbers<[1], [0], [0], [1], [0, 0, 1, 1], [], []>} : vector<8x8xbf16>, vector<8x256xbf16>, vector<8x256xf32> -> vector<8x256xf32>
    %427 = arith.addf %415, %426 : vector<8x256xf32>
    %428 = vector.extract_strided_slice %110 {offsets = [0, 15], sizes = [8, 241], strides = [1, 1]} : vector<8x256xf32> to vector<8x241xf32>
    %429 = vector.extract_strided_slice %110 {offsets = [0, 0], sizes = [8, 15], strides = [1, 1]} : vector<8x256xf32> to vector<8x15xf32>
    %430 = tpu.concatenate %428, %429 in 1 : vector<8x241xf32>, vector<8x15xf32> -> vector<8x256xf32>
    %c6_242 = arith.constant 6 : index
    %c0_243 = arith.constant 0 : index
    %c0_244 = arith.constant 0 : index
    %431 = vector.load %arg11[%c6_242, %c0_243, %c0_244] : memref<9x1x256xf32, #tpu.memory_space<vmem>>, vector<1x1x256xf32>
    %432 = vector.shape_cast %431 : vector<1x1x256xf32> to vector<1x256xf32>
    %433 = vector.broadcast %432 : vector<1x256xf32> to vector<8x256xf32>
    %434 = arith.mulf %430, %433 : vector<8x256xf32>
    %435 = arith.truncf %434 : vector<8x256xf32> to vector<8x256xbf16>
    %c6_245 = arith.constant 6 : index
    %c0_246 = arith.constant 0 : index
    %c0_247 = arith.constant 0 : index
    %436 = vector.load %arg7[%c6_245, %c0_246, %c0_247] : memref<9x8x8xbf16, #tpu.memory_space<vmem>>, vector<1x8x8xbf16>
    %437 = vector.shape_cast %436 : vector<1x8x8xbf16> to vector<8x8xbf16>
    %cst_248 = arith.constant dense<0.000000e+00> : vector<8x256xf32>
    %438 = tpu.matmul %437, %435, %cst_248 {dimension_numbers = #tpu.dot_dimension_numbers<[1], [0], [0], [1], [0, 0, 1, 1], [], []>} : vector<8x8xbf16>, vector<8x256xbf16>, vector<8x256xf32> -> vector<8x256xf32>
    %439 = arith.addf %427, %438 : vector<8x256xf32>
    %440 = vector.extract_strided_slice %110 {offsets = [0, 16], sizes = [8, 240], strides = [1, 1]} : vector<8x256xf32> to vector<8x240xf32>
    %441 = vector.extract_strided_slice %110 {offsets = [0, 0], sizes = [8, 16], strides = [1, 1]} : vector<8x256xf32> to vector<8x16xf32>
    %442 = tpu.concatenate %440, %441 in 1 : vector<8x240xf32>, vector<8x16xf32> -> vector<8x256xf32>
    %c7_249 = arith.constant 7 : index
    %c0_250 = arith.constant 0 : index
    %c0_251 = arith.constant 0 : index
    %443 = vector.load %arg11[%c7_249, %c0_250, %c0_251] : memref<9x1x256xf32, #tpu.memory_space<vmem>>, vector<1x1x256xf32>
    %444 = vector.shape_cast %443 : vector<1x1x256xf32> to vector<1x256xf32>
    %445 = vector.broadcast %444 : vector<1x256xf32> to vector<8x256xf32>
    %446 = arith.mulf %442, %445 : vector<8x256xf32>
    %447 = arith.truncf %446 : vector<8x256xf32> to vector<8x256xbf16>
    %c7_252 = arith.constant 7 : index
    %c0_253 = arith.constant 0 : index
    %c0_254 = arith.constant 0 : index
    %448 = vector.load %arg7[%c7_252, %c0_253, %c0_254] : memref<9x8x8xbf16, #tpu.memory_space<vmem>>, vector<1x8x8xbf16>
    %449 = vector.shape_cast %448 : vector<1x8x8xbf16> to vector<8x8xbf16>
    %cst_255 = arith.constant dense<0.000000e+00> : vector<8x256xf32>
    %450 = tpu.matmul %449, %447, %cst_255 {dimension_numbers = #tpu.dot_dimension_numbers<[1], [0], [0], [1], [0, 0, 1, 1], [], []>} : vector<8x8xbf16>, vector<8x256xbf16>, vector<8x256xf32> -> vector<8x256xf32>
    %451 = arith.addf %439, %450 : vector<8x256xf32>
    %452 = vector.extract_strided_slice %110 {offsets = [0, 17], sizes = [8, 239], strides = [1, 1]} : vector<8x256xf32> to vector<8x239xf32>
    %453 = vector.extract_strided_slice %110 {offsets = [0, 0], sizes = [8, 17], strides = [1, 1]} : vector<8x256xf32> to vector<8x17xf32>
    %454 = tpu.concatenate %452, %453 in 1 : vector<8x239xf32>, vector<8x17xf32> -> vector<8x256xf32>
    %c8_256 = arith.constant 8 : index
    %c0_257 = arith.constant 0 : index
    %c0_258 = arith.constant 0 : index
    %455 = vector.load %arg11[%c8_256, %c0_257, %c0_258] : memref<9x1x256xf32, #tpu.memory_space<vmem>>, vector<1x1x256xf32>
    %456 = vector.shape_cast %455 : vector<1x1x256xf32> to vector<1x256xf32>
    %457 = vector.broadcast %456 : vector<1x256xf32> to vector<8x256xf32>
    %458 = arith.mulf %454, %457 : vector<8x256xf32>
    %459 = arith.truncf %458 : vector<8x256xf32> to vector<8x256xbf16>
    %c8_259 = arith.constant 8 : index
    %c0_260 = arith.constant 0 : index
    %c0_261 = arith.constant 0 : index
    %460 = vector.load %arg7[%c8_259, %c0_260, %c0_261] : memref<9x8x8xbf16, #tpu.memory_space<vmem>>, vector<1x8x8xbf16>
    %461 = vector.shape_cast %460 : vector<1x8x8xbf16> to vector<8x8xbf16>
    %cst_262 = arith.constant dense<0.000000e+00> : vector<8x256xf32>
    %462 = tpu.matmul %461, %459, %cst_262 {dimension_numbers = #tpu.dot_dimension_numbers<[1], [0], [0], [1], [0, 0, 1, 1], [], []>} : vector<8x8xbf16>, vector<8x256xbf16>, vector<8x256xf32> -> vector<8x256xf32>
    %463 = arith.addf %451, %462 : vector<8x256xf32>
    %464 = arith.addf %359, %463 : vector<8x256xf32>
    %c0_263 = arith.constant 0 : index
    %c0_264 = arith.constant 0 : index
    %465 = vector.load %arg8[%c0_263, %c0_264] : memref<8x1xf32, #tpu.memory_space<vmem>>, vector<8x1xf32>
    %466 = vector.broadcast %465 : vector<8x1xf32> to vector<8x256xf32>
    %467 = arith.addf %464, %466 : vector<8x256xf32>
    %cst_265 = arith.constant 0.000000e+00 : f32
    %468 = vector.broadcast %cst_265 : f32 to vector<8x256xf32>
    %469 = arith.maximumf %467, %468 : vector<8x256xf32>
    %c0_266 = arith.constant 0 : index
    %c0_267 = arith.constant 0 : index
    %470 = vector.load %arg9[%c0_266, %c0_267] : memref<3x8xbf16, #tpu.memory_space<vmem>>, vector<3x8xbf16>
    %471 = arith.truncf %469 : vector<8x256xf32> to vector<8x256xbf16>
    %cst_268 = arith.constant dense<0.000000e+00> : vector<3x256xf32>
    %472 = tpu.matmul %470, %471, %cst_268 {dimension_numbers = #tpu.dot_dimension_numbers<[1], [0], [0], [1], [0, 0, 1, 1], [], []>} : vector<3x8xbf16>, vector<8x256xbf16>, vector<3x256xf32> -> vector<3x256xf32>
    %c0_269 = arith.constant 0 : index
    %c0_270 = arith.constant 0 : index
    %473 = vector.load %arg10[%c0_269, %c0_270] : memref<3x1xf32, #tpu.memory_space<vmem>>, vector<3x1xf32>
    %474 = vector.broadcast %473 : vector<3x1xf32> to vector<3x256xf32>
    %475 = arith.addf %472, %474 : vector<3x256xf32>
    %c0_271 = arith.constant 0 : index
    %c0_272 = arith.constant 0 : index
    %c0_273 = arith.constant 0 : index
    %476 = vector.load %arg14[%c0_271, %c0_272, %c0_273] : memref<1x3x256xf32, #tpu.memory_space<vmem>>, vector<1x3x256xf32>
    %477 = vector.shape_cast %476 : vector<1x3x256xf32> to vector<3x256xf32>
    %478 = vector.shape_cast %475 : vector<3x256xf32> to vector<1x3x256xf32>
    tpu.vector_store %arg14[%c0_271, %c0_272, %c0_273], %478 {strides = array<i32>} : memref<1x3x256xf32, #tpu.memory_space<vmem>>, vector<1x3x256xf32>,
    return
  }
  func.func @transform_0(%arg0: i32) -> (i32, i32, i32) {
    %c0_i32 = arith.constant 0 : i32
    %c0_i32_0 = arith.constant 0 : i32
    %c0_i32_1 = arith.constant 0 : i32
    return %arg0, %c0_i32, %c0_i32_0 : i32, i32, i32
  }
  func.func @transform_1(%arg0: i32) -> (i32, i32, i32) {
    %c0_i32 = arith.constant 0 : i32
    %c0_i32_0 = arith.constant 0 : i32
    %c0_i32_1 = arith.constant 0 : i32
    %c0_i32_2 = arith.constant 0 : i32
    return %c0_i32, %c0_i32_0, %c0_i32_1 : i32, i32, i32
  }
  func.func @transform_2(%arg0: i32) -> (i32, i32) {
    %c0_i32 = arith.constant 0 : i32
    %c0_i32_0 = arith.constant 0 : i32
    %c0_i32_1 = arith.constant 0 : i32
    return %c0_i32, %c0_i32_0 : i32, i32
  }
  func.func @transform_3(%arg0: i32) -> (i32, i32, i32) {
    %c0_i32 = arith.constant 0 : i32
    %c0_i32_0 = arith.constant 0 : i32
    %c0_i32_1 = arith.constant 0 : i32
    %c0_i32_2 = arith.constant 0 : i32
    return %c0_i32, %c0_i32_0, %c0_i32_1 : i32, i32, i32
  }
  func.func @transform_4(%arg0: i32) -> (i32, i32) {
    %c0_i32 = arith.constant 0 : i32
    %c0_i32_0 = arith.constant 0 : i32
    %c0_i32_1 = arith.constant 0 : i32
    return %c0_i32, %c0_i32_0 : i32, i32
  }
  func.func @transform_5(%arg0: i32) -> (i32, i32, i32) {
    %c0_i32 = arith.constant 0 : i32
    %c0_i32_0 = arith.constant 0 : i32
    %c0_i32_1 = arith.constant 0 : i32
    %c0_i32_2 = arith.constant 0 : i32
    return %c0_i32, %c0_i32_0, %c0_i32_1 : i32, i32, i32
  }
  func.func @transform_6(%arg0: i32) -> (i32, i32, i32) {
    %c0_i32 = arith.constant 0 : i32
    %c0_i32_0 = arith.constant 0 : i32
    %c0_i32_1 = arith.constant 0 : i32
    %c0_i32_2 = arith.constant 0 : i32
    return %c0_i32, %c0_i32_0, %c0_i32_1 : i32, i32, i32
  }
  func.func @transform_7(%arg0: i32) -> (i32, i32) {
    %c0_i32 = arith.constant 0 : i32
    %c0_i32_0 = arith.constant 0 : i32
    %c0_i32_1 = arith.constant 0 : i32
    return %c0_i32, %c0_i32_0 : i32, i32
  }
  func.func @transform_8(%arg0: i32) -> (i32, i32) {
    %c0_i32 = arith.constant 0 : i32
    %c0_i32_0 = arith.constant 0 : i32
    %c0_i32_1 = arith.constant 0 : i32
    return %c0_i32, %c0_i32_0 : i32, i32
  }
  func.func @transform_9(%arg0: i32) -> (i32, i32) {
    %c0_i32 = arith.constant 0 : i32
    %c0_i32_0 = arith.constant 0 : i32
    %c0_i32_1 = arith.constant 0 : i32
    return %c0_i32, %c0_i32_0 : i32, i32
  }
  func.func @transform_10(%arg0: i32) -> (i32, i32, i32) {
    %c0_i32 = arith.constant 0 : i32
    %c0_i32_0 = arith.constant 0 : i32
    %c0_i32_1 = arith.constant 0 : i32
    %c0_i32_2 = arith.constant 0 : i32
    return %c0_i32, %c0_i32_0, %c0_i32_1 : i32, i32, i32
  }
  func.func @transform_11(%arg0: i32) -> (i32, i32, i32) {
    %c0_i32 = arith.constant 0 : i32
    %c0_i32_0 = arith.constant 0 : i32
    %c0_i32_1 = arith.constant 0 : i32
    %c0_i32_2 = arith.constant 0 : i32
    return %c0_i32, %c0_i32_0, %c0_i32_1 : i32, i32, i32
  }
  func.func @transform_12(%arg0: i32) -> (i32, i32, i32) {
    %c0_i32 = arith.constant 0 : i32
    %c0_i32_0 = arith.constant 0 : i32
    %c0_i32_1 = arith.constant 0 : i32
    %c0_i32_2 = arith.constant 0 : i32
    return %c0_i32, %c0_i32_0, %c0_i32_1 : i32, i32, i32
  }
  func.func @transform_13(%arg0: i32) -> (i32, i32, i32) {
    %c0_i32 = arith.constant 0 : i32
    %c0_i32_0 = arith.constant 0 : i32
    %c0_i32_1 = arith.constant 0 : i32
    return %arg0, %c0_i32, %c0_i32_0 : i32, i32, i32
  }
}

</mosaic_0001>

<llo_original>
// kernel: model_forward.1
$region0: #{model_forward.1}
  #allocation0 [shape = 'u32[]', space=smem, size = 0x4, offset = 0x4, fixed_abs, tag = 'smem constant byte address 0x4 - core index']
  #allocation1 [shape = 'u32[72,128]{1,0:T(1,128)}', space=vmem, size = 0x9000, scoped, tag = 'internal scratch']
  %s0 = inlined_call_operand.vmem [shape: f32[2,8,256], index: 0, kind: input, shape index: {}]
  %s1 = inlined_call_operand.vmem [shape: bf16[9,8,8], index: 1, kind: input, shape index: {}]
  %s2 = inlined_call_operand.vmem [shape: f32[8,1], index: 2, kind: input, shape index: {}]
  %s3 = inlined_call_operand.vmem [shape: bf16[9,16,8], index: 3, kind: input, shape index: {}]
  %s4 = inlined_call_operand.vmem [shape: f32[16,1], index: 4, kind: input, shape index: {}]
  %s5 = inlined_call_operand.vmem [shape: bf16[9,8,16], index: 5, kind: input, shape index: {}]
  %s6 = inlined_call_operand.vmem [shape: bf16[9,8,8], index: 6, kind: input, shape index: {}]
  %s7 = inlined_call_operand.vmem [shape: f32[8,1], index: 7, kind: input, shape index: {}]
  %s8 = inlined_call_operand.vmem [shape: bf16[3,8], index: 8, kind: input, shape index: {}]
  %s9 = inlined_call_operand.vmem [shape: f32[3,1], index: 9, kind: input, shape index: {}]
  %s10 = inlined_call_operand.vmem [shape: f32[9,1,256], index: 10, kind: input, shape index: {}]
  %s11 = inlined_call_operand.vmem [shape: f32[9,1,256], index: 11, kind: input, shape index: {}]
  %s12 = inlined_call_operand.vmem [shape: f32[4,1,256], index: 12, kind: input, shape index: {}]
  %s13 = inlined_call_operand.vmem [shape: f32[2,3,256], index: 13, kind: output, shape index: {}]
  %s14 = sld [smem:[#allocation0]]
  $region85: #{model_forward.1} parent=0
    _
  %s16 = ssub.s32 1, %s14
  %s17 = scalar_select 0, %s16, %s14
  loop: start=0, step=1, limit=4
  $region2: #{model_forward.1} parent=0 // loop_pre_header
    _
  $region3: #{model_forward.1} parent=0 // loop_header
    %s19 = sphi 0, %s23
    %p20 = scmp.ge.s32.totalorder %s19, 4
    %s29 = sphi 0, %s31
    %s32 = sphi 0, %s29
    %s33 = sphi 0, %s32
    %s49 = sphi 0, %s33
    %s53 = sphi 0, %s53
    %s55 = sphi 0, %s53
    %s56 = sphi 0, %s55
    %s70 = sphi 0, %s56
    %s74 = sphi 0, %s74
    %s76 = sphi 0, %s74
    %s77 = sphi 0, %s76
    %s91 = sphi 0, %s77
    %s95 = sphi 0, %s95
    %s97 = sphi 0, %s95
    %s98 = sphi 0, %s97
    %s112 = sphi 0, %s98
    %s116 = sphi 0, %s116
    %s118 = sphi 0, %s116
    %s119 = sphi 0, %s118
    %s133 = sphi 0, %s119
    %s137 = sphi 0, %s137
    %s139 = sphi 0, %s137
    %s140 = sphi 0, %s139
    %s154 = sphi 0, %s140
    %s158 = sphi 0, %s158
    %s160 = sphi 0, %s158
    %s161 = sphi 0, %s160
    %s175 = sphi 0, %s161
    %s179 = sphi 0, %s179
    %s181 = sphi 0, %s179
    %s182 = sphi 0, %s181
    %s196 = sphi 0, %s182
    %s200 = sphi 0, %s200
    %s202 = sphi 0, %s200
    %s203 = sphi 0, %s202
    %s217 = sphi 0, %s203
    %s221 = sphi 0, %s221
    %s223 = sphi 0, %s221
    %s224 = sphi 0, %s223
    %s238 = sphi 0, %s224
    %s242 = sphi 0, %s242
    %s244 = sphi 0, %s242
    %s245 = sphi 0, %s244
    %s259 = sphi 0, %s245
    %s263 = sphi 0, %s263
    %s265 = sphi 0, %s263
    %s266 = sphi 0, %s265
    %s280 = sphi 0, %s266
    %s284 = sphi 0, %s284
    %s286 = sphi 0, %s284
    %s287 = sphi 0, %s286
    %s301 = sphi 0, %s287
    %s307 = sphi 0, %s309
    %s310 = sphi 0, %s307
    %s311 = sphi 0, %s310
    %s327 = sphi 0, %s311
  $region4: #{model_forward.1} parent=0 // loop_header_branch
    %22 = sbr.rel (%p20) target = $region8
  $region5: #{model_forward.1} parent=0 // loop_body
    %s24 = ssub.s32 %s19, 1
    %s25 = ssub.s32 %s19, 2
    %s26 = sadd.s32 %s19, 1
    %s27 = ssub.s32 %s19, %s26
    %p28 = scmp.eq.s32.totalorder %s27, 0
    %s30 = sadd.s32 %s29, 1
    %s31 = scalar_select %p28, %s29, %s30
    %p34 = pneg %p28
    %p35 = scmp.eq.s32.totalorder %s19, 1
    %p36 = por %p34, %p35
    %p37 = scmp.ne.s32.totalorder %s29, %s32
    %p38 = scmp.eq.s32.totalorder %s19, 0
    %p39 = por %p37, %p38
    %p40 = scmp.ne.s32.totalorder %s29, %s32
    %p41 = scmp.eq.s32.totalorder %s24, 1
    %p42 = por %p40, %p41
    %p43 = scmp.ne.s32.totalorder %s32, %s33
    %p44 = scmp.eq.s32.totalorder %s24, 0
    %p45 = por %p43, %p44
    %p46 = scmp.ne.s32.totalorder %s32, %s33
    %p47 = scmp.eq.s32.totalorder %s25, 1
    %p48 = por %p46, %p47
    %p50 = scmp.ne.s32.totalorder %s33, %s49
    %p51 = scmp.eq.s32.totalorder %s25, 0
    %p52 = por %p50, %p51
    %s54 = sadd.s32 %s53, 1
    %p57 = scmp.eq.s32.totalorder %s19, 1
    %p58 = scmp.ne.s32.totalorder %s53, %s55
    %p59 = scmp.eq.s32.totalorder %s19, 0
    %p60 = por %p58, %p59
    %p61 = scmp.ne.s32.totalorder %s53, %s55
    %p62 = scmp.eq.s32.totalorder %s24, 1
    %p63 = por %p61, %p62
    %p64 = scmp.ne.s32.totalorder %s55, %s56
    %p65 = scmp.eq.s32.totalorder %s24, 0
    %p66 = por %p64, %p65
    %p67 = scmp.ne.s32.totalorder %s55, %s56
    %p68 = scmp.eq.s32.totalorder %s25, 1
    %p69 = por %p67, %p68
    %p71 = scmp.ne.s32.totalorder %s56, %s70
    %p72 = scmp.eq.s32.totalorder %s25, 0
    %p73 = por %p71, %p72
    %s75 = sadd.s32 %s74, 1
    %p78 = scmp.eq.s32.totalorder %s19, 1
    %p79 = scmp.ne.s32.totalorder %s74, %s76
    %p80 = scmp.eq.s32.totalorder %s19, 0
    %p81 = por %p79, %p80
    %p82 = scmp.ne.s32.totalorder %s74, %s76
    %p83 = scmp.eq.s32.totalorder %s24, 1
    %p84 = por %p82, %p83
    %p85 = scmp.ne.s32.totalorder %s76, %s77
    %p86 = scmp.eq.s32.totalorder %s24, 0
    %p87 = por %p85, %p86
    %p88 = scmp.ne.s32.totalorder %s76, %s77
    %p89 = scmp.eq.s32.totalorder %s25, 1
    %p90 = por %p88, %p89
    %p92 = scmp.ne.s32.totalorder %s77, %s91
    %p93 = scmp.eq.s32.totalorder %s25, 0
    %p94 = por %p92, %p93
    %s96 = sadd.s32 %s95, 1
    %p99 = scmp.eq.s32.totalorder %s19, 1
    %p100 = scmp.ne.s32.totalorder %s95, %s97
    %p101 = scmp.eq.s32.totalorder %s19, 0
    %p102 = por %p100, %p101
    %p103 = scmp.ne.s32.totalorder %s95, %s97
    %p104 = scmp.eq.s32.totalorder %s24, 1
    %p105 = por %p103, %p104
    %p106 = scmp.ne.s32.totalorder %s97, %s98
    %p107 = scmp.eq.s32.totalorder %s24, 0
    %p108 = por %p106, %p107
    %p109 = scmp.ne.s32.totalorder %s97, %s98
    %p110 = scmp.eq.s32.totalorder %s25, 1
    %p111 = por %p109, %p110
    %p113 = scmp.ne.s32.totalorder %s98, %s112
    %p114 = scmp.eq.s32.totalorder %s25, 0
    %p115 = por %p113, %p114
    %s117 = sadd.s32 %s116, 1
    %p120 = scmp.eq.s32.totalorder %s19, 1
    %p121 = scmp.ne.s32.totalorder %s116, %s118
    %p122 = scmp.eq.s32.totalorder %s19, 0
    %p123 = por %p121, %p122
    %p124 = scmp.ne.s32.totalorder %s116, %s118
    %p125 = scmp.eq.s32.totalorder %s24, 1
    %p126 = por %p124, %p125
    %p127 = scmp.ne.s32.totalorder %s118, %s119
    %p128 = scmp.eq.s32.totalorder %s24, 0
    %p129 = por %p127, %p128
    %p130 = scmp.ne.s32.totalorder %s118, %s119
    %p131 = scmp.eq.s32.totalorder %s25, 1
    %p132 = por %p130, %p131
    %p134 = scmp.ne.s32.totalorder %s119, %s133
    %p135 = scmp.eq.s32.totalorder %s25, 0
    %p136 = por %p134, %p135
    %s138 = sadd.s32 %s137, 1
    %p141 = scmp.eq.s32.totalorder %s19, 1
    %p142 = scmp.ne.s32.totalorder %s137, %s139
    %p143 = scmp.eq.s32.totalorder %s19, 0
    %p144 = por %p142, %p143
    %p145 = scmp.ne.s32.totalorder %s137, %s139
    %p146 = scmp.eq.s32.totalorder %s24, 1
    %p147 = por %p145, %p146
    %p148 = scmp.ne.s32.totalorder %s139, %s140
    %p149 = scmp.eq.s32.totalorder %s24, 0
    %p150 = por %p148, %p149
    %p151 = scmp.ne.s32.totalorder %s139, %s140
    %p152 = scmp.eq.s32.totalorder %s25, 1
    %p153 = por %p151, %p152
    %p155 = scmp.ne.s32.totalorder %s140, %s154
    %p156 = scmp.eq.s32.totalorder %s25, 0
    %p157 = por %p155, %p156
    %s159 = sadd.s32 %s158, 1
    %p162 = scmp.eq.s32.totalorder %s19, 1
    %p163 = scmp.ne.s32.totalorder %s158, %s160
    %p164 = scmp.eq.s32.totalorder %s19, 0
    %p165 = por %p163, %p164
    %p166 = scmp.ne.s32.totalorder %s158, %s160
    %p167 = scmp.eq.s32.totalorder %s24, 1
    %p168 = por %p166, %p167
    %p169 = scmp.ne.s32.totalorder %s160, %s161
    %p170 = scmp.eq.s32.totalorder %s24, 0
    %p171 = por %p169, %p170
    %p172 = scmp.ne.s32.totalorder %s160, %s161
    %p173 = scmp.eq.s32.totalorder %s25, 1
    %p174 = por %p172, %p173
    %p176 = scmp.ne.s32.totalorder %s161, %s175
    %p177 = scmp.eq.s32.totalorder %s25, 0
    %p178 = por %p176, %p177
    %s180 = sadd.s32 %s179, 1
    %p183 = scmp.eq.s32.totalorder %s19, 1
    %p184 = scmp.ne.s32.totalorder %s179, %s181
    %p185 = scmp.eq.s32.totalorder %s19, 0
    %p186 = por %p184, %p185
    %p187 = scmp.ne.s32.totalorder %s179, %s181
    %p188 = scmp.eq.s32.totalorder %s24, 1
    %p189 = por %p187, %p188
    %p190 = scmp.ne.s32.totalorder %s181, %s182
    %p191 = scmp.eq.s32.totalorder %s24, 0
    %p192 = por %p190, %p191
    %p193 = scmp.ne.s32.totalorder %s181, %s182
    %p194 = scmp.eq.s32.totalorder %s25, 1
    %p195 = por %p193, %p194
    %p197 = scmp.ne.s32.totalorder %s182, %s196
    %p198 = scmp.eq.s32.totalorder %s25, 0
    %p199 = por %p197, %p198
    %s201 = sadd.s32 %s200, 1
    %p204 = scmp.eq.s32.totalorder %s19, 1
    %p205 = scmp.ne.s32.totalorder %s200, %s202
    %p206 = scmp.eq.s32.totalorder %s19, 0
    %p207 = por %p205, %p206
    %p208 = scmp.ne.s32.totalorder %s200, %s202
    %p209 = scmp.eq.s32.totalorder %s24, 1
    %p210 = por %p208, %p209
    %p211 = scmp.ne.s32.totalorder %s202, %s203
    %p212 = scmp.eq.s32.totalorder %s24, 0
    %p213 = por %p211, %p212
    %p214 = scmp.ne.s32.totalorder %s202, %s203
    %p215 = scmp.eq.s32.totalorder %s25, 1
    %p216 = por %p214, %p215
    %p218 = scmp.ne.s32.totalorder %s203, %s217
    %p219 = scmp.eq.s32.totalorder %s25, 0
    %p220 = por %p218, %p219
    %s222 = sadd.s32 %s221, 1
    %p225 = scmp.eq.s32.totalorder %s19, 1
    %p226 = scmp.ne.s32.totalorder %s221, %s223
    %p227 = scmp.eq.s32.totalorder %s19, 0
    %p228 = por %p226, %p227
    %p229 = scmp.ne.s32.totalorder %s221, %s223
    %p230 = scmp.eq.s32.totalorder %s24, 1
    %p231 = por %p229, %p230
    %p232 = scmp.ne.s32.totalorder %s223, %s224
    %p233 = scmp.eq.s32.totalorder %s24, 0
    %p234 = por %p232, %p233
    %p235 = scmp.ne.s32.totalorder %s223, %s224
    %p236 = scmp.eq.s32.totalorder %s25, 1
    %p237 = por %p235, %p236
    %p239 = scmp.ne.s32.totalorder %s224, %s238
    %p240 = scmp.eq.s32.totalorder %s25, 0
    %p241 = por %p239, %p240
    %s243 = sadd.s32 %s242, 1
    %p246 = scmp.eq.s32.totalorder %s19, 1
    %p247 = scmp.ne.s32.totalorder %s242, %s244
    %p248 = scmp.eq.s32.totalorder %s19, 0
    %p249 = por %p247, %p248
    %p250 = scmp.ne.s32.totalorder %s242, %s244
    %p251 = scmp.eq.s32.totalorder %s24, 1
    %p252 = por %p250, %p251
    %p253 = scmp.ne.s32.totalorder %s244, %s245
    %p254 = scmp.eq.s32.totalorder %s24, 0
    %p255 = por %p253, %p254
    %p256 = scmp.ne.s32.totalorder %s244, %s245
    %p257 = scmp.eq.s32.totalorder %s25, 1
    %p258 = por %p256, %p257
    %p260 = scmp.ne.s32.totalorder %s245, %s259
    %p261 = scmp.eq.s32.totalorder %s25, 0
    %p262 = por %p260, %p261
    %s264 = sadd.s32 %s263, 1
    %p267 = scmp.eq.s32.totalorder %s19, 1
    %p268 = scmp.ne.s32.totalorder %s263, %s265
    %p269 = scmp.eq.s32.totalorder %s19, 0
    %p270 = por %p268, %p269
    %p271 = scmp.ne.s32.totalorder %s263, %s265
    %p272 = scmp.eq.s32.totalorder %s24, 1
    %p273 = por %p271, %p272
    %p274 = scmp.ne.s32.totalorder %s265, %s266
    %p275 = scmp.eq.s32.totalorder %s24, 0
    %p276 = por %p274, %p275
    %p277 = scmp.ne.s32.totalorder %s265, %s266
    %p278 = scmp.eq.s32.totalorder %s25, 1
    %p279 = por %p277, %p278
    %p281 = scmp.ne.s32.totalorder %s266, %s280
    %p282 = scmp.eq.s32.totalorder %s25, 0
    %p283 = por %p281, %p282
    %s285 = sadd.s32 %s284, 1
    %p288 = scmp.eq.s32.totalorder %s19, 1
    %p289 = scmp.ne.s32.totalorder %s284, %s286
    %p290 = scmp.eq.s32.totalorder %s19, 0
    %p291 = por %p289, %p290
    %p292 = scmp.ne.s32.totalorder %s284, %s286
    %p293 = scmp.eq.s32.totalorder %s24, 1
    %p294 = por %p292, %p293
    %p295 = scmp.ne.s32.totalorder %s286, %s287
    %p296 = scmp.eq.s32.totalorder %s24, 0
    %p297 = por %p295, %p296
    %p298 = scmp.ne.s32.totalorder %s286, %s287
    %p299 = scmp.eq.s32.totalorder %s25, 1
    %p300 = por %p298, %p299
    %p302 = scmp.ne.s32.totalorder %s287, %s301
    %p303 = scmp.eq.s32.totalorder %s25, 0
    %p304 = por %p302, %p303
    %s305 = ssub.s32 %s19, %s26
    %p306 = scmp.eq.s32.totalorder %s305, 0
    %s308 = sadd.s32 %s307, 1
    %s309 = scalar_select %p306, %s307, %s308
    %p312 = pneg %p306
    %p313 = scmp.eq.s32.totalorder %s19, 1
    %p314 = por %p312, %p313
    %p315 = scmp.ne.s32.totalorder %s307, %s310
    %p316 = scmp.eq.s32.totalorder %s19, 0
    %p317 = por %p315, %p316
    %p318 = scmp.ne.s32.totalorder %s307, %s310
    %p319 = scmp.eq.s32.totalorder %s24, 1
    %p320 = por %p318, %p319
    %p321 = scmp.ne.s32.totalorder %s310, %s311
    %p322 = scmp.eq.s32.totalorder %s24, 0
    %p323 = por %p321, %p322
    %p324 = scmp.ne.s32.totalorder %s310, %s311
    %p325 = scmp.eq.s32.totalorder %s25, 1
    %p326 = por %p324, %p325
    %p328 = scmp.ne.s32.totalorder %s311, %s327
    %p329 = scmp.eq.s32.totalorder %s25, 0
    %p330 = por %p328, %p329
    %p331 = scmp.le.s32.totalorder 1, %s19
    %p332 = scmp.lt.s32.totalorder %s19, 3
    %p333 = pnand %p331, %p332
    %p334 = pneg %p333
    // Predicated region
    $region9: #{model_forward.1} parent=5 // pred_check
      _
    $region10: #{model_forward.1} parent=5 // pred_check_branch
      %336 = sbr.rel (%p333) target = $region12
    $region11: #{model_forward.1} parent=5 // pred_region
      %s337 = ssub.s32 %s19, 1
      // Predicated region
      $region13: #{model_forward.1} parent=11 // pred_check
        %p338 = pneg %p66
      $region14: #{model_forward.1} parent=11 // pred_check_branch
        %340 = sbr.rel (%p338) target = $region16
      $region15: #{model_forward.1} parent=11 // pred_region
        _
      $region16: #{model_forward.1} parent=11 // pred_fallthru
        _
      // Predicated region
      $region17: #{model_forward.1} parent=11 // pred_check
        %p341 = pneg %p87
      $region18: #{model_forward.1} parent=11 // pred_check_branch
        %343 = sbr.rel (%p341) target = $region20
      $region19: #{model_forward.1} parent=11 // pred_region
        _
      $region20: #{model_forward.1} parent=11 // pred_fallthru
        _
      // Predicated region
      $region21: #{model_forward.1} parent=11 // pred_check
        %p344 = pneg %p108
      $region22: #{model_forward.1} parent=11 // pred_check_branch
        %346 = sbr.rel (%p344) target = $region24
      $region23: #{model_forward.1} parent=11 // pred_region
        _
      $region24: #{model_forward.1} parent=11 // pred_fallthru
        _
      // Predicated region
      $region25: #{model_forward.1} parent=11 // pred_check
        %p347 = pneg %p129
      $region26: #{model_forward.1} parent=11 // pred_check_branch
        %349 = sbr.rel (%p347) target = $region28
      $region27: #{model_forward.1} parent=11 // pred_region
        _
      $region28: #{model_forward.1} parent=11 // pred_fallthru
        _
      // Predicated region
      $region29: #{model_forward.1} parent=11 // pred_check
        %p350 = pneg %p150
      $region30: #{model_forward.1} parent=11 // pred_check_branch
        %352 = sbr.rel (%p350) target = $region32
      $region31: #{model_forward.1} parent=11 // pred_region
        _
      $region32: #{model_forward.1} parent=11 // pred_fallthru
        _
      // Predicated region
      $region33: #{model_forward.1} parent=11 // pred_check
        %p353 = pneg %p171
      $region34: #{model_forward.1} parent=11 // pred_check_branch
        %355 = sbr.rel (%p353) target = $region36
      $region35: #{model_forward.1} parent=11 // pred_region
        _
      $region36: #{model_forward.1} parent=11 // pred_fallthru
        _
      // Predicated region
      $region37: #{model_forward.1} parent=11 // pred_check
        %p356 = pneg %p192
      $region38: #{model_forward.1} parent=11 // pred_check_branch
        %358 = sbr.rel (%p356) target = $region40
      $region39: #{model_forward.1} parent=11 // pred_region
        _
      $region40: #{model_forward.1} parent=11 // pred_fallthru
        _
      // Predicated region
      $region41: #{model_forward.1} parent=11 // pred_check
        %p359 = pneg %p213
      $region42: #{model_forward.1} parent=11 // pred_check_branch
        %361 = sbr.rel (%p359) target = $region44
      $region43: #{model_forward.1} parent=11 // pred_region
        _
      $region44: #{model_forward.1} parent=11 // pred_fallthru
        _
      // Predicated region
      $region45: #{model_forward.1} parent=11 // pred_check
        %p362 = pneg %p234
      $region46: #{model_forward.1} parent=11 // pred_check_branch
        %364 = sbr.rel (%p362) target = $region48
      $region47: #{model_forward.1} parent=11 // pred_region
        _
      $region48: #{model_forward.1} parent=11 // pred_fallthru
        _
      // Predicated region
      $region49: #{model_forward.1} parent=11 // pred_check
        %p365 = pneg %p255
      $region50: #{model_forward.1} parent=11 // pred_check_branch
        %367 = sbr.rel (%p365) target = $region52
      $region51: #{model_forward.1} parent=11 // pred_region
        _
      $region52: #{model_forward.1} parent=11 // pred_fallthru
        _
      // Predicated region
      $region53: #{model_forward.1} parent=11 // pred_check
        %p368 = pneg %p276
      $region54: #{model_forward.1} parent=11 // pred_check_branch
        %370 = sbr.rel (%p368) target = $region56
      $region55: #{model_forward.1} parent=11 // pred_region
        _
      $region56: #{model_forward.1} parent=11 // pred_fallthru
        _
      // Predicated region
      $region57: #{model_forward.1} parent=11 // pred_check
        %p371 = pneg %p297
      $region58: #{model_forward.1} parent=11 // pred_check_branch
        %373 = sbr.rel (%p371) target = $region60
      $region59: #{model_forward.1} parent=11 // pred_region
        _
      $region60: #{model_forward.1} parent=11 // pred_fallthru
        _
    $region12: #{model_forward.1} parent=5 // pred_fallthru
      _
    %p374 = scmp.lt.s32.totalorder %s19, 2
    // Predicated region
    $region61: #{model_forward.1} parent=5 // pred_check
      %p375 = pneg %p374
    $region62: #{model_forward.1} parent=5 // pred_check_branch
      %377 = sbr.rel (%p375) target = $region64
    $region63: #{model_forward.1} parent=5 // pred_region
      // Predicated region
      $region65: #{model_forward.1} parent=63 // pred_check
        %p378 = pneg %p39
      $region66: #{model_forward.1} parent=63 // pred_check_branch
        %380 = sbr.rel (%p378) target = $region68
      $region67: #{model_forward.1} parent=63 // pred_region
        %p381 = scmp.lt.s32.totalorder %s19, 1
        %s382 = scalar_select %p381, %s19, 1
        %s383 = smul.addr %s382, 2
        %s384 = smul.addr %s383, 8
        %s385 = scalar_lea.vmem %s0, %s384
      $region68: #{model_forward.1} parent=63 // pred_fallthru
        _
    $region64: #{model_forward.1} parent=5 // pred_fallthru
      _
    %p386 = scmp.le.s32.totalorder 1, %s19
    %p387 = scmp.lt.s32.totalorder %s19, 3
    %p388 = pnand %p386, %p387
    %p389 = pneg %p388
    // Predicated region
    $region69: #{model_forward.1} parent=5 // pred_check
      _
    $region70: #{model_forward.1} parent=5 // pred_check_branch
      %391 = sbr.rel (%p388) target = $region72
    $region71: #{model_forward.1} parent=5 // pred_region
      %s392 = ssub.s32 %s19, 1
      %p393 = scmp.lt.s32.totalorder %s24, 1
      %s394 = scalar_select %p393, %s24, 1
      %s395 = smul.addr %s394, 2
      %s396 = smul.addr %s395, 8
      %s397 = scalar_lea.vmem %s0, %s396
      %p398 = pneg %p45
      %p399 = pneg %p42
      %p400 = pneg %p66
      %p401 = pneg %p63
      %p402 = pneg %p87
      %p403 = pneg %p84
      %p404 = pneg %p108
      %p405 = pneg %p105
      %p406 = pneg %p129
      %p407 = pneg %p126
      %p408 = pneg %p150
      %p409 = pneg %p147
      %p410 = pneg %p171
      %p411 = pneg %p168
      %p412 = pneg %p192
      %p413 = pneg %p189
      %p414 = pneg %p213
      %p415 = pneg %p210
      %p416 = pneg %p234
      %p417 = pneg %p231
      %p418 = pneg %p255
      %p419 = pneg %p252
      %p420 = pneg %p276
      %p421 = pneg %p273
      %p422 = pneg %p297
      %p423 = pneg %p294
      %p424 = pneg %p323
      %p425 = pneg %p320
      %p426 = scmp.lt.s32.totalorder %s24, 1
      %s427 = scalar_select %p426, %s24, 1
      %s428 = smul.addr %s427, 2
      %s429 = smul.addr %s428, 4
      %s430 = scalar_lea.vmem %s13, %s429
      %p431 = scmp.lt.s32.totalorder %s24, 1
      %s432 = scalar_select %p431, %s24, 1
      %s433 = smul.addr %s432, 2
      %s434 = smul.addr %s433, 8
      %s435 = scalar_lea.vmem %s0, %s434
      %p436 = scmp.lt.s32.totalorder %s24, 1
      %s437 = scalar_select %p436, %s24, 1
      %s438 = smul.addr %s437, 2
      %s439 = smul.addr %s438, 4
      %s440 = scalar_lea.vmem %s13, %s439
      %v442 = vld [vmem:[%s435] sm:$0xff]
      %v443 = vld [vmem:[%s435 + $0x8] sm:$0xff]
      %445 = vrot.lane.b32.xlu0 %v443, 17
      %v446 = vpop.permute.xlu0 %445
      %449 = vrot.lane.b32.xlu0 %v442, 17
      %v450 = vpop.permute.xlu0 %449
      %vm451 = vcmask 138240
      %v452 = vsel %vm451, %v450, %v446
      %v455 = vsel %vm451, %v446, %v450
      %v456 = vld [vmem:[%s10] sm:$0x3]
      %v458 = vperm.slane %v456, 0
      %v459 = vperm.slane %v456, 1
      %v462 = vmul.f32 %v455, %v458
      %v463 = vmul.f32 %v452, %v459
      %v464 = vpack.c.bf16 %v462, %v462
      %v465 = vpack.c.bf16 %v463, %v463
      %v466 = vld [vmem:[%s1] sm:$0xf]
      %467 = vrot.lane.b32.xlu0 %v443, 16
      %v468 = vpop.permute.xlu0 %467
      %470 = vrot.lane.b32.xlu0 %v442, 16
      %v471 = vpop.permute.xlu0 %470
      %vm472 = vcmask 130048
      %v473 = vsel %vm472, %v471, %v468
      %v476 = vsel %vm472, %v468, %v471
      %s477 = scalar_lea.vmem %s10, 2
      %v478 = vld [vmem:[%s477] sm:$0x3]
      %v480 = vperm.slane %v478, 0
      %v481 = vperm.slane %v478, 1
      %v484 = vmul.f32 %v476, %v480
      %v485 = vmul.f32 %v473, %v481
      %v486 = vpack.c.bf16 %v484, %v484
      %v487 = vpack.c.bf16 %v485, %v485
      %s488 = scalar_lea.vmem %s1, 4
      %v489 = vld [vmem:[%s488] sm:$0xf]
      %vm490 = vcmask 64512
      %v492 = vsel %vm490, %v489, 0
      %vm494 = vcmask 1043456
      %v496 = vsel %vm494, %v486, 0
      %v499 = vsel %vm494, %v487, 0
      %501 = vmatpush.bf16.msra.mxu0 0
      %502 = vmatpush.bf16.msra.mxu0 0
      %503 = vmatpush.bf16.msra.mxu0 0
      %504 = vmatpush.bf16.msra.mxu0 0
      %505 = vmatpush.bf16.msra.mxu0 0
      %506 = vmatpush.bf16.msra.mxu0 0
      %507 = vmatpush.bf16.msra.mxu0 0
      %508 = vmatpush.bf16.msra.mxu0 %v496
      %509 = vmatmul.bf16.gmra.mxu0 %v492
      %v510 = vpop.f32.mrf.mxu0
      %v511 = vadd.f32 0.0, %v510
      %v512 = vpop.f32.mrf.mxu0
      %513 = vdwg.mxu0
      %514 = vmatpush.bf16.msra.mxu0 0
      %515 = vmatpush.bf16.msra.mxu0 0
      %516 = vmatpush.bf16.msra.mxu0 0
      %517 = vmatpush.bf16.msra.mxu0 0
      %518 = vmatpush.bf16.msra.mxu0 0
      %519 = vmatpush.bf16.msra.mxu0 0
      %520 = vmatpush.bf16.msra.mxu0 0
      %521 = vmatpush.bf16.msra.mxu0 %v499
      %522 = vmatmul.bf16.gmra.mxu0 %v492
      %v523 = vpop.f32.mrf.mxu0
      %v524 = vadd.f32 0.0, %v523
      %v525 = vpop.f32.mrf.mxu0
      %526 = vdwg.mxu0
      %v528 = vsel %vm490, %v466, 0
      %v531 = vsel %vm494, %v464, 0
      %v534 = vsel %vm494, %v465, 0
      %536 = vmatpush.bf16.msra.mxu0 0
      %537 = vmatpush.bf16.msra.mxu0 0
      %538 = vmatpush.bf16.msra.mxu0 0
      %539 = vmatpush.bf16.msra.mxu0 0
      %540 = vmatpush.bf16.msra.mxu0 0
      %541 = vmatpush.bf16.msra.mxu0 0
      %542 = vmatpush.bf16.msra.mxu0 0
      %543 = vmatpush.bf16.msra.mxu0 %v531
      %544 = vmatmul.bf16.gmra.mxu0 %v528
      %v545 = vpop.f32.mrf.mxu0
      %v546 = vadd.f32 %v511, %v545
      %v547 = vpop.f32.mrf.mxu0
      %548 = vdwg.mxu0
      %549 = vmatpush.bf16.msra.mxu0 0
      %550 = vmatpush.bf16.msra.mxu0 0
      %551 = vmatpush.bf16.msra.mxu0 0
      %552 = vmatpush.bf16.msra.mxu0 0
      %553 = vmatpush.bf16.msra.mxu0 0
      %554 = vmatpush.bf16.msra.mxu0 0
      %555 = vmatpush.bf16.msra.mxu0 0
      %556 = vmatpush.bf16.msra.mxu0 %v534
      %557 = vmatmul.bf16.gmra.mxu0 %v528
      %v558 = vpop.f32.mrf.mxu0
      %v559 = vadd.f32 %v524, %v558
      %v560 = vpop.f32.mrf.mxu0
      %561 = vdwg.mxu0
      %562 = vrot.lane.b32.xlu0 %v443, 15
      %v563 = vpop.permute.xlu0 %562
      %565 = vrot.lane.b32.xlu0 %v442, 15
      %v566 = vpop.permute.xlu0 %565
      %vm567 = vcmask 121856
      %v568 = vsel %vm567, %v566, %v563
      %v571 = vsel %vm567, %v563, %v566
      %s572 = scalar_lea.vmem %s10, 4
      %v573 = vld [vmem:[%s572] sm:$0x3]
      %v575 = vperm.slane %v573, 0
      %v576 = vperm.slane %v573, 1
      %v579 = vmul.f32 %v571, %v575
      %v580 = vmul.f32 %v568, %v576
      %v581 = vpack.c.bf16 %v579, %v579
      %v582 = vpack.c.bf16 %v580, %v580
      %s583 = scalar_lea.vmem %s1, 8
      %v584 = vld [vmem:[%s583] sm:$0xf]
      %v586 = vsel %vm490, %v584, 0
      %v589 = vsel %vm494, %v581, 0
      %v592 = vsel %vm494, %v582, 0
      %594 = vmatpush.bf16.msra.mxu0 0
      %595 = vmatpush.bf16.msra.mxu0 0
      %596 = vmatpush.bf16.msra.mxu0 0
      %597 = vmatpush.bf16.msra.mxu0 0
      %598 = vmatpush.bf16.msra.mxu0 0
      %599 = vmatpush.bf16.msra.mxu0 0
      %600 = vmatpush.bf16.msra.mxu0 0
      %601 = vmatpush.bf16.msra.mxu0 %v589
      %602 = vmatmul.bf16.gmra.mxu0 %v586
      %v603 = vpop.f32.mrf.mxu0
      %v604 = vadd.f32 0.0, %v603
      %v605 = vpop.f32.mrf.mxu0
      %606 = vdwg.mxu0
      %607 = vmatpush.bf16.msra.mxu0 0
      %608 = vmatpush.bf16.msra.mxu0 0
      %609 = vmatpush.bf16.msra.mxu0 0
      %610 = vmatpush.bf16.msra.mxu0 0
      %611 = vmatpush.bf16.msra.mxu0 0
      %612 = vmatpush.bf16.msra.mxu0 0
      %613 = vmatpush.bf16.msra.mxu0 0
      %614 = vmatpush.bf16.msra.mxu0 %v592
      %615 = vmatmul.bf16.gmra.mxu0 %v586
      %v616 = vpop.f32.mrf.mxu0
      %v617 = vadd.f32 0.0, %v616
      %v618 = vpop.f32.mrf.mxu0
      %619 = vdwg.mxu0
      %v620 = vadd.f32 %v546, %v604
      %v621 = vadd.f32 %v559, %v617
      %622 = vrot.lane.b32.xlu0 %v443, 1
      %v623 = vpop.permute.xlu0 %622
      %625 = vrot.lane.b32.xlu0 %v442, 1
      %v626 = vpop.permute.xlu0 %625
      %vm627 = vcmask 7168
      %v628 = vsel %vm627, %v626, %v623
      %v631 = vsel %vm627, %v623, %v626
      %s632 = scalar_lea.vmem %s10, 6
      %v633 = vld [vmem:[%s632] sm:$0x3]
      %v635 = vperm.slane %v633, 0
      %v636 = vperm.slane %v633, 1
      %v639 = vmul.f32 %v631, %v635
      %v640 = vmul.f32 %v628, %v636
      %v641 = vpack.c.bf16 %v639, %v639
      %v642 = vpack.c.bf16 %v640, %v640
      %s643 = scalar_lea.vmem %s1, 12
      %v644 = vld [vmem:[%s643] sm:$0xf]
      %v646 = vsel %vm490, %v644, 0
      %v649 = vsel %vm494, %v641, 0
      %v652 = vsel %vm494, %v642, 0
      %654 = vmatpush.bf16.msra.mxu0 0
      %655 = vmatpush.bf16.msra.mxu0 0
      %656 = vmatpush.bf16.msra.mxu0 0
      %657 = vmatpush.bf16.msra.mxu0 0
      %658 = vmatpush.bf16.msra.mxu0 0
      %659 = vmatpush.bf16.msra.mxu0 0
      %660 = vmatpush.bf16.msra.mxu0 0
      %661 = vmatpush.bf16.msra.mxu0 %v649
      %662 = vmatmul.bf16.gmra.mxu0 %v646
      %v663 = vpop.f32.mrf.mxu0
      %v664 = vadd.f32 0.0, %v663
      %v665 = vpop.f32.mrf.mxu0
      %666 = vdwg.mxu0
      %667 = vmatpush.bf16.msra.mxu0 0
      %668 = vmatpush.bf16.msra.mxu0 0
      %669 = vmatpush.bf16.msra.mxu0 0
      %670 = vmatpush.bf16.msra.mxu0 0
      %671 = vmatpush.bf16.msra.mxu0 0
      %672 = vmatpush.bf16.msra.mxu0 0
      %673 = vmatpush.bf16.msra.mxu0 0
      %674 = vmatpush.bf16.msra.mxu0 %v652
      %675 = vmatmul.bf16.gmra.mxu0 %v646
      %v676 = vpop.f32.mrf.mxu0
      %v677 = vadd.f32 0.0, %v676
      %v678 = vpop.f32.mrf.mxu0
      %679 = vdwg.mxu0
      %v680 = vadd.f32 %v620, %v664
      %v681 = vadd.f32 %v621, %v677
      %s682 = scalar_lea.vmem %s10, 8
      %v683 = vld [vmem:[%s682] sm:$0x3]
      %v685 = vperm.slane %v683, 0
      %v686 = vperm.slane %v683, 1
      %v689 = vmul.f32 %v442, %v685
      %v690 = vmul.f32 %v443, %v686
      %v691 = vpack.c.bf16 %v689, %v689
      %v692 = vpack.c.bf16 %v690, %v690
      %s693 = scalar_lea.vmem %s1, 16
      %v694 = vld [vmem:[%s693] sm:$0xf]
      %v696 = vsel %vm490, %v694, 0
      %v699 = vsel %vm494, %v691, 0
      %v702 = vsel %vm494, %v692, 0
      %704 = vmatpush.bf16.msra.mxu0 0
      %705 = vmatpush.bf16.msra.mxu0 0
      %706 = vmatpush.bf16.msra.mxu0 0
      %707 = vmatpush.bf16.msra.mxu0 0
      %708 = vmatpush.bf16.msra.mxu0 0
      %709 = vmatpush.bf16.msra.mxu0 0
      %710 = vmatpush.bf16.msra.mxu0 0
      %711 = vmatpush.bf16.msra.mxu0 %v699
      %712 = vmatmul.bf16.gmra.mxu0 %v696
      %v713 = vpop.f32.mrf.mxu0
      %v714 = vadd.f32 0.0, %v713
      %v715 = vpop.f32.mrf.mxu0
      %716 = vdwg.mxu0
      %717 = vmatpush.bf16.msra.mxu0 0
      %718 = vmatpush.bf16.msra.mxu0 0
      %719 = vmatpush.bf16.msra.mxu0 0
      %720 = vmatpush.bf16.msra.mxu0 0
      %721 = vmatpush.bf16.msra.mxu0 0
      %722 = vmatpush.bf16.msra.mxu0 0
      %723 = vmatpush.bf16.msra.mxu0 0
      %724 = vmatpush.bf16.msra.mxu0 %v702
      %725 = vmatmul.bf16.gmra.mxu0 %v696
      %v726 = vpop.f32.mrf.mxu0
      %v727 = vadd.f32 0.0, %v726
      %v728 = vpop.f32.mrf.mxu0
      %729 = vdwg.mxu0
      %v730 = vadd.f32 %v680, %v714
      %v731 = vadd.f32 %v681, %v727
      %732 = vrot.lane.b32.xlu0 %v442, 127
      %v733 = vpop.permute.xlu0 %732
      %734 = vrot.lane.b32.xlu0 %v443, 127
      %v735 = vpop.permute.xlu0 %734
      %vm736 = vcmask 1039360
      %v737 = vsel %vm736, %v733, %v735
      %v741 = vsel %vm736, %v735, %v733
      %s742 = scalar_lea.vmem %s10, 10
      %v743 = vld [vmem:[%s742] sm:$0x3]
      %v745 = vperm.slane %v743, 0
      %v746 = vperm.slane %v743, 1
      %v749 = vmul.f32 %v737, %v745
      %v750 = vmul.f32 %v741, %v746
      %v751 = vpack.c.bf16 %v749, %v749
      %v752 = vpack.c.bf16 %v750, %v750
      %s753 = scalar_lea.vmem %s1, 20
      %v754 = vld [vmem:[%s753] sm:$0xf]
      %v756 = vsel %vm490, %v754, 0
      %v759 = vsel %vm494, %v751, 0
      %v762 = vsel %vm494, %v752, 0
      %764 = vmatpush.bf16.msra.mxu0 0
      %765 = vmatpush.bf16.msra.mxu0 0
      %766 = vmatpush.bf16.msra.mxu0 0
      %767 = vmatpush.bf16.msra.mxu0 0
      %768 = vmatpush.bf16.msra.mxu0 0
      %769 = vmatpush.bf16.msra.mxu0 0
      %770 = vmatpush.bf16.msra.mxu0 0
      %771 = vmatpush.bf16.msra.mxu0 %v759
      %772 = vmatmul.bf16.gmra.mxu0 %v756
      %v773 = vpop.f32.mrf.mxu0
      %v774 = vadd.f32 0.0, %v773
      %v775 = vpop.f32.mrf.mxu0
      %776 = vdwg.mxu0
      %777 = vmatpush.bf16.msra.mxu0 0
      %778 = vmatpush.bf16.msra.mxu0 0
      %779 = vmatpush.bf16.msra.mxu0 0
      %780 = vmatpush.bf16.msra.mxu0 0
      %781 = vmatpush.bf16.msra.mxu0 0
      %782 = vmatpush.bf16.msra.mxu0 0
      %783 = vmatpush.bf16.msra.mxu0 0
      %784 = vmatpush.bf16.msra.mxu0 %v762
      %785 = vmatmul.bf16.gmra.mxu0 %v756
      %v786 = vpop.f32.mrf.mxu0
      %v787 = vadd.f32 0.0, %v786
      %v788 = vpop.f32.mrf.mxu0
      %789 = vdwg.mxu0
      %v790 = vadd.f32 %v730, %v774
      %v791 = vadd.f32 %v731, %v787
      %792 = vrot.lane.b32.xlu0 %v442, 113
      %v793 = vpop.permute.xlu0 %792
      %794 = vrot.lane.b32.xlu0 %v443, 113
      %v795 = vpop.permute.xlu0 %794
      %vm796 = vcmask 924672
      %v797 = vsel %vm796, %v793, %v795
      %v801 = vsel %vm796, %v795, %v793
      %s802 = scalar_lea.vmem %s10, 12
      %v803 = vld [vmem:[%s802] sm:$0x3]
      %v805 = vperm.slane %v803, 0
      %v806 = vperm.slane %v803, 1
      %v809 = vmul.f32 %v797, %v805
      %v810 = vmul.f32 %v801, %v806
      %v811 = vpack.c.bf16 %v809, %v809
      %v812 = vpack.c.bf16 %v810, %v810
      %s813 = scalar_lea.vmem %s1, 24
      %v814 = vld [vmem:[%s813] sm:$0xf]
      %v816 = vsel %vm490, %v814, 0
      %v819 = vsel %vm494, %v811, 0
      %v822 = vsel %vm494, %v812, 0
      %824 = vmatpush.bf16.msra.mxu0 0
      %825 = vmatpush.bf16.msra.mxu0 0
      %826 = vmatpush.bf16.msra.mxu0 0
      %827 = vmatpush.bf16.msra.mxu0 0
      %828 = vmatpush.bf16.msra.mxu0 0
      %829 = vmatpush.bf16.msra.mxu0 0
      %830 = vmatpush.bf16.msra.mxu0 0
      %831 = vmatpush.bf16.msra.mxu0 %v819
      %832 = vmatmul.bf16.gmra.mxu0 %v816
      %v833 = vpop.f32.mrf.mxu0
      %v834 = vadd.f32 0.0, %v833
      %v835 = vpop.f32.mrf.mxu0
      %836 = vdwg.mxu0
      %837 = vmatpush.bf16.msra.mxu0 0
      %838 = vmatpush.bf16.msra.mxu0 0
      %839 = vmatpush.bf16.msra.mxu0 0
      %840 = vmatpush.bf16.msra.mxu0 0
      %841 = vmatpush.bf16.msra.mxu0 0
      %842 = vmatpush.bf16.msra.mxu0 0
      %843 = vmatpush.bf16.msra.mxu0 0
      %844 = vmatpush.bf16.msra.mxu0 %v822
      %845 = vmatmul.bf16.gmra.mxu0 %v816
      %v846 = vpop.f32.mrf.mxu0
      %v847 = vadd.f32 0.0, %v846
      %v848 = vpop.f32.mrf.mxu0
      %849 = vdwg.mxu0
      %v850 = vadd.f32 %v790, %v834
      %v851 = vadd.f32 %v791, %v847
      %852 = vrot.lane.b32.xlu0 %v442, 112
      %v853 = vpop.permute.xlu0 %852
      %854 = vrot.lane.b32.xlu0 %v443, 112
      %v855 = vpop.permute.xlu0 %854
      %vm856 = vcmask 916480
      %v857 = vsel %vm856, %v853, %v855
      %v861 = vsel %vm856, %v855, %v853
      %s862 = scalar_lea.vmem %s10, 14
      %v863 = vld [vmem:[%s862] sm:$0x3]
      %v865 = vperm.slane %v863, 0
      %v866 = vperm.slane %v863, 1
      %v869 = vmul.f32 %v857, %v865
      %v870 = vmul.f32 %v861, %v866
      %v871 = vpack.c.bf16 %v869, %v869
      %v872 = vpack.c.bf16 %v870, %v870
      %s873 = scalar_lea.vmem %s1, 28
      %v874 = vld [vmem:[%s873] sm:$0xf]
      %v876 = vsel %vm490, %v874, 0
      %v879 = vsel %vm494, %v871, 0
      %v882 = vsel %vm494, %v872, 0
      %884 = vmatpush.bf16.msra.mxu0 0
      %885 = vmatpush.bf16.msra.mxu0 0
      %886 = vmatpush.bf16.msra.mxu0 0
      %887 = vmatpush.bf16.msra.mxu0 0
      %888 = vmatpush.bf16.msra.mxu0 0
      %889 = vmatpush.bf16.msra.mxu0 0
      %890 = vmatpush.bf16.msra.mxu0 0
      %891 = vmatpush.bf16.msra.mxu0 %v879
      %892 = vmatmul.bf16.gmra.mxu0 %v876
      %v893 = vpop.f32.mrf.mxu0
      %v894 = vadd.f32 0.0, %v893
      %v895 = vpop.f32.mrf.mxu0
      %896 = vdwg.mxu0
      %897 = vmatpush.bf16.msra.mxu0 0
      %898 = vmatpush.bf16.msra.mxu0 0
      %899 = vmatpush.bf16.msra.mxu0 0
      %900 = vmatpush.bf16.msra.mxu0 0
      %901 = vmatpush.bf16.msra.mxu0 0
      %902 = vmatpush.bf16.msra.mxu0 0
      %903 = vmatpush.bf16.msra.mxu0 0
      %904 = vmatpush.bf16.msra.mxu0 %v882
      %905 = vmatmul.bf16.gmra.mxu0 %v876
      %v906 = vpop.f32.mrf.mxu0
      %v907 = vadd.f32 0.0, %v906
      %v908 = vpop.f32.mrf.mxu0
      %909 = vdwg.mxu0
      %v910 = vadd.f32 %v850, %v894
      %v911 = vadd.f32 %v851, %v907
      %912 = vrot.lane.b32.xlu0 %v442, 111
      %v913 = vpop.permute.xlu0 %912
      %914 = vrot.lane.b32.xlu0 %v443, 111
      %v915 = vpop.permute.xlu0 %914
      %vm916 = vcmask 908288
      %v917 = vsel %vm916, %v913, %v915
      %v921 = vsel %vm916, %v915, %v913
      %s922 = scalar_lea.vmem %s10, 16
      %v923 = vld [vmem:[%s922] sm:$0x3]
      %v925 = vperm.slane %v923, 0
      %v926 = vperm.slane %v923, 1
      %v929 = vmul.f32 %v917, %v925
      %v930 = vmul.f32 %v921, %v926
      %v931 = vpack.c.bf16 %v929, %v929
      %v932 = vpack.c.bf16 %v930, %v930
      %s933 = scalar_lea.vmem %s1, 32
      %v934 = vld [vmem:[%s933] sm:$0xf]
      %v936 = vsel %vm490, %v934, 0
      %v939 = vsel %vm494, %v931, 0
      %v942 = vsel %vm494, %v932, 0
      %944 = vmatpush.bf16.msra.mxu0 0
      %945 = vmatpush.bf16.msra.mxu0 0
      %946 = vmatpush.bf16.msra.mxu0 0
      %947 = vmatpush.bf16.msra.mxu0 0
      %948 = vmatpush.bf16.msra.mxu0 0
      %949 = vmatpush.bf16.msra.mxu0 0
      %950 = vmatpush.bf16.msra.mxu0 0
      %951 = vmatpush.bf16.msra.mxu0 %v939
      %952 = vmatmul.bf16.gmra.mxu0 %v936
      %v953 = vpop.f32.mrf.mxu0
      %v954 = vadd.f32 0.0, %v953
      %v955 = vpop.f32.mrf.mxu0
      %956 = vdwg.mxu0
      %957 = vmatpush.bf16.msra.mxu0 0
      %958 = vmatpush.bf16.msra.mxu0 0
      %959 = vmatpush.bf16.msra.mxu0 0
      %960 = vmatpush.bf16.msra.mxu0 0
      %961 = vmatpush.bf16.msra.mxu0 0
      %962 = vmatpush.bf16.msra.mxu0 0
      %963 = vmatpush.bf16.msra.mxu0 0
      %964 = vmatpush.bf16.msra.mxu0 %v942
      %965 = vmatmul.bf16.gmra.mxu0 %v936
      %v966 = vpop.f32.mrf.mxu0
      %v967 = vadd.f32 0.0, %v966
      %v968 = vpop.f32.mrf.mxu0
      %969 = vdwg.mxu0
      %v970 = vadd.f32 %v910, %v954
      %v971 = vadd.f32 %v911, %v967
      %v972 = vld [vmem:[%s2] sm:$0xff]
      %974 = vset.pattern.permute.xlu0 0
      %975 = vperm.xlu0 %974, %v972
      %v976 = vpop.permute.xlu0 %975
      %v978 = vadd.f32 %v970, %v976
      %v979 = vadd.f32 %v971, %v976
      %v980 = vmax.f32 %v978, 0.0
      %v981 = vmax.f32 %v979, 0.0
      %984 = vrot.lane.b32.xlu0 %v980, 127
      %v985 = vpop.permute.xlu0 %984
      %986 = vrot.lane.b32.xlu0 %v981, 127
      %v987 = vpop.permute.xlu0 %986
      %v988 = vsel %vm736, %v985, %v987
      %v992 = vsel %vm736, %v987, %v985
      %v993 = vmax.f32 %v980, %v988
      %v994 = vmax.f32 %v981, %v992
      %997 = vrot.lane.b32.xlu0 %v993, 112
      %v998 = vpop.permute.xlu0 %997
      %999 = vrot.lane.b32.xlu0 %v994, 112
      %v1000 = vpop.permute.xlu0 %999
      %v1001 = vsel %vm856, %v998, %v1000
      %v1005 = vsel %vm856, %v1000, %v998
      %v1006 = vmax.f32 %v993, %v1001
      %v1007 = vmax.f32 %v994, %v1005
      %1009 = vrot.lane.b32.xlu0 %v1007, 34
      %v1010 = vpop.permute.xlu0 %1009
      %1013 = vrot.lane.b32.xlu0 %v1006, 34
      %v1014 = vpop.permute.xlu0 %1013
      %vm1015 = vcmask 277504
      %v1016 = vsel %vm1015, %v1014, %v1010
      %v1019 = vsel %vm1015, %v1010, %v1014
      %v1020 = vld [vmem:[%s11] sm:$0x3]
      %v1022 = vperm.slane %v1020, 0
      %v1023 = vperm.slane %v1020, 1
      %v1026 = vmul.f32 %v1019, %v1022
      %v1027 = vmul.f32 %v1016, %v1023
      %v1028 = vpack.c.bf16 %v1026, %v1026
      %v1029 = vpack.c.bf16 %v1027, %v1027
      %v1030 = vld [vmem:[%s3] sm:$0xf]
      %v1031 = vld [vmem:[%s3 + $0x4] sm:$0xf]
      %1032 = vrot.lane.b32.xlu0 %v1007, 32
      %v1033 = vpop.permute.xlu0 %1032
      %1035 = vrot.lane.b32.xlu0 %v1006, 32
      %v1036 = vpop.permute.xlu0 %1035
      %vm1037 = vcmask 261120
      %v1038 = vsel %vm1037, %v1036, %v1033
      %v1041 = vsel %vm1037, %v1033, %v1036
      %s1042 = scalar_lea.vmem %s11, 2
      %v1043 = vld [vmem:[%s1042] sm:$0x3]
      %v1045 = vperm.slane %v1043, 0
      %v1046 = vperm.slane %v1043, 1
      %v1049 = vmul.f32 %v1041, %v1045
      %v1050 = vmul.f32 %v1038, %v1046
      %v1051 = vpack.c.bf16 %v1049, %v1049
      %v1052 = vpack.c.bf16 %v1050, %v1050
      %s1053 = scalar_lea.vmem %s3, 8
      %v1054 = vld [vmem:[%s1053] sm:$0xf]
      %v1055 = vld [vmem:[%s1053 + $0x4] sm:$0xf]
      %v1058 = vunpack.c.l.b16 %v1054
      %v1059 = vunpack.c.l.b16 %v1055
      %v1060 = vpack.c.b16 %v1059, %v1058
      %v1062 = vsel %vm490, %v1060, 0
      %v1065 = vsel %vm494, %v1051, 0
      %v1068 = vsel %vm494, %v1052, 0
      %1070 = vmatpush.bf16.msra.mxu0 0
      %1071 = vmatpush.bf16.msra.mxu0 0
      %1072 = vmatpush.bf16.msra.mxu0 0
      %1073 = vmatpush.bf16.msra.mxu0 0
      %1074 = vmatpush.bf16.msra.mxu0 0
      %1075 = vmatpush.bf16.msra.mxu0 0
      %1076 = vmatpush.bf16.msra.mxu0 0
      %1077 = vmatpush.bf16.msra.mxu0 %v1065
      %1078 = vmatmul.bf16.gmra.mxu0 %v1062
      %v1079 = vpop.f32.mrf.mxu0
      %v1080 = vadd.f32 0.0, %v1079
      %v1081 = vpop.f32.mrf.mxu0
      %v1082 = vadd.f32 0.0, %v1081
      %1083 = vdwg.mxu0
      %1084 = vmatpush.bf16.msra.mxu0 0
      %1085 = vmatpush.bf16.msra.mxu0 0
      %1086 = vmatpush.bf16.msra.mxu0 0
      %1087 = vmatpush.bf16.msra.mxu0 0
      %1088 = vmatpush.bf16.msra.mxu0 0
      %1089 = vmatpush.bf16.msra.mxu0 0
      %1090 = vmatpush.bf16.msra.mxu0 0
      %1091 = vmatpush.bf16.msra.mxu0 %v1068
      %1092 = vmatmul.bf16.gmra.mxu0 %v1062
      %v1093 = vpop.f32.mrf.mxu0
      %v1094 = vadd.f32 0.0, %v1093
      %v1095 = vpop.f32.mrf.mxu0
      %v1096 = vadd.f32 0.0, %v1095
      %1097 = vdwg.mxu0
      %v1100 = vunpack.c.l.b16 %v1030
      %v1101 = vunpack.c.l.b16 %v1031
      %v1102 = vpack.c.b16 %v1101, %v1100
      %v1104 = vsel %vm490, %v1102, 0
      %v1107 = vsel %vm494, %v1028, 0
      %v1110 = vsel %vm494, %v1029, 0
      %1112 = vmatpush.bf16.msra.mxu0 0
      %1113 = vmatpush.bf16.msra.mxu0 0
      %1114 = vmatpush.bf16.msra.mxu0 0
      %1115 = vmatpush.bf16.msra.mxu0 0
      %1116 = vmatpush.bf16.msra.mxu0 0
      %1117 = vmatpush.bf16.msra.mxu0 0
      %1118 = vmatpush.bf16.msra.mxu0 0
      %1119 = vmatpush.bf16.msra.mxu0 %v1107
      %1120 = vmatmul.bf16.gmra.mxu0 %v1104
      %v1121 = vpop.f32.mrf.mxu0
      %v1122 = vadd.f32 %v1080, %v1121
      %v1123 = vpop.f32.mrf.mxu0
      %v1124 = vadd.f32 %v1082, %v1123
      %1125 = vdwg.mxu0
      %1126 = vmatpush.bf16.msra.mxu0 0
      %1127 = vmatpush.bf16.msra.mxu0 0
      %1128 = vmatpush.bf16.msra.mxu0 0
      %1129 = vmatpush.bf16.msra.mxu0 0
      %1130 = vmatpush.bf16.msra.mxu0 0
      %1131 = vmatpush.bf16.msra.mxu0 0
      %1132 = vmatpush.bf16.msra.mxu0 0
      %1133 = vmatpush.bf16.msra.mxu0 %v1110
      %1134 = vmatmul.bf16.gmra.mxu0 %v1104
      %v1135 = vpop.f32.mrf.mxu0
      %v1136 = vadd.f32 %v1094, %v1135
      %v1137 = vpop.f32.mrf.mxu0
      %v1138 = vadd.f32 %v1096, %v1137
      %1139 = vdwg.mxu0
      %1140 = vrot.lane.b32.xlu0 %v1007, 30
      %v1141 = vpop.permute.xlu0 %1140
      %1143 = vrot.lane.b32.xlu0 %v1006, 30
      %v1144 = vpop.permute.xlu0 %1143
      %vm1145 = vcmask 244736
      %v1146 = vsel %vm1145, %v1144, %v1141
      %v1149 = vsel %vm1145, %v1141, %v1144
      %s1150 = scalar_lea.vmem %s11, 4
      %v1151 = vld [vmem:[%s1150] sm:$0x3]
      %v1153 = vperm.slane %v1151, 0
      %v1154 = vperm.slane %v1151, 1
      %v1157 = vmul.f32 %v1149, %v1153
      %v1158 = vmul.f32 %v1146, %v1154
      %v1159 = vpack.c.bf16 %v1157, %v1157
      %v1160 = vpack.c.bf16 %v1158, %v1158
      %s1161 = scalar_lea.vmem %s3, 16
      %v1162 = vld [vmem:[%s1161] sm:$0xf]
      %v1163 = vld [vmem:[%s1161 + $0x4] sm:$0xf]
      %v1166 = vunpack.c.l.b16 %v1162
      %v1167 = vunpack.c.l.b16 %v1163
      %v1168 = vpack.c.b16 %v1167, %v1166
      %v1170 = vsel %vm490, %v1168, 0
      %v1173 = vsel %vm494, %v1159, 0
      %v1176 = vsel %vm494, %v1160, 0
      %1178 = vmatpush.bf16.msra.mxu0 0
      %1179 = vmatpush.bf16.msra.mxu0 0
      %1180 = vmatpush.bf16.msra.mxu0 0
      %1181 = vmatpush.bf16.msra.mxu0 0
      %1182 = vmatpush.bf16.msra.mxu0 0
      %1183 = vmatpush.bf16.msra.mxu0 0
      %1184 = vmatpush.bf16.msra.mxu0 0
      %1185 = vmatpush.bf16.msra.mxu0 %v1173
      %1186 = vmatmul.bf16.gmra.mxu0 %v1170
      %v1187 = vpop.f32.mrf.mxu0
      %v1188 = vadd.f32 0.0, %v1187
      %v1189 = vpop.f32.mrf.mxu0
      %v1190 = vadd.f32 0.0, %v1189
      %1191 = vdwg.mxu0
      %1192 = vmatpush.bf16.msra.mxu0 0
      %1193 = vmatpush.bf16.msra.mxu0 0
      %1194 = vmatpush.bf16.msra.mxu0 0
      %1195 = vmatpush.bf16.msra.mxu0 0
      %1196 = vmatpush.bf16.msra.mxu0 0
      %1197 = vmatpush.bf16.msra.mxu0 0
      %1198 = vmatpush.bf16.msra.mxu0 0
      %1199 = vmatpush.bf16.msra.mxu0 %v1176
      %1200 = vmatmul.bf16.gmra.mxu0 %v1170
      %v1201 = vpop.f32.mrf.mxu0
      %v1202 = vadd.f32 0.0, %v1201
      %v1203 = vpop.f32.mrf.mxu0
      %v1204 = vadd.f32 0.0, %v1203
      %1205 = vdwg.mxu0
      %v1206 = vadd.f32 %v1122, %v1188
      %v1207 = vadd.f32 %v1136, %v1202
      %v1208 = vadd.f32 %v1124, %v1190
      %v1209 = vadd.f32 %v1138, %v1204
      %1210 = vrot.lane.b32.xlu0 %v1007, 2
      %v1211 = vpop.permute.xlu0 %1210
      %1213 = vrot.lane.b32.xlu0 %v1006, 2
      %v1214 = vpop.permute.xlu0 %1213
      %vm1215 = vcmask 15360
      %v1216 = vsel %vm1215, %v1214, %v1211
      %v1219 = vsel %vm1215, %v1211, %v1214
      %s1220 = scalar_lea.vmem %s11, 6
      %v1221 = vld [vmem:[%s1220] sm:$0x3]
      %v1223 = vperm.slane %v1221, 0
      %v1224 = vperm.slane %v1221, 1
      %v1227 = vmul.f32 %v1219, %v1223
      %v1228 = vmul.f32 %v1216, %v1224
      %v1229 = vpack.c.bf16 %v1227, %v1227
      %v1230 = vpack.c.bf16 %v1228, %v1228
      %s1231 = scalar_lea.vmem %s3, 24
      %v1232 = vld [vmem:[%s1231] sm:$0xf]
      %v1233 = vld [vmem:[%s1231 + $0x4] sm:$0xf]
      %v1236 = vunpack.c.l.b16 %v1232
      %v1237 = vunpack.c.l.b16 %v1233
      %v1238 = vpack.c.b16 %v1237, %v1236
      %v1240 = vsel %vm490, %v1238, 0
      %v1243 = vsel %vm494, %v1229, 0
      %v1246 = vsel %vm494, %v1230, 0
      %1248 = vmatpush.bf16.msra.mxu0 0
      %1249 = vmatpush.bf16.msra.mxu0 0
      %1250 = vmatpush.bf16.msra.mxu0 0
      %1251 = vmatpush.bf16.msra.mxu0 0
      %1252 = vmatpush.bf16.msra.mxu0 0
      %1253 = vmatpush.bf16.msra.mxu0 0
      %1254 = vmatpush.bf16.msra.mxu0 0
      %1255 = vmatpush.bf16.msra.mxu0 %v1243
      %1256 = vmatmul.bf16.gmra.mxu0 %v1240
      %v1257 = vpop.f32.mrf.mxu0
      %v1258 = vadd.f32 0.0, %v1257
      %v1259 = vpop.f32.mrf.mxu0
      %v1260 = vadd.f32 0.0, %v1259
      %1261 = vdwg.mxu0
      %1262 = vmatpush.bf16.msra.mxu0 0
      %1263 = vmatpush.bf16.msra.mxu0 0
      %1264 = vmatpush.bf16.msra.mxu0 0
      %1265 = vmatpush.bf16.msra.mxu0 0
      %1266 = vmatpush.bf16.msra.mxu0 0
      %1267 = vmatpush.bf16.msra.mxu0 0
      %1268 = vmatpush.bf16.msra.mxu0 0
      %1269 = vmatpush.bf16.msra.mxu0 %v1246
      %1270 = vmatmul.bf16.gmra.mxu0 %v1240
      %v1271 = vpop.f32.mrf.mxu0
      %v1272 = vadd.f32 0.0, %v1271
      %v1273 = vpop.f32.mrf.mxu0
      %v1274 = vadd.f32 0.0, %v1273
      %1275 = vdwg.mxu0
      %v1276 = vadd.f32 %v1206, %v1258
      %v1277 = vadd.f32 %v1207, %v1272
      %v1278 = vadd.f32 %v1208, %v1260
      %v1279 = vadd.f32 %v1209, %v1274
      %s1280 = scalar_lea.vmem %s11, 8
      %v1281 = vld [vmem:[%s1280] sm:$0x3]
      %v1283 = vperm.slane %v1281, 0
      %v1284 = vperm.slane %v1281, 1
      %v1287 = vmul.f32 %v1006, %v1283
      %v1288 = vmul.f32 %v1007, %v1284
      %v1289 = vpack.c.bf16 %v1287, %v1287
      %v1290 = vpack.c.bf16 %v1288, %v1288
      %s1291 = scalar_lea.vmem %s3, 32
      %v1292 = vld [vmem:[%s1291] sm:$0xf]
      %v1293 = vld [vmem:[%s1291 + $0x4] sm:$0xf]
      %v1296 = vunpack.c.l.b16 %v1292
      %v1297 = vunpack.c.l.b16 %v1293
      %v1298 = vpack.c.b16 %v1297, %v1296
      %v1300 = vsel %vm490, %v1298, 0
      %v1303 = vsel %vm494, %v1289, 0
      %v1306 = vsel %vm494, %v1290, 0
      %1308 = vmatpush.bf16.msra.mxu0 0
      %1309 = vmatpush.bf16.msra.mxu0 0
      %1310 = vmatpush.bf16.msra.mxu0 0
      %1311 = vmatpush.bf16.msra.mxu0 0
      %1312 = vmatpush.bf16.msra.mxu0 0
      %1313 = vmatpush.bf16.msra.mxu0 0
      %1314 = vmatpush.bf16.msra.mxu0 0
      %1315 = vmatpush.bf16.msra.mxu0 %v1303
      %1316 = vmatmul.bf16.gmra.mxu0 %v1300
      %v1317 = vpop.f32.mrf.mxu0
      %v1318 = vadd.f32 0.0, %v1317
      %v1319 = vpop.f32.mrf.mxu0
      %v1320 = vadd.f32 0.0, %v1319
      %1321 = vdwg.mxu0
      %1322 = vmatpush.bf16.msra.mxu0 0
      %1323 = vmatpush.bf16.msra.mxu0 0
      %1324 = vmatpush.bf16.msra.mxu0 0
      %1325 = vmatpush.bf16.msra.mxu0 0
      %1326 = vmatpush.bf16.msra.mxu0 0
      %1327 = vmatpush.bf16.msra.mxu0 0
      %1328 = vmatpush.bf16.msra.mxu0 0
      %1329 = vmatpush.bf16.msra.mxu0 %v1306
      %1330 = vmatmul.bf16.gmra.mxu0 %v1300
      %v1331 = vpop.f32.mrf.mxu0
      %v1332 = vadd.f32 0.0, %v1331
      %v1333 = vpop.f32.mrf.mxu0
      %v1334 = vadd.f32 0.0, %v1333
      %1335 = vdwg.mxu0
      %v1336 = vadd.f32 %v1276, %v1318
      %v1337 = vadd.f32 %v1277, %v1332
      %v1338 = vadd.f32 %v1278, %v1320
      %v1339 = vadd.f32 %v1279, %v1334
      %1340 = vrot.lane.b32.xlu0 %v1006, 126
      %v1341 = vpop.permute.xlu0 %1340
      %1342 = vrot.lane.b32.xlu0 %v1007, 126
      %v1343 = vpop.permute.xlu0 %1342
      %vm1344 = vcmask 1031168
      %v1345 = vsel %vm1344, %v1341, %v1343
      %v1349 = vsel %vm1344, %v1343, %v1341
      %s1350 = scalar_lea.vmem %s11, 10
      %v1351 = vld [vmem:[%s1350] sm:$0x3]
      %v1353 = vperm.slane %v1351, 0
      %v1354 = vperm.slane %v1351, 1
      %v1357 = vmul.f32 %v1345, %v1353
      %v1358 = vmul.f32 %v1349, %v1354
      %v1359 = vpack.c.bf16 %v1357, %v1357
      %v1360 = vpack.c.bf16 %v1358, %v1358
      %s1361 = scalar_lea.vmem %s3, 40
      %v1362 = vld [vmem:[%s1361] sm:$0xf]
      %v1363 = vld [vmem:[%s1361 + $0x4] sm:$0xf]
      %v1366 = vunpack.c.l.b16 %v1362
      %v1367 = vunpack.c.l.b16 %v1363
      %v1368 = vpack.c.b16 %v1367, %v1366
      %v1370 = vsel %vm490, %v1368, 0
      %v1373 = vsel %vm494, %v1359, 0
      %v1376 = vsel %vm494, %v1360, 0
      %1378 = vmatpush.bf16.msra.mxu0 0
      %1379 = vmatpush.bf16.msra.mxu0 0
      %1380 = vmatpush.bf16.msra.mxu0 0
      %1381 = vmatpush.bf16.msra.mxu0 0
      %1382 = vmatpush.bf16.msra.mxu0 0
      %1383 = vmatpush.bf16.msra.mxu0 0
      %1384 = vmatpush.bf16.msra.mxu0 0
      %1385 = vmatpush.bf16.msra.mxu0 %v1373
      %1386 = vmatmul.bf16.gmra.mxu0 %v1370
      %v1387 = vpop.f32.mrf.mxu0
      %v1388 = vadd.f32 0.0, %v1387
      %v1389 = vpop.f32.mrf.mxu0
      %v1390 = vadd.f32 0.0, %v1389
      %1391 = vdwg.mxu0
      %1392 = vmatpush.bf16.msra.mxu0 0
      %1393 = vmatpush.bf16.msra.mxu0 0
      %1394 = vmatpush.bf16.msra.mxu0 0
      %1395 = vmatpush.bf16.msra.mxu0 0
      %1396 = vmatpush.bf16.msra.mxu0 0
      %1397 = vmatpush.bf16.msra.mxu0 0
      %1398 = vmatpush.bf16.msra.mxu0 0
      %1399 = vmatpush.bf16.msra.mxu0 %v1376
      %1400 = vmatmul.bf16.gmra.mxu0 %v1370
      %v1401 = vpop.f32.mrf.mxu0
      %v1402 = vadd.f32 0.0, %v1401
      %v1403 = vpop.f32.mrf.mxu0
      %v1404 = vadd.f32 0.0, %v1403
      %1405 = vdwg.mxu0
      %v1406 = vadd.f32 %v1336, %v1388
      %v1407 = vadd.f32 %v1337, %v1402
      %v1408 = vadd.f32 %v1338, %v1390
      %v1409 = vadd.f32 %v1339, %v1404
      %1410 = vrot.lane.b32.xlu0 %v1006, 98
      %v1411 = vpop.permute.xlu0 %1410
      %1412 = vrot.lane.b32.xlu0 %v1007, 98
      %v1413 = vpop.permute.xlu0 %1412
      %vm1414 = vcmask 801792
      %v1415 = vsel %vm1414, %v1411, %v1413
      %v1419 = vsel %vm1414, %v1413, %v1411
      %s1420 = scalar_lea.vmem %s11, 12
      %v1421 = vld [vmem:[%s1420] sm:$0x3]
      %v1423 = vperm.slane %v1421, 0
      %v1424 = vperm.slane %v1421, 1
      %v1427 = vmul.f32 %v1415, %v1423
      %v1428 = vmul.f32 %v1419, %v1424
      %v1429 = vpack.c.bf16 %v1427, %v1427
      %v1430 = vpack.c.bf16 %v1428, %v1428
      %s1431 = scalar_lea.vmem %s3, 48
      %v1432 = vld [vmem:[%s1431] sm:$0xf]
      %v1433 = vld [vmem:[%s1431 + $0x4] sm:$0xf]
      %v1436 = vunpack.c.l.b16 %v1432
      %v1437 = vunpack.c.l.b16 %v1433
      %v1438 = vpack.c.b16 %v1437, %v1436
      %v1440 = vsel %vm490, %v1438, 0
      %v1443 = vsel %vm494, %v1429, 0
      %v1446 = vsel %vm494, %v1430, 0
      %1448 = vmatpush.bf16.msra.mxu0 0
      %1449 = vmatpush.bf16.msra.mxu0 0
      %1450 = vmatpush.bf16.msra.mxu0 0
      %1451 = vmatpush.bf16.msra.mxu0 0
      %1452 = vmatpush.bf16.msra.mxu0 0
      %1453 = vmatpush.bf16.msra.mxu0 0
      %1454 = vmatpush.bf16.msra.mxu0 0
      %1455 = vmatpush.bf16.msra.mxu0 %v1443
      %1456 = vmatmul.bf16.gmra.mxu0 %v1440
      %v1457 = vpop.f32.mrf.mxu0
      %v1458 = vadd.f32 0.0, %v1457
      %v1459 = vpop.f32.mrf.mxu0
      %v1460 = vadd.f32 0.0, %v1459
      %1461 = vdwg.mxu0
      %1462 = vmatpush.bf16.msra.mxu0 0
      %1463 = vmatpush.bf16.msra.mxu0 0
      %1464 = vmatpush.bf16.msra.mxu0 0
      %1465 = vmatpush.bf16.msra.mxu0 0
      %1466 = vmatpush.bf16.msra.mxu0 0
      %1467 = vmatpush.bf16.msra.mxu0 0
      %1468 = vmatpush.bf16.msra.mxu0 0
      %1469 = vmatpush.bf16.msra.mxu0 %v1446
      %1470 = vmatmul.bf16.gmra.mxu0 %v1440
      %v1471 = vpop.f32.mrf.mxu0
      %v1472 = vadd.f32 0.0, %v1471
      %v1473 = vpop.f32.mrf.mxu0
      %v1474 = vadd.f32 0.0, %v1473
      %1475 = vdwg.mxu0
      %v1476 = vadd.f32 %v1406, %v1458
      %v1477 = vadd.f32 %v1407, %v1472
      %v1478 = vadd.f32 %v1408, %v1460
      %v1479 = vadd.f32 %v1409, %v1474
      %1480 = vrot.lane.b32.xlu0 %v1006, 96
      %v1481 = vpop.permute.xlu0 %1480
      %1482 = vrot.lane.b32.xlu0 %v1007, 96
      %v1483 = vpop.permute.xlu0 %1482
      %vm1484 = vcmask 785408
      %v1485 = vsel %vm1484, %v1481, %v1483
      %v1489 = vsel %vm1484, %v1483, %v1481
      %s1490 = scalar_lea.vmem %s11, 14
      %v1491 = vld [vmem:[%s1490] sm:$0x3]
      %v1493 = vperm.slane %v1491, 0
      %v1494 = vperm.slane %v1491, 1
      %v1497 = vmul.f32 %v1485, %v1493
      %v1498 = vmul.f32 %v1489, %v1494
      %v1499 = vpack.c.bf16 %v1497, %v1497
      %v1500 = vpack.c.bf16 %v1498, %v1498
      %s1501 = scalar_lea.vmem %s3, 56
      %v1502 = vld [vmem:[%s1501] sm:$0xf]
      %v1503 = vld [vmem:[%s1501 + $0x4] sm:$0xf]
      %v1506 = vunpack.c.l.b16 %v1502
      %v1507 = vunpack.c.l.b16 %v1503
      %v1508 = vpack.c.b16 %v1507, %v1506
      %v1510 = vsel %vm490, %v1508, 0
      %v1513 = vsel %vm494, %v1499, 0
      %v1516 = vsel %vm494, %v1500, 0
      %1518 = vmatpush.bf16.msra.mxu0 0
      %1519 = vmatpush.bf16.msra.mxu0 0
      %1520 = vmatpush.bf16.msra.mxu0 0
      %1521 = vmatpush.bf16.msra.mxu0 0
      %1522 = vmatpush.bf16.msra.mxu0 0
      %1523 = vmatpush.bf16.msra.mxu0 0
      %1524 = vmatpush.bf16.msra.mxu0 0
      %1525 = vmatpush.bf16.msra.mxu0 %v1513
      %1526 = vmatmul.bf16.gmra.mxu0 %v1510
      %v1527 = vpop.f32.mrf.mxu0
      %v1528 = vadd.f32 0.0, %v1527
      %v1529 = vpop.f32.mrf.mxu0
      %v1530 = vadd.f32 0.0, %v1529
      %1531 = vdwg.mxu0
      %1532 = vmatpush.bf16.msra.mxu0 0
      %1533 = vmatpush.bf16.msra.mxu0 0
      %1534 = vmatpush.bf16.msra.mxu0 0
      %1535 = vmatpush.bf16.msra.mxu0 0
      %1536 = vmatpush.bf16.msra.mxu0 0
      %1537 = vmatpush.bf16.msra.mxu0 0
      %1538 = vmatpush.bf16.msra.mxu0 0
      %1539 = vmatpush.bf16.msra.mxu0 %v1516
      %1540 = vmatmul.bf16.gmra.mxu0 %v1510
      %v1541 = vpop.f32.mrf.mxu0
      %v1542 = vadd.f32 0.0, %v1541
      %v1543 = vpop.f32.mrf.mxu0
      %v1544 = vadd.f32 0.0, %v1543
      %1545 = vdwg.mxu0
      %v1546 = vadd.f32 %v1476, %v1528
      %v1547 = vadd.f32 %v1477, %v1542
      %v1548 = vadd.f32 %v1478, %v1530
      %v1549 = vadd.f32 %v1479, %v1544
      %1550 = vrot.lane.b32.xlu0 %v1006, 94
      %v1551 = vpop.permute.xlu0 %1550
      %1552 = vrot.lane.b32.xlu0 %v1007, 94
      %v1553 = vpop.permute.xlu0 %1552
      %vm1554 = vcmask 769024
      %v1555 = vsel %vm1554, %v1551, %v1553
      %v1559 = vsel %vm1554, %v1553, %v1551
      %s1560 = scalar_lea.vmem %s11, 16
      %v1561 = vld [vmem:[%s1560] sm:$0x3]
      %v1563 = vperm.slane %v1561, 0
      %v1564 = vperm.slane %v1561, 1
      %v1567 = vmul.f32 %v1555, %v1563
      %v1568 = vmul.f32 %v1559, %v1564
      %v1569 = vpack.c.bf16 %v1567, %v1567
      %v1570 = vpack.c.bf16 %v1568, %v1568
      %s1571 = scalar_lea.vmem %s3, 64
      %v1572 = vld [vmem:[%s1571] sm:$0xf]
      %v1573 = vld [vmem:[%s1571 + $0x4] sm:$0xf]
      %v1576 = vunpack.c.l.b16 %v1572
      %v1577 = vunpack.c.l.b16 %v1573
      %v1578 = vpack.c.b16 %v1577, %v1576
      %v1580 = vsel %vm490, %v1578, 0
      %v1583 = vsel %vm494, %v1569, 0
      %v1586 = vsel %vm494, %v1570, 0
      %1588 = vmatpush.bf16.msra.mxu0 0
      %1589 = vmatpush.bf16.msra.mxu0 0
      %1590 = vmatpush.bf16.msra.mxu0 0
      %1591 = vmatpush.bf16.msra.mxu0 0
      %1592 = vmatpush.bf16.msra.mxu0 0
      %1593 = vmatpush.bf16.msra.mxu0 0
      %1594 = vmatpush.bf16.msra.mxu0 0
      %1595 = vmatpush.bf16.msra.mxu0 %v1583
      %1596 = vmatmul.bf16.gmra.mxu0 %v1580
      %v1597 = vpop.f32.mrf.mxu0
      %v1598 = vadd.f32 0.0, %v1597
      %v1599 = vpop.f32.mrf.mxu0
      %v1600 = vadd.f32 0.0, %v1599
      %1601 = vdwg.mxu0
      %1602 = vmatpush.bf16.msra.mxu0 0
      %1603 = vmatpush.bf16.msra.mxu0 0
      %1604 = vmatpush.bf16.msra.mxu0 0
      %1605 = vmatpush.bf16.msra.mxu0 0
      %1606 = vmatpush.bf16.msra.mxu0 0
      %1607 = vmatpush.bf16.msra.mxu0 0
      %1608 = vmatpush.bf16.msra.mxu0 0
      %1609 = vmatpush.bf16.msra.mxu0 %v1586
      %1610 = vmatmul.bf16.gmra.mxu0 %v1580
      %v1611 = vpop.f32.mrf.mxu0
      %v1612 = vadd.f32 0.0, %v1611
      %v1613 = vpop.f32.mrf.mxu0
      %v1614 = vadd.f32 0.0, %v1613
      %1615 = vdwg.mxu0
      %v1616 = vadd.f32 %v1546, %v1598
      %v1617 = vadd.f32 %v1547, %v1612
      %v1618 = vadd.f32 %v1548, %v1600
      %v1619 = vadd.f32 %v1549, %v1614
      %v1620 = vld [vmem:[%s4] sm:$0xff]
      %v1621 = vld [vmem:[%s4 + $0x8] sm:$0xff]
      %1623 = vset.pattern.permute.xlu0 0
      %1624 = vperm.xlu0 %1623, %v1620
      %v1625 = vpop.permute.xlu0 %1624
      %1628 = vset.pattern.permute.xlu0 0
      %1629 = vperm.xlu0 %1628, %v1621
      %v1630 = vpop.permute.xlu0 %1629
      %v1632 = vadd.f32 %v1616, %v1625
      %v1633 = vadd.f32 %v1617, %v1625
      %v1634 = vadd.f32 %v1618, %v1630
      %v1635 = vadd.f32 %v1619, %v1630
      %v1636 = vmax.f32 %v1632, 0.0
      %v1637 = vmax.f32 %v1633, 0.0
      %v1638 = vmax.f32 %v1634, 0.0
      %v1639 = vmax.f32 %v1635, 0.0
      %v1640 = vld [vmem:[%s12] sm:$0x3]
      %v1642 = vperm.slane %v1640, 0
      %v1643 = vperm.slane %v1640, 1
      %v1646 = vmul.f32 %v1642, %v1636
      %v1647 = vmul.f32 %v1643, %v1637
      %v1648 = vmul.f32 %v1642, %v1638
      %v1649 = vmul.f32 %v1643, %v1639
      %s1650 = scalar_lea.vmem %s12, 2
      %v1651 = vld [vmem:[%s1650] sm:$0x3]
      %1654 = vrot.lane.b32.xlu0 %v1637, 1
      %v1655 = vpop.permute.xlu0 %1654
      %1656 = vrot.lane.b32.xlu0 %v1639, 1
      %v1657 = vpop.permute.xlu0 %1656
      %1662 = vrot.lane.b32.xlu0 %v1636, 1
      %v1663 = vpop.permute.xlu0 %1662
      %1664 = vrot.lane.b32.xlu0 %v1638, 1
      %v1665 = vpop.permute.xlu0 %1664
      %v1666 = vsel %vm627, %v1663, %v1655
      %v1667 = vsel %vm627, %v1665, %v1657
      %v1672 = vsel %vm627, %v1655, %v1663
      %v1673 = vsel %vm627, %v1657, %v1665
      %v1675 = vperm.slane %v1651, 0
      %v1676 = vperm.slane %v1651, 1
      %v1679 = vmul.f32 %v1675, %v1672
      %v1680 = vmul.f32 %v1676, %v1666
      %v1681 = vmul.f32 %v1675, %v1673
      %v1682 = vmul.f32 %v1676, %v1667
      %v1683 = vadd.f32 %v1646, %v1679
      %v1684 = vadd.f32 %v1647, %v1680
      %v1685 = vadd.f32 %v1648, %v1681
      %v1686 = vadd.f32 %v1649, %v1682
      %s1687 = scalar_lea.vmem %s12, 4
      %v1688 = vld [vmem:[%s1687] sm:$0x3]
      %1689 = vrot.lane.b32.xlu0 %v1637, 16
      %v1690 = vpop.permute.xlu0 %1689
      %1691 = vrot.lane.b32.xlu0 %v1639, 16
      %v1692 = vpop.permute.xlu0 %1691
      %1695 = vrot.lane.b32.xlu0 %v1636, 16
      %v1696 = vpop.permute.xlu0 %1695
      %1697 = vrot.lane.b32.xlu0 %v1638, 16
      %v1698 = vpop.permute.xlu0 %1697
      %v1699 = vsel %vm472, %v1696, %v1690
      %v1700 = vsel %vm472, %v1698, %v1692
      %v1705 = vsel %vm472, %v1690, %v1696
      %v1706 = vsel %vm472, %v1692, %v1698
      %v1708 = vperm.slane %v1688, 0
      %v1709 = vperm.slane %v1688, 1
      %v1712 = vmul.f32 %v1708, %v1705
      %v1713 = vmul.f32 %v1709, %v1699
      %v1714 = vmul.f32 %v1708, %v1706
      %v1715 = vmul.f32 %v1709, %v1700
      %v1716 = vadd.f32 %v1683, %v1712
      %v1717 = vadd.f32 %v1684, %v1713
      %v1718 = vadd.f32 %v1685, %v1714
      %v1719 = vadd.f32 %v1686, %v1715
      %s1720 = scalar_lea.vmem %s12, 6
      %v1721 = vld [vmem:[%s1720] sm:$0x3]
      %1722 = vrot.lane.b32.xlu0 %v1637, 17
      %v1723 = vpop.permute.xlu0 %1722
      %1724 = vrot.lane.b32.xlu0 %v1639, 17
      %v1725 = vpop.permute.xlu0 %1724
      %1728 = vrot.lane.b32.xlu0 %v1636, 17
      %v1729 = vpop.permute.xlu0 %1728
      %1730 = vrot.lane.b32.xlu0 %v1638, 17
      %v1731 = vpop.permute.xlu0 %1730
      %v1732 = vsel %vm451, %v1729, %v1723
      %v1733 = vsel %vm451, %v1731, %v1725
      %v1738 = vsel %vm451, %v1723, %v1729
      %v1739 = vsel %vm451, %v1725, %v1731
      %v1741 = vperm.slane %v1721, 0
      %v1742 = vperm.slane %v1721, 1
      %v1745 = vmul.f32 %v1741, %v1738
      %v1746 = vmul.f32 %v1742, %v1732
      %v1747 = vmul.f32 %v1741, %v1739
      %v1748 = vmul.f32 %v1742, %v1733
      %v1749 = vadd.f32 %v1716, %v1745
      %v1750 = vadd.f32 %v1717, %v1746
      %v1751 = vadd.f32 %v1718, %v1747
      %v1752 = vadd.f32 %v1719, %v1748
      %1755 = vrot.lane.b32.xlu0 %v1750, 17
      %v1756 = vpop.permute.xlu0 %1755
      %1757 = vrot.lane.b32.xlu0 %v1752, 17
      %v1758 = vpop.permute.xlu0 %1757
      %1763 = vrot.lane.b32.xlu0 %v1749, 17
      %v1764 = vpop.permute.xlu0 %1763
      %1765 = vrot.lane.b32.xlu0 %v1751, 17
      %v1766 = vpop.permute.xlu0 %1765
      %v1767 = vsel %vm451, %v1764, %v1756
      %v1768 = vsel %vm451, %v1766, %v1758
      %v1773 = vsel %vm451, %v1756, %v1764
      %v1774 = vsel %vm451, %v1758, %v1766
      %v1775 = vmul.f32 %v1773, %v458
      %v1776 = vmul.f32 %v1767, %v459
      %v1777 = vmul.f32 %v1774, %v458
      %v1778 = vmul.f32 %v1768, %v459
      %v1779 = vpack.c.bf16 %v1777, %v1775
      %v1780 = vpack.c.bf16 %v1778, %v1776
      %v1781 = vld [vmem:[%s5] sm:$0xf]
      %1782 = vrot.lane.b32.xlu0 %v1750, 16
      %v1783 = vpop.permute.xlu0 %1782
      %1784 = vrot.lane.b32.xlu0 %v1752, 16
      %v1785 = vpop.permute.xlu0 %1784
      %1788 = vrot.lane.b32.xlu0 %v1749, 16
      %v1789 = vpop.permute.xlu0 %1788
      %1790 = vrot.lane.b32.xlu0 %v1751, 16
      %v1791 = vpop.permute.xlu0 %1790
      %v1792 = vsel %vm472, %v1789, %v1783
      %v1793 = vsel %vm472, %v1791, %v1785
      %v1798 = vsel %vm472, %v1783, %v1789
      %v1799 = vsel %vm472, %v1785, %v1791
      %v1800 = vmul.f32 %v1798, %v480
      %v1801 = vmul.f32 %v1792, %v481
      %v1802 = vmul.f32 %v1799, %v480
      %v1803 = vmul.f32 %v1793, %v481
      %v1804 = vpack.c.bf16 %v1802, %v1800
      %v1805 = vpack.c.bf16 %v1803, %v1801
      %s1806 = scalar_lea.vmem %s5, 4
      %v1807 = vld [vmem:[%s1806] sm:$0xf]
      %v1809 = vsel %vm472, %v1807, 0
      %1811 = vmatpush.bf16.msra.mxu0 0
      %1812 = vmatpush.bf16.msra.mxu0 0
      %1813 = vmatpush.bf16.msra.mxu0 0
      %1814 = vmatpush.bf16.msra.mxu0 0
      %1815 = vmatpush.bf16.msra.mxu0 0
      %1816 = vmatpush.bf16.msra.mxu0 0
      %1817 = vmatpush.bf16.msra.mxu0 0
      %1818 = vmatpush.bf16.msra.mxu0 %v1804
      %1819 = vmatmul.bf16.gmra.mxu0 %v1809
      %v1820 = vpop.f32.mrf.mxu0
      %v1821 = vadd.f32 0.0, %v1820
      %v1822 = vpop.f32.mrf.mxu0
      %1823 = vdwg.mxu0
      %1824 = vmatpush.bf16.msra.mxu0 0
      %1825 = vmatpush.bf16.msra.mxu0 0
      %1826 = vmatpush.bf16.msra.mxu0 0
      %1827 = vmatpush.bf16.msra.mxu0 0
      %1828 = vmatpush.bf16.msra.mxu0 0
      %1829 = vmatpush.bf16.msra.mxu0 0
      %1830 = vmatpush.bf16.msra.mxu0 0
      %1831 = vmatpush.bf16.msra.mxu0 %v1805
      %1832 = vmatmul.bf16.gmra.mxu0 %v1809
      %v1833 = vpop.f32.mrf.mxu0
      %v1834 = vadd.f32 0.0, %v1833
      %v1835 = vpop.f32.mrf.mxu0
      %1836 = vdwg.mxu0
      %v1838 = vsel %vm472, %v1781, 0
      %1840 = vmatpush.bf16.msra.mxu0 0
      %1841 = vmatpush.bf16.msra.mxu0 0
      %1842 = vmatpush.bf16.msra.mxu0 0
      %1843 = vmatpush.bf16.msra.mxu0 0
      %1844 = vmatpush.bf16.msra.mxu0 0
      %1845 = vmatpush.bf16.msra.mxu0 0
      %1846 = vmatpush.bf16.msra.mxu0 0
      %1847 = vmatpush.bf16.msra.mxu0 %v1779
      %1848 = vmatmul.bf16.gmra.mxu0 %v1838
      %v1849 = vpop.f32.mrf.mxu0
      %v1850 = vadd.f32 %v1821, %v1849
      %v1851 = vpop.f32.mrf.mxu0
      %1852 = vdwg.mxu0
      %1853 = vmatpush.bf16.msra.mxu0 0
      %1854 = vmatpush.bf16.msra.mxu0 0
      %1855 = vmatpush.bf16.msra.mxu0 0
      %1856 = vmatpush.bf16.msra.mxu0 0
      %1857 = vmatpush.bf16.msra.mxu0 0
      %1858 = vmatpush.bf16.msra.mxu0 0
      %1859 = vmatpush.bf16.msra.mxu0 0
      %1860 = vmatpush.bf16.msra.mxu0 %v1780
      %1861 = vmatmul.bf16.gmra.mxu0 %v1838
      %v1862 = vpop.f32.mrf.mxu0
      %v1863 = vadd.f32 %v1834, %v1862
      %v1864 = vpop.f32.mrf.mxu0
      %1865 = vdwg.mxu0
      %1866 = vrot.lane.b32.xlu0 %v1750, 15
      %v1867 = vpop.permute.xlu0 %1866
      %1868 = vrot.lane.b32.xlu0 %v1752, 15
      %v1869 = vpop.permute.xlu0 %1868
      %1872 = vrot.lane.b32.xlu0 %v1749, 15
      %v1873 = vpop.permute.xlu0 %1872
      %1874 = vrot.lane.b32.xlu0 %v1751, 15
      %v1875 = vpop.permute.xlu0 %1874
      %v1876 = vsel %vm567, %v1873, %v1867
      %v1877 = vsel %vm567, %v1875, %v1869
      %v1882 = vsel %vm567, %v1867, %v1873
      %v1883 = vsel %vm567, %v1869, %v1875
      %v1884 = vmul.f32 %v1882, %v575
      %v1885 = vmul.f32 %v1876, %v576
      %v1886 = vmul.f32 %v1883, %v575
      %v1887 = vmul.f32 %v1877, %v576
      %v1888 = vpack.c.bf16 %v1886, %v1884
      %v1889 = vpack.c.bf16 %v1887, %v1885
      %s1890 = scalar_lea.vmem %s5, 8
      %v1891 = vld [vmem:[%s1890] sm:$0xf]
      %v1893 = vsel %vm472, %v1891, 0
      %1895 = vmatpush.bf16.msra.mxu0 0
      %1896 = vmatpush.bf16.msra.mxu0 0
      %1897 = vmatpush.bf16.msra.mxu0 0
      %1898 = vmatpush.bf16.msra.mxu0 0
      %1899 = vmatpush.bf16.msra.mxu0 0
      %1900 = vmatpush.bf16.msra.mxu0 0
      %1901 = vmatpush.bf16.msra.mxu0 0
      %1902 = vmatpush.bf16.msra.mxu0 %v1888
      %1903 = vmatmul.bf16.gmra.mxu0 %v1893
      %v1904 = vpop.f32.mrf.mxu0
      %v1905 = vadd.f32 0.0, %v1904
      %v1906 = vpop.f32.mrf.mxu0
      %1907 = vdwg.mxu0
      %1908 = vmatpush.bf16.msra.mxu0 0
      %1909 = vmatpush.bf16.msra.mxu0 0
      %1910 = vmatpush.bf16.msra.mxu0 0
      %1911 = vmatpush.bf16.msra.mxu0 0
      %1912 = vmatpush.bf16.msra.mxu0 0
      %1913 = vmatpush.bf16.msra.mxu0 0
      %1914 = vmatpush.bf16.msra.mxu0 0
      %1915 = vmatpush.bf16.msra.mxu0 %v1889
      %1916 = vmatmul.bf16.gmra.mxu0 %v1893
      %v1917 = vpop.f32.mrf.mxu0
      %v1918 = vadd.f32 0.0, %v1917
      %v1919 = vpop.f32.mrf.mxu0
      %1920 = vdwg.mxu0
      %v1921 = vadd.f32 %v1850, %v1905
      %v1922 = vadd.f32 %v1863, %v1918
      %1923 = vrot.lane.b32.xlu0 %v1750, 1
      %v1924 = vpop.permute.xlu0 %1923
      %1925 = vrot.lane.b32.xlu0 %v1752, 1
      %v1926 = vpop.permute.xlu0 %1925
      %1929 = vrot.lane.b32.xlu0 %v1749, 1
      %v1930 = vpop.permute.xlu0 %1929
      %1931 = vrot.lane.b32.xlu0 %v1751, 1
      %v1932 = vpop.permute.xlu0 %1931
      %v1933 = vsel %vm627, %v1930, %v1924
      %v1934 = vsel %vm627, %v1932, %v1926
      %v1939 = vsel %vm627, %v1924, %v1930
      %v1940 = vsel %vm627, %v1926, %v1932
      %v1941 = vmul.f32 %v1939, %v635
      %v1942 = vmul.f32 %v1933, %v636
      %v1943 = vmul.f32 %v1940, %v635
      %v1944 = vmul.f32 %v1934, %v636
      %v1945 = vpack.c.bf16 %v1943, %v1941
      %v1946 = vpack.c.bf16 %v1944, %v1942
      %s1947 = scalar_lea.vmem %s5, 12
      %v1948 = vld [vmem:[%s1947] sm:$0xf]
      %v1950 = vsel %vm472, %v1948, 0
      %1952 = vmatpush.bf16.msra.mxu0 0
      %1953 = vmatpush.bf16.msra.mxu0 0
      %1954 = vmatpush.bf16.msra.mxu0 0
      %1955 = vmatpush.bf16.msra.mxu0 0
      %1956 = vmatpush.bf16.msra.mxu0 0
      %1957 = vmatpush.bf16.msra.mxu0 0
      %1958 = vmatpush.bf16.msra.mxu0 0
      %1959 = vmatpush.bf16.msra.mxu0 %v1945
      %1960 = vmatmul.bf16.gmra.mxu0 %v1950
      %v1961 = vpop.f32.mrf.mxu0
      %v1962 = vadd.f32 0.0, %v1961
      %v1963 = vpop.f32.mrf.mxu0
      %1964 = vdwg.mxu0
      %1965 = vmatpush.bf16.msra.mxu0 0
      %1966 = vmatpush.bf16.msra.mxu0 0
      %1967 = vmatpush.bf16.msra.mxu0 0
      %1968 = vmatpush.bf16.msra.mxu0 0
      %1969 = vmatpush.bf16.msra.mxu0 0
      %1970 = vmatpush.bf16.msra.mxu0 0
      %1971 = vmatpush.bf16.msra.mxu0 0
      %1972 = vmatpush.bf16.msra.mxu0 %v1946
      %1973 = vmatmul.bf16.gmra.mxu0 %v1950
      %v1974 = vpop.f32.mrf.mxu0
      %v1975 = vadd.f32 0.0, %v1974
      %v1976 = vpop.f32.mrf.mxu0
      %1977 = vdwg.mxu0
      %v1978 = vadd.f32 %v1921, %v1962
      %v1979 = vadd.f32 %v1922, %v1975
      %v1980 = vmul.f32 %v1749, %v685
      %v1981 = vmul.f32 %v1750, %v686
      %v1982 = vmul.f32 %v1751, %v685
      %v1983 = vmul.f32 %v1752, %v686
      %v1984 = vpack.c.bf16 %v1982, %v1980
      %v1985 = vpack.c.bf16 %v1983, %v1981
      %s1986 = scalar_lea.vmem %s5, 16
      %v1987 = vld [vmem:[%s1986] sm:$0xf]
      %v1989 = vsel %vm472, %v1987, 0
      %1991 = vmatpush.bf16.msra.mxu0 0
      %1992 = vmatpush.bf16.msra.mxu0 0
      %1993 = vmatpush.bf16.msra.mxu0 0
      %1994 = vmatpush.bf16.msra.mxu0 0
      %1995 = vmatpush.bf16.msra.mxu0 0
      %1996 = vmatpush.bf16.msra.mxu0 0
      %1997 = vmatpush.bf16.msra.mxu0 0
      %1998 = vmatpush.bf16.msra.mxu0 %v1984
      %1999 = vmatmul.bf16.gmra.mxu0 %v1989
      %v2000 = vpop.f32.mrf.mxu0
      %v2001 = vadd.f32 0.0, %v2000
      %v2002 = vpop.f32.mrf.mxu0
      %2003 = vdwg.mxu0
      %2004 = vmatpush.bf16.msra.mxu0 0
      %2005 = vmatpush.bf16.msra.mxu0 0
      %2006 = vmatpush.bf16.msra.mxu0 0
      %2007 = vmatpush.bf16.msra.mxu0 0
      %2008 = vmatpush.bf16.msra.mxu0 0
      %2009 = vmatpush.bf16.msra.mxu0 0
      %2010 = vmatpush.bf16.msra.mxu0 0
      %2011 = vmatpush.bf16.msra.mxu0 %v1985
      %2012 = vmatmul.bf16.gmra.mxu0 %v1989
      %v2013 = vpop.f32.mrf.mxu0
      %v2014 = vadd.f32 0.0, %v2013
      %v2015 = vpop.f32.mrf.mxu0
      %2016 = vdwg.mxu0
      %v2017 = vadd.f32 %v1978, %v2001
      %v2018 = vadd.f32 %v1979, %v2014
      %2019 = vrot.lane.b32.xlu0 %v1749, 127
      %v2020 = vpop.permute.xlu0 %2019
      %2021 = vrot.lane.b32.xlu0 %v1750, 127
      %v2022 = vpop.permute.xlu0 %2021
      %2023 = vrot.lane.b32.xlu0 %v1751, 127
      %v2024 = vpop.permute.xlu0 %2023
      %2025 = vrot.lane.b32.xlu0 %v1752, 127
      %v2026 = vpop.permute.xlu0 %2025
      %v2027 = vsel %vm736, %v2020, %v2022
      %v2028 = vsel %vm736, %v2024, %v2026
      %v2035 = vsel %vm736, %v2022, %v2020
      %v2036 = vsel %vm736, %v2026, %v2024
      %v2037 = vmul.f32 %v2027, %v745
      %v2038 = vmul.f32 %v2035, %v746
      %v2039 = vmul.f32 %v2028, %v745
      %v2040 = vmul.f32 %v2036, %v746
      %v2041 = vpack.c.bf16 %v2039, %v2037
      %v2042 = vpack.c.bf16 %v2040, %v2038
      %s2043 = scalar_lea.vmem %s5, 20
      %v2044 = vld [vmem:[%s2043] sm:$0xf]
      %v2046 = vsel %vm472, %v2044, 0
      %2048 = vmatpush.bf16.msra.mxu0 0
      %2049 = vmatpush.bf16.msra.mxu0 0
      %2050 = vmatpush.bf16.msra.mxu0 0
      %2051 = vmatpush.bf16.msra.mxu0 0
      %2052 = vmatpush.bf16.msra.mxu0 0
      %2053 = vmatpush.bf16.msra.mxu0 0
      %2054 = vmatpush.bf16.msra.mxu0 0
      %2055 = vmatpush.bf16.msra.mxu0 %v2041
      %2056 = vmatmul.bf16.gmra.mxu0 %v2046
      %v2057 = vpop.f32.mrf.mxu0
      %v2058 = vadd.f32 0.0, %v2057
      %v2059 = vpop.f32.mrf.mxu0
      %2060 = vdwg.mxu0
      %2061 = vmatpush.bf16.msra.mxu0 0
      %2062 = vmatpush.bf16.msra.mxu0 0
      %2063 = vmatpush.bf16.msra.mxu0 0
      %2064 = vmatpush.bf16.msra.mxu0 0
      %2065 = vmatpush.bf16.msra.mxu0 0
      %2066 = vmatpush.bf16.msra.mxu0 0
      %2067 = vmatpush.bf16.msra.mxu0 0
      %2068 = vmatpush.bf16.msra.mxu0 %v2042
      %2069 = vmatmul.bf16.gmra.mxu0 %v2046
      %v2070 = vpop.f32.mrf.mxu0
      %v2071 = vadd.f32 0.0, %v2070
      %v2072 = vpop.f32.mrf.mxu0
      %2073 = vdwg.mxu0
      %v2074 = vadd.f32 %v2017, %v2058
      %v2075 = vadd.f32 %v2018, %v2071
      %2076 = vrot.lane.b32.xlu0 %v1749, 113
      %v2077 = vpop.permute.xlu0 %2076
      %2078 = vrot.lane.b32.xlu0 %v1750, 113
      %v2079 = vpop.permute.xlu0 %2078
      %2080 = vrot.lane.b32.xlu0 %v1751, 113
      %v2081 = vpop.permute.xlu0 %2080
      %2082 = vrot.lane.b32.xlu0 %v1752, 113
      %v2083 = vpop.permute.xlu0 %2082
      %v2084 = vsel %vm796, %v2077, %v2079
      %v2085 = vsel %vm796, %v2081, %v2083
      %v2092 = vsel %vm796, %v2079, %v2077
      %v2093 = vsel %vm796, %v2083, %v2081
      %v2094 = vmul.f32 %v2084, %v805
      %v2095 = vmul.f32 %v2092, %v806
      %v2096 = vmul.f32 %v2085, %v805
      %v2097 = vmul.f32 %v2093, %v806
      %v2098 = vpack.c.bf16 %v2096, %v2094
      %v2099 = vpack.c.bf16 %v2097, %v2095
      %s2100 = scalar_lea.vmem %s5, 24
      %v2101 = vld [vmem:[%s2100] sm:$0xf]
      %v2103 = vsel %vm472, %v2101, 0
      %2105 = vmatpush.bf16.msra.mxu0 0
      %2106 = vmatpush.bf16.msra.mxu0 0
      %2107 = vmatpush.bf16.msra.mxu0 0
      %2108 = vmatpush.bf16.msra.mxu0 0
      %2109 = vmatpush.bf16.msra.mxu0 0
      %2110 = vmatpush.bf16.msra.mxu0 0
      %2111 = vmatpush.bf16.msra.mxu0 0
      %2112 = vmatpush.bf16.msra.mxu0 %v2098
      %2113 = vmatmul.bf16.gmra.mxu0 %v2103
      %v2114 = vpop.f32.mrf.mxu0
      %v2115 = vadd.f32 0.0, %v2114
      %v2116 = vpop.f32.mrf.mxu0
      %2117 = vdwg.mxu0
      %2118 = vmatpush.bf16.msra.mxu0 0
      %2119 = vmatpush.bf16.msra.mxu0 0
      %2120 = vmatpush.bf16.msra.mxu0 0
      %2121 = vmatpush.bf16.msra.mxu0 0
      %2122 = vmatpush.bf16.msra.mxu0 0
      %2123 = vmatpush.bf16.msra.mxu0 0
      %2124 = vmatpush.bf16.msra.mxu0 0
      %2125 = vmatpush.bf16.msra.mxu0 %v2099
      %2126 = vmatmul.bf16.gmra.mxu0 %v2103
      %v2127 = vpop.f32.mrf.mxu0
      %v2128 = vadd.f32 0.0, %v2127
      %v2129 = vpop.f32.mrf.mxu0
      %2130 = vdwg.mxu0
      %v2131 = vadd.f32 %v2074, %v2115
      %v2132 = vadd.f32 %v2075, %v2128
      %2133 = vrot.lane.b32.xlu0 %v1749, 112
      %v2134 = vpop.permute.xlu0 %2133
      %2135 = vrot.lane.b32.xlu0 %v1750, 112
      %v2136 = vpop.permute.xlu0 %2135
      %2137 = vrot.lane.b32.xlu0 %v1751, 112
      %v2138 = vpop.permute.xlu0 %2137
      %2139 = vrot.lane.b32.xlu0 %v1752, 112
      %v2140 = vpop.permute.xlu0 %2139
      %v2141 = vsel %vm856, %v2134, %v2136
      %v2142 = vsel %vm856, %v2138, %v2140
      %v2149 = vsel %vm856, %v2136, %v2134
      %v2150 = vsel %vm856, %v2140, %v2138
      %v2151 = vmul.f32 %v2141, %v865
      %v2152 = vmul.f32 %v2149, %v866
      %v2153 = vmul.f32 %v2142, %v865
      %v2154 = vmul.f32 %v2150, %v866
      %v2155 = vpack.c.bf16 %v2153, %v2151
      %v2156 = vpack.c.bf16 %v2154, %v2152
      %s2157 = scalar_lea.vmem %s5, 28
      %v2158 = vld [vmem:[%s2157] sm:$0xf]
      %v2160 = vsel %vm472, %v2158, 0
      %2162 = vmatpush.bf16.msra.mxu0 0
      %2163 = vmatpush.bf16.msra.mxu0 0
      %2164 = vmatpush.bf16.msra.mxu0 0
      %2165 = vmatpush.bf16.msra.mxu0 0
      %2166 = vmatpush.bf16.msra.mxu0 0
      %2167 = vmatpush.bf16.msra.mxu0 0
      %2168 = vmatpush.bf16.msra.mxu0 0
      %2169 = vmatpush.bf16.msra.mxu0 %v2155
      %2170 = vmatmul.bf16.gmra.mxu0 %v2160
      %v2171 = vpop.f32.mrf.mxu0
      %v2172 = vadd.f32 0.0, %v2171
      %v2173 = vpop.f32.mrf.mxu0
      %2174 = vdwg.mxu0
      %2175 = vmatpush.bf16.msra.mxu0 0
      %2176 = vmatpush.bf16.msra.mxu0 0
      %2177 = vmatpush.bf16.msra.mxu0 0
      %2178 = vmatpush.bf16.msra.mxu0 0
      %2179 = vmatpush.bf16.msra.mxu0 0
      %2180 = vmatpush.bf16.msra.mxu0 0
      %2181 = vmatpush.bf16.msra.mxu0 0
      %2182 = vmatpush.bf16.msra.mxu0 %v2156
      %2183 = vmatmul.bf16.gmra.mxu0 %v2160
      %v2184 = vpop.f32.mrf.mxu0
      %v2185 = vadd.f32 0.0, %v2184
      %v2186 = vpop.f32.mrf.mxu0
      %2187 = vdwg.mxu0
      %v2188 = vadd.f32 %v2131, %v2172
      %v2189 = vadd.f32 %v2132, %v2185
      %2190 = vrot.lane.b32.xlu0 %v1749, 111
      %v2191 = vpop.permute.xlu0 %2190
      %2192 = vrot.lane.b32.xlu0 %v1750, 111
      %v2193 = vpop.permute.xlu0 %2192
      %2194 = vrot.lane.b32.xlu0 %v1751, 111
      %v2195 = vpop.permute.xlu0 %2194
      %2196 = vrot.lane.b32.xlu0 %v1752, 111
      %v2197 = vpop.permute.xlu0 %2196
      %v2198 = vsel %vm916, %v2191, %v2193
      %v2199 = vsel %vm916, %v2195, %v2197
      %v2206 = vsel %vm916, %v2193, %v2191
      %v2207 = vsel %vm916, %v2197, %v2195
      %v2208 = vmul.f32 %v2198, %v925
      %v2209 = vmul.f32 %v2206, %v926
      %v2210 = vmul.f32 %v2199, %v925
      %v2211 = vmul.f32 %v2207, %v926
      %v2212 = vpack.c.bf16 %v2210, %v2208
      %v2213 = vpack.c.bf16 %v2211, %v2209
      %s2214 = scalar_lea.vmem %s5, 32
      %v2215 = vld [vmem:[%s2214] sm:$0xf]
      %v2217 = vsel %vm472, %v2215, 0
      %2219 = vmatpush.bf16.msra.mxu0 0
      %2220 = vmatpush.bf16.msra.mxu0 0
      %2221 = vmatpush.bf16.msra.mxu0 0
      %2222 = vmatpush.bf16.msra.mxu0 0
      %2223 = vmatpush.bf16.msra.mxu0 0
      %2224 = vmatpush.bf16.msra.mxu0 0
      %2225 = vmatpush.bf16.msra.mxu0 0
      %2226 = vmatpush.bf16.msra.mxu0 %v2212
      %2227 = vmatmul.bf16.gmra.mxu0 %v2217
      %v2228 = vpop.f32.mrf.mxu0
      %v2229 = vadd.f32 0.0, %v2228
      %v2230 = vpop.f32.mrf.mxu0
      %2231 = vdwg.mxu0
      %2232 = vmatpush.bf16.msra.mxu0 0
      %2233 = vmatpush.bf16.msra.mxu0 0
      %2234 = vmatpush.bf16.msra.mxu0 0
      %2235 = vmatpush.bf16.msra.mxu0 0
      %2236 = vmatpush.bf16.msra.mxu0 0
      %2237 = vmatpush.bf16.msra.mxu0 0
      %2238 = vmatpush.bf16.msra.mxu0 0
      %2239 = vmatpush.bf16.msra.mxu0 %v2213
      %2240 = vmatmul.bf16.gmra.mxu0 %v2217
      %v2241 = vpop.f32.mrf.mxu0
      %v2242 = vadd.f32 0.0, %v2241
      %v2243 = vpop.f32.mrf.mxu0
      %2244 = vdwg.mxu0
      %v2245 = vadd.f32 %v2188, %v2229
      %v2246 = vadd.f32 %v2189, %v2242
      %2247 = vrot.lane.b32.xlu0 %v981, 17
      %v2248 = vpop.permute.xlu0 %2247
      %2250 = vrot.lane.b32.xlu0 %v980, 17
      %v2251 = vpop.permute.xlu0 %2250
      %v2252 = vsel %vm451, %v2251, %v2248
      %v2255 = vsel %vm451, %v2248, %v2251
      %v2256 = vmul.f32 %v2255, %v458
      %v2257 = vmul.f32 %v2252, %v459
      %v2258 = vpack.c.bf16 %v2256, %v2256
      %v2259 = vpack.c.bf16 %v2257, %v2257
      %v2260 = vld [vmem:[%s6] sm:$0xf]
      %2261 = vrot.lane.b32.xlu0 %v981, 16
      %v2262 = vpop.permute.xlu0 %2261
      %2264 = vrot.lane.b32.xlu0 %v980, 16
      %v2265 = vpop.permute.xlu0 %2264
      %v2266 = vsel %vm472, %v2265, %v2262
      %v2269 = vsel %vm472, %v2262, %v2265
      %v2270 = vmul.f32 %v2269, %v480
      %v2271 = vmul.f32 %v2266, %v481
      %v2272 = vpack.c.bf16 %v2270, %v2270
      %v2273 = vpack.c.bf16 %v2271, %v2271
      %s2274 = scalar_lea.vmem %s6, 4
      %v2275 = vld [vmem:[%s2274] sm:$0xf]
      %v2277 = vsel %vm490, %v2275, 0
      %v2280 = vsel %vm494, %v2272, 0
      %v2283 = vsel %vm494, %v2273, 0
      %2285 = vmatpush.bf16.msra.mxu0 0
      %2286 = vmatpush.bf16.msra.mxu0 0
      %2287 = vmatpush.bf16.msra.mxu0 0
      %2288 = vmatpush.bf16.msra.mxu0 0
      %2289 = vmatpush.bf16.msra.mxu0 0
      %2290 = vmatpush.bf16.msra.mxu0 0
      %2291 = vmatpush.bf16.msra.mxu0 0
      %2292 = vmatpush.bf16.msra.mxu0 %v2280
      %2293 = vmatmul.bf16.gmra.mxu0 %v2277
      %v2294 = vpop.f32.mrf.mxu0
      %v2295 = vadd.f32 0.0, %v2294
      %v2296 = vpop.f32.mrf.mxu0
      %2297 = vdwg.mxu0
      %2298 = vmatpush.bf16.msra.mxu0 0
      %2299 = vmatpush.bf16.msra.mxu0 0
      %2300 = vmatpush.bf16.msra.mxu0 0
      %2301 = vmatpush.bf16.msra.mxu0 0
      %2302 = vmatpush.bf16.msra.mxu0 0
      %2303 = vmatpush.bf16.msra.mxu0 0
      %2304 = vmatpush.bf16.msra.mxu0 0
      %2305 = vmatpush.bf16.msra.mxu0 %v2283
      %2306 = vmatmul.bf16.gmra.mxu0 %v2277
      %v2307 = vpop.f32.mrf.mxu0
      %v2308 = vadd.f32 0.0, %v2307
      %v2309 = vpop.f32.mrf.mxu0
      %2310 = vdwg.mxu0
      %v2312 = vsel %vm490, %v2260, 0
      %v2315 = vsel %vm494, %v2258, 0
      %v2318 = vsel %vm494, %v2259, 0
      %2320 = vmatpush.bf16.msra.mxu0 0
      %2321 = vmatpush.bf16.msra.mxu0 0
      %2322 = vmatpush.bf16.msra.mxu0 0
      %2323 = vmatpush.bf16.msra.mxu0 0
      %2324 = vmatpush.bf16.msra.mxu0 0
      %2325 = vmatpush.bf16.msra.mxu0 0
      %2326 = vmatpush.bf16.msra.mxu0 0
      %2327 = vmatpush.bf16.msra.mxu0 %v2315
      %2328 = vmatmul.bf16.gmra.mxu0 %v2312
      %v2329 = vpop.f32.mrf.mxu0
      %v2330 = vadd.f32 %v2295, %v2329
      %v2331 = vpop.f32.mrf.mxu0
      %2332 = vdwg.mxu0
      %2333 = vmatpush.bf16.msra.mxu0 0
      %2334 = vmatpush.bf16.msra.mxu0 0
      %2335 = vmatpush.bf16.msra.mxu0 0
      %2336 = vmatpush.bf16.msra.mxu0 0
      %2337 = vmatpush.bf16.msra.mxu0 0
      %2338 = vmatpush.bf16.msra.mxu0 0
      %2339 = vmatpush.bf16.msra.mxu0 0
      %2340 = vmatpush.bf16.msra.mxu0 %v2318
      %2341 = vmatmul.bf16.gmra.mxu0 %v2312
      %v2342 = vpop.f32.mrf.mxu0
      %v2343 = vadd.f32 %v2308, %v2342
      %v2344 = vpop.f32.mrf.mxu0
      %2345 = vdwg.mxu0
      %2346 = vrot.lane.b32.xlu0 %v981, 15
      %v2347 = vpop.permute.xlu0 %2346
      %2349 = vrot.lane.b32.xlu0 %v980, 15
      %v2350 = vpop.permute.xlu0 %2349
      %v2351 = vsel %vm567, %v2350, %v2347
      %v2354 = vsel %vm567, %v2347, %v2350
      %v2355 = vmul.f32 %v2354, %v575
      %v2356 = vmul.f32 %v2351, %v576
      %v2357 = vpack.c.bf16 %v2355, %v2355
      %v2358 = vpack.c.bf16 %v2356, %v2356
      %s2359 = scalar_lea.vmem %s6, 8
      %v2360 = vld [vmem:[%s2359] sm:$0xf]
      %v2362 = vsel %vm490, %v2360, 0
      %v2365 = vsel %vm494, %v2357, 0
      %v2368 = vsel %vm494, %v2358, 0
      %2370 = vmatpush.bf16.msra.mxu0 0
      %2371 = vmatpush.bf16.msra.mxu0 0
      %2372 = vmatpush.bf16.msra.mxu0 0
      %2373 = vmatpush.bf16.msra.mxu0 0
      %2374 = vmatpush.bf16.msra.mxu0 0
      %2375 = vmatpush.bf16.msra.mxu0 0
      %2376 = vmatpush.bf16.msra.mxu0 0
      %2377 = vmatpush.bf16.msra.mxu0 %v2365
      %2378 = vmatmul.bf16.gmra.mxu0 %v2362
      %v2379 = vpop.f32.mrf.mxu0
      %v2380 = vadd.f32 0.0, %v2379
      %v2381 = vpop.f32.mrf.mxu0
      %2382 = vdwg.mxu0
      %2383 = vmatpush.bf16.msra.mxu0 0
      %2384 = vmatpush.bf16.msra.mxu0 0
      %2385 = vmatpush.bf16.msra.mxu0 0
      %2386 = vmatpush.bf16.msra.mxu0 0
      %2387 = vmatpush.bf16.msra.mxu0 0
      %2388 = vmatpush.bf16.msra.mxu0 0
      %2389 = vmatpush.bf16.msra.mxu0 0
      %2390 = vmatpush.bf16.msra.mxu0 %v2368
      %2391 = vmatmul.bf16.gmra.mxu0 %v2362
      %v2392 = vpop.f32.mrf.mxu0
      %v2393 = vadd.f32 0.0, %v2392
      %v2394 = vpop.f32.mrf.mxu0
      %2395 = vdwg.mxu0
      %v2396 = vadd.f32 %v2330, %v2380
      %v2397 = vadd.f32 %v2343, %v2393
      %2398 = vrot.lane.b32.xlu0 %v981, 1
      %v2399 = vpop.permute.xlu0 %2398
      %2401 = vrot.lane.b32.xlu0 %v980, 1
      %v2402 = vpop.permute.xlu0 %2401
      %v2403 = vsel %vm627, %v2402, %v2399
      %v2406 = vsel %vm627, %v2399, %v2402
      %v2407 = vmul.f32 %v2406, %v635
      %v2408 = vmul.f32 %v2403, %v636
      %v2409 = vpack.c.bf16 %v2407, %v2407
      %v2410 = vpack.c.bf16 %v2408, %v2408
      %s2411 = scalar_lea.vmem %s6, 12
      %v2412 = vld [vmem:[%s2411] sm:$0xf]
      %v2414 = vsel %vm490, %v2412, 0
      %v2417 = vsel %vm494, %v2409, 0
      %v2420 = vsel %vm494, %v2410, 0
      %2422 = vmatpush.bf16.msra.mxu0 0
      %2423 = vmatpush.bf16.msra.mxu0 0
      %2424 = vmatpush.bf16.msra.mxu0 0
      %2425 = vmatpush.bf16.msra.mxu0 0
      %2426 = vmatpush.bf16.msra.mxu0 0
      %2427 = vmatpush.bf16.msra.mxu0 0
      %2428 = vmatpush.bf16.msra.mxu0 0
      %2429 = vmatpush.bf16.msra.mxu0 %v2417
      %2430 = vmatmul.bf16.gmra.mxu0 %v2414
      %v2431 = vpop.f32.mrf.mxu0
      %v2432 = vadd.f32 0.0, %v2431
      %v2433 = vpop.f32.mrf.mxu0
      %2434 = vdwg.mxu0
      %2435 = vmatpush.bf16.msra.mxu0 0
      %2436 = vmatpush.bf16.msra.mxu0 0
      %2437 = vmatpush.bf16.msra.mxu0 0
      %2438 = vmatpush.bf16.msra.mxu0 0
      %2439 = vmatpush.bf16.msra.mxu0 0
      %2440 = vmatpush.bf16.msra.mxu0 0
      %2441 = vmatpush.bf16.msra.mxu0 0
      %2442 = vmatpush.bf16.msra.mxu0 %v2420
      %2443 = vmatmul.bf16.gmra.mxu0 %v2414
      %v2444 = vpop.f32.mrf.mxu0
      %v2445 = vadd.f32 0.0, %v2444
      %v2446 = vpop.f32.mrf.mxu0
      %2447 = vdwg.mxu0
      %v2448 = vadd.f32 %v2396, %v2432
      %v2449 = vadd.f32 %v2397, %v2445
      %v2450 = vmul.f32 %v980, %v685
      %v2451 = vmul.f32 %v981, %v686
      %v2452 = vpack.c.bf16 %v2450, %v2450
      %v2453 = vpack.c.bf16 %v2451, %v2451
      %s2454 = scalar_lea.vmem %s6, 16
      %v2455 = vld [vmem:[%s2454] sm:$0xf]
      %v2457 = vsel %vm490, %v2455, 0
      %v2460 = vsel %vm494, %v2452, 0
      %v2463 = vsel %vm494, %v2453, 0
      %2465 = vmatpush.bf16.msra.mxu0 0
      %2466 = vmatpush.bf16.msra.mxu0 0
      %2467 = vmatpush.bf16.msra.mxu0 0
      %2468 = vmatpush.bf16.msra.mxu0 0
      %2469 = vmatpush.bf16.msra.mxu0 0
      %2470 = vmatpush.bf16.msra.mxu0 0
      %2471 = vmatpush.bf16.msra.mxu0 0
      %2472 = vmatpush.bf16.msra.mxu0 %v2460
      %2473 = vmatmul.bf16.gmra.mxu0 %v2457
      %v2474 = vpop.f32.mrf.mxu0
      %v2475 = vadd.f32 0.0, %v2474
      %v2476 = vpop.f32.mrf.mxu0
      %2477 = vdwg.mxu0
      %2478 = vmatpush.bf16.msra.mxu0 0
      %2479 = vmatpush.bf16.msra.mxu0 0
      %2480 = vmatpush.bf16.msra.mxu0 0
      %2481 = vmatpush.bf16.msra.mxu0 0
      %2482 = vmatpush.bf16.msra.mxu0 0
      %2483 = vmatpush.bf16.msra.mxu0 0
      %2484 = vmatpush.bf16.msra.mxu0 0
      %2485 = vmatpush.bf16.msra.mxu0 %v2463
      %2486 = vmatmul.bf16.gmra.mxu0 %v2457
      %v2487 = vpop.f32.mrf.mxu0
      %v2488 = vadd.f32 0.0, %v2487
      %v2489 = vpop.f32.mrf.mxu0
      %2490 = vdwg.mxu0
      %v2491 = vadd.f32 %v2448, %v2475
      %v2492 = vadd.f32 %v2449, %v2488
      %v2493 = vmul.f32 %v988, %v745
      %v2494 = vmul.f32 %v992, %v746
      %v2495 = vpack.c.bf16 %v2493, %v2493
      %v2496 = vpack.c.bf16 %v2494, %v2494
      %s2497 = scalar_lea.vmem %s6, 20
      %v2498 = vld [vmem:[%s2497] sm:$0xf]
      %v2500 = vsel %vm490, %v2498, 0
      %v2503 = vsel %vm494, %v2495, 0
      %v2506 = vsel %vm494, %v2496, 0
      %2508 = vmatpush.bf16.msra.mxu0 0
      %2509 = vmatpush.bf16.msra.mxu0 0
      %2510 = vmatpush.bf16.msra.mxu0 0
      %2511 = vmatpush.bf16.msra.mxu0 0
      %2512 = vmatpush.bf16.msra.mxu0 0
      %2513 = vmatpush.bf16.msra.mxu0 0
      %2514 = vmatpush.bf16.msra.mxu0 0
      %2515 = vmatpush.bf16.msra.mxu0 %v2503
      %2516 = vmatmul.bf16.gmra.mxu0 %v2500
      %v2517 = vpop.f32.mrf.mxu0
      %v2518 = vadd.f32 0.0, %v2517
      %v2519 = vpop.f32.mrf.mxu0
      %2520 = vdwg.mxu0
      %2521 = vmatpush.bf16.msra.mxu0 0
      %2522 = vmatpush.bf16.msra.mxu0 0
      %2523 = vmatpush.bf16.msra.mxu0 0
      %2524 = vmatpush.bf16.msra.mxu0 0
      %2525 = vmatpush.bf16.msra.mxu0 0
      %2526 = vmatpush.bf16.msra.mxu0 0
      %2527 = vmatpush.bf16.msra.mxu0 0
      %2528 = vmatpush.bf16.msra.mxu0 %v2506
      %2529 = vmatmul.bf16.gmra.mxu0 %v2500
      %v2530 = vpop.f32.mrf.mxu0
      %v2531 = vadd.f32 0.0, %v2530
      %v2532 = vpop.f32.mrf.mxu0
      %2533 = vdwg.mxu0
      %v2534 = vadd.f32 %v2491, %v2518
      %v2535 = vadd.f32 %v2492, %v2531
      %2536 = vrot.lane.b32.xlu0 %v980, 113
      %v2537 = vpop.permute.xlu0 %2536
      %2538 = vrot.lane.b32.xlu0 %v981, 113
      %v2539 = vpop.permute.xlu0 %2538
      %v2540 = vsel %vm796, %v2537, %v2539
      %v2544 = vsel %vm796, %v2539, %v2537
      %v2545 = vmul.f32 %v2540, %v805
      %v2546 = vmul.f32 %v2544, %v806
      %v2547 = vpack.c.bf16 %v2545, %v2545
      %v2548 = vpack.c.bf16 %v2546, %v2546
      %s2549 = scalar_lea.vmem %s6, 24
      %v2550 = vld [vmem:[%s2549] sm:$0xf]
      %v2552 = vsel %vm490, %v2550, 0
      %v2555 = vsel %vm494, %v2547, 0
      %v2558 = vsel %vm494, %v2548, 0
      %2560 = vmatpush.bf16.msra.mxu0 0
      %2561 = vmatpush.bf16.msra.mxu0 0
      %2562 = vmatpush.bf16.msra.mxu0 0
      %2563 = vmatpush.bf16.msra.mxu0 0
      %2564 = vmatpush.bf16.msra.mxu0 0
      %2565 = vmatpush.bf16.msra.mxu0 0
      %2566 = vmatpush.bf16.msra.mxu0 0
      %2567 = vmatpush.bf16.msra.mxu0 %v2555
      %2568 = vmatmul.bf16.gmra.mxu0 %v2552
      %v2569 = vpop.f32.mrf.mxu0
      %v2570 = vadd.f32 0.0, %v2569
      %v2571 = vpop.f32.mrf.mxu0
      %2572 = vdwg.mxu0
      %2573 = vmatpush.bf16.msra.mxu0 0
      %2574 = vmatpush.bf16.msra.mxu0 0
      %2575 = vmatpush.bf16.msra.mxu0 0
      %2576 = vmatpush.bf16.msra.mxu0 0
      %2577 = vmatpush.bf16.msra.mxu0 0
      %2578 = vmatpush.bf16.msra.mxu0 0
      %2579 = vmatpush.bf16.msra.mxu0 0
      %2580 = vmatpush.bf16.msra.mxu0 %v2558
      %2581 = vmatmul.bf16.gmra.mxu0 %v2552
      %v2582 = vpop.f32.mrf.mxu0
      %v2583 = vadd.f32 0.0, %v2582
      %v2584 = vpop.f32.mrf.mxu0
      %2585 = vdwg.mxu0
      %v2586 = vadd.f32 %v2534, %v2570
      %v2587 = vadd.f32 %v2535, %v2583
      %2588 = vrot.lane.b32.xlu0 %v980, 112
      %v2589 = vpop.permute.xlu0 %2588
      %2590 = vrot.lane.b32.xlu0 %v981, 112
      %v2591 = vpop.permute.xlu0 %2590
      %v2592 = vsel %vm856, %v2589, %v2591
      %v2596 = vsel %vm856, %v2591, %v2589
      %v2597 = vmul.f32 %v2592, %v865
      %v2598 = vmul.f32 %v2596, %v866
      %v2599 = vpack.c.bf16 %v2597, %v2597
      %v2600 = vpack.c.bf16 %v2598, %v2598
      %s2601 = scalar_lea.vmem %s6, 28
      %v2602 = vld [vmem:[%s2601] sm:$0xf]
      %v2604 = vsel %vm490, %v2602, 0
      %v2607 = vsel %vm494, %v2599, 0
      %v2610 = vsel %vm494, %v2600, 0
      %2612 = vmatpush.bf16.msra.mxu0 0
      %2613 = vmatpush.bf16.msra.mxu0 0
      %2614 = vmatpush.bf16.msra.mxu0 0
      %2615 = vmatpush.bf16.msra.mxu0 0
      %2616 = vmatpush.bf16.msra.mxu0 0
      %2617 = vmatpush.bf16.msra.mxu0 0
      %2618 = vmatpush.bf16.msra.mxu0 0
      %2619 = vmatpush.bf16.msra.mxu0 %v2607
      %2620 = vmatmul.bf16.gmra.mxu0 %v2604
      %v2621 = vpop.f32.mrf.mxu0
      %v2622 = vadd.f32 0.0, %v2621
      %v2623 = vpop.f32.mrf.mxu0
      %2624 = vdwg.mxu0
      %2625 = vmatpush.bf16.msra.mxu0 0
      %2626 = vmatpush.bf16.msra.mxu0 0
      %2627 = vmatpush.bf16.msra.mxu0 0
      %2628 = vmatpush.bf16.msra.mxu0 0
      %2629 = vmatpush.bf16.msra.mxu0 0
      %2630 = vmatpush.bf16.msra.mxu0 0
      %2631 = vmatpush.bf16.msra.mxu0 0
      %2632 = vmatpush.bf16.msra.mxu0 %v2610
      %2633 = vmatmul.bf16.gmra.mxu0 %v2604
      %v2634 = vpop.f32.mrf.mxu0
      %v2635 = vadd.f32 0.0, %v2634
      %v2636 = vpop.f32.mrf.mxu0
      %2637 = vdwg.mxu0
      %v2638 = vadd.f32 %v2586, %v2622
      %v2639 = vadd.f32 %v2587, %v2635
      %2640 = vrot.lane.b32.xlu0 %v980, 111
      %v2641 = vpop.permute.xlu0 %2640
      %2642 = vrot.lane.b32.xlu0 %v981, 111
      %v2643 = vpop.permute.xlu0 %2642
      %v2644 = vsel %vm916, %v2641, %v2643
      %v2648 = vsel %vm916, %v2643, %v2641
      %v2649 = vmul.f32 %v2644, %v925
      %v2650 = vmul.f32 %v2648, %v926
      %v2651 = vpack.c.bf16 %v2649, %v2649
      %v2652 = vpack.c.bf16 %v2650, %v2650
      %s2653 = scalar_lea.vmem %s6, 32
      %v2654 = vld [vmem:[%s2653] sm:$0xf]
      %v2656 = vsel %vm490, %v2654, 0
      %v2659 = vsel %vm494, %v2651, 0
      %v2662 = vsel %vm494, %v2652, 0
      %2664 = vmatpush.bf16.msra.mxu0 0
      %2665 = vmatpush.bf16.msra.mxu0 0
      %2666 = vmatpush.bf16.msra.mxu0 0
      %2667 = vmatpush.bf16.msra.mxu0 0
      %2668 = vmatpush.bf16.msra.mxu0 0
      %2669 = vmatpush.bf16.msra.mxu0 0
      %2670 = vmatpush.bf16.msra.mxu0 0
      %2671 = vmatpush.bf16.msra.mxu0 %v2659
      %2672 = vmatmul.bf16.gmra.mxu0 %v2656
      %v2673 = vpop.f32.mrf.mxu0
      %v2674 = vadd.f32 0.0, %v2673
      %v2675 = vpop.f32.mrf.mxu0
      %2676 = vdwg.mxu0
      %2677 = vmatpush.bf16.msra.mxu0 0
      %2678 = vmatpush.bf16.msra.mxu0 0
      %2679 = vmatpush.bf16.msra.mxu0 0
      %2680 = vmatpush.bf16.msra.mxu0 0
      %2681 = vmatpush.bf16.msra.mxu0 0
      %2682 = vmatpush.bf16.msra.mxu0 0
      %2683 = vmatpush.bf16.msra.mxu0 0
      %2684 = vmatpush.bf16.msra.mxu0 %v2662
      %2685 = vmatmul.bf16.gmra.mxu0 %v2656
      %v2686 = vpop.f32.mrf.mxu0
      %v2687 = vadd.f32 0.0, %v2686
      %v2688 = vpop.f32.mrf.mxu0
      %2689 = vdwg.mxu0
      %v2690 = vadd.f32 %v2638, %v2674
      %v2691 = vadd.f32 %v2639, %v2687
      %v2692 = vadd.f32 %v2245, %v2690
      %v2693 = vadd.f32 %v2246, %v2691
      %v2694 = vld [vmem:[%s7] sm:$0xff]
      %2696 = vset.pattern.permute.xlu0 0
      %2697 = vperm.xlu0 %2696, %v2694
      %v2698 = vpop.permute.xlu0 %2697
      %v2700 = vadd.f32 %v2692, %v2698
      %v2701 = vadd.f32 %v2693, %v2698
      %v2702 = vmax.f32 %v2700, 0.0
      %v2703 = vmax.f32 %v2701, 0.0
      %v2704 = vld [vmem:[%s8] sm:$0x3]
      %v2705 = vpack.c.bf16 %v2702, %v2702
      %v2706 = vpack.c.bf16 %v2703, %v2703
      %v2707 = vld [vmem:[%s9] sm:$0x7]
      %2709 = vset.pattern.permute.xlu0 0
      %2710 = vperm.xlu0 %2709, %v2707
      %v2711 = vpop.permute.xlu0 %2710
      %v2714 = vsel %vm490, %v2704, 0
      %v2717 = vsel %vm494, %v2705, 0
      %v2720 = vsel %vm494, %v2706, 0
      %2722 = vmatpush.bf16.msra.mxu0 0
      %2723 = vmatpush.bf16.msra.mxu0 0
      %2724 = vmatpush.bf16.msra.mxu0 0
      %2725 = vmatpush.bf16.msra.mxu0 0
      %2726 = vmatpush.bf16.msra.mxu0 0
      %2727 = vmatpush.bf16.msra.mxu0 0
      %2728 = vmatpush.bf16.msra.mxu0 0
      %2729 = vmatpush.bf16.msra.mxu0 %v2717
      %2730 = vmatmul.bf16.gmra.mxu0 %v2714
      %v2731 = vpop.f32.mrf.mxu0
      %v2732 = vadd.f32 %v2711, %v2731
      %v2733 = vpop.f32.mrf.mxu0
      %2734 = vdwg.mxu0
      %2735 = vmatpush.bf16.msra.mxu0 0
      %2736 = vmatpush.bf16.msra.mxu0 0
      %2737 = vmatpush.bf16.msra.mxu0 0
      %2738 = vmatpush.bf16.msra.mxu0 0
      %2739 = vmatpush.bf16.msra.mxu0 0
      %2740 = vmatpush.bf16.msra.mxu0 0
      %2741 = vmatpush.bf16.msra.mxu0 0
      %2742 = vmatpush.bf16.msra.mxu0 %v2720
      %2743 = vmatmul.bf16.gmra.mxu0 %v2714
      %v2744 = vpop.f32.mrf.mxu0
      %v2745 = vadd.f32 %v2711, %v2744
      %v2746 = vpop.f32.mrf.mxu0
      %2747 = vdwg.mxu0
      %v2750 = vrot.slane %v2745, 4
      %v2751 = vsel %vm494, %v2732, %v2750
      %2753 = vst [vmem:[%s440] sm:$0x77] %v2751
      %p2754 = scmp.lt.s32.totalorder %s24, 1
      %s2755 = scalar_select %p2754, %s24, 1
      %s2756 = smul.addr %s2755, 2
      %s2757 = smul.addr %s2756, 4
      %s2758 = scalar_lea.vmem %s13, %s2757
      // Predicated region
      $region73: #{model_forward.1} parent=71 // pred_check
        %p2759 = pneg %p320
      $region74: #{model_forward.1} parent=71 // pred_check_branch
        %2761 = sbr.rel (%p2759) target = $region76
      $region75: #{model_forward.1} parent=71 // pred_region
        _
      $region76: #{model_forward.1} parent=71 // pred_fallthru
        _
    $region72: #{model_forward.1} parent=5 // pred_fallthru
      _
    %p2762 = scmp.le.s32.totalorder 2, %s19
    // Predicated region
    $region77: #{model_forward.1} parent=5 // pred_check
      %p2763 = pneg %p2762
    $region78: #{model_forward.1} parent=5 // pred_check_branch
      %2765 = sbr.rel (%p2763) target = $region80
    $region79: #{model_forward.1} parent=5 // pred_region
      %s2766 = ssub.s32 %s19, 2
      // Predicated region
      $region81: #{model_forward.1} parent=79 // pred_check
        %p2767 = pneg %p326
      $region82: #{model_forward.1} parent=79 // pred_check_branch
        %2769 = sbr.rel (%p2767) target = $region84
      $region83: #{model_forward.1} parent=79 // pred_region
        %p2770 = scmp.lt.s32.totalorder %s25, 1
        %s2771 = scalar_select %p2770, %s25, 1
        %s2772 = smul.addr %s2771, 2
        %s2773 = smul.addr %s2772, 4
        %s2774 = scalar_lea.vmem %s13, %s2773
      $region84: #{model_forward.1} parent=79 // pred_fallthru
        _
    $region80: #{model_forward.1} parent=5 // pred_fallthru
      _
  $region6: #{model_forward.1} parent=0 // loop_footer
    %s23 = sadd.s32 1, %s19
  $region7: #{model_forward.1} parent=0 // loop_footer_branch
    %18 = sbr.rel target = $region3
  $region8: #{model_forward.1} parent=0 // loop_exit
    _

</llo_original>
